<compile_context>
chip_gen: v7x
topology: tpu7x:2x2x1
jax: 0.10.0
libtpu: 0.0.40
codegen_flags: <defaults>
</compile_context>

<pallas_src>
import functools

import jax
import jax.numpy as jnp
from jax.experimental import pallas as pl
from jax.experimental.pallas import tpu as pltpu

NUM_Q_CLASSES = 21
NUM_A_CLASSES = 9
OUT_PAD = 128  # lane-dense padded logit width; real logits live in [:, :30]


# ----------------------------------------------------------------------------
# small in-kernel helpers (kept in f32)
# ----------------------------------------------------------------------------
def _layernorm(x, g, b, eps=1e-12):
    mean = jnp.mean(x, axis=-1, keepdims=True)
    var = jnp.mean((x - mean) ** 2, axis=-1, keepdims=True)
    return (x - mean) * jax.lax.rsqrt(var + eps) * g + b


def _gelu(x):
    # TODO(synk): HF BERT uses exact erf-GELU; tanh approximation used here for
    #             robust Pallas/EUP lowering (numerically very close).
    c = 0.7978845608028654  # sqrt(2/pi)
    return 0.5 * x * (1.0 + jnp.tanh(c * (x + 0.044715 * x * x * x)))


def _bf16(x):
    return x.astype(jnp.bfloat16)


# ----------------------------------------------------------------------------
# fully fused forward kernel
# ----------------------------------------------------------------------------
def fused_bert_kernel(num_heads,
                      emb_ref, mask_ref, eg_ref, eb_ref,
                      wqkv_ref, bqkv_ref, wo_ref, bo_ref,
                      ln1g_ref, ln1b_ref,
                      w1_ref, b1_ref, w2_ref, b2_ref, ln2g_ref, ln2b_ref,
                      wpq_ref, bpq_ref, wpa_ref, bpa_ref, wc_ref, bc_ref,
                      out_ref):
    B, S, H = emb_ref.shape
    num_layers = wqkv_ref.shape[0]
    num_hidden = wpq_ref.shape[1] // H
    nh = num_heads
    hd = H // nh
    T = B * S
    f32 = jnp.float32

    def merge_heads(t):
        # (B*nh, S, hd) -> (T, H)
        t4 = t.reshape(B, nh, S, hd)
        return jnp.concatenate([t4[:, n] for n in range(nh)],
                               axis=-1).reshape(T, H)

    # --- embedding LayerNorm --------------------------------------------------
    x = _layernorm(emb_ref[...], eg_ref[...], eb_ref[...])          # (B,S,H) f32

    # --- additive attention mask: built ONCE, reused by every layer -----------
    mask_add = (1.0 - mask_ref[...])[:, None, :] * -10000.0          # (B,1,S)
    mask_bn = jnp.broadcast_to(mask_add[:, None, :, :],
                               (B, nh, 1, S)).reshape(B * nh, 1, S)

    # only the two CLS tokens of each hidden state are needed downstream
    cls_toks = [x[:, 0:2, :]]
    for l in range(num_layers):                                      # static loop
        x2 = _bf16(x.reshape(T, H))
        # fused QKV projection (attention scale pre-folded into the Q columns)
        qkv = jnp.dot(x2, wqkv_ref[l], preferred_element_type=f32) + bqkv_ref[l]
        qkv_b = _bf16(qkv).reshape(B, S, 3 * H)

        def heads(base):
            # (B,S,3H) -> (B*nh, S, hd), picking head columns at `base + n*hd`
            hs = [qkv_b[:, :, base + n * hd: base + (n + 1) * hd]
                  for n in range(nh)]
            return jnp.stack(hs, axis=1).reshape(B * nh, S, hd)

        qh, kh, vh = heads(0), heads(H), heads(2 * H)

        # head-batched attention (single batched einsum + single softmax)
        s = jnp.einsum('bqd,bkd->bqk', qh, kh, preferred_element_type=f32)
        s = s + mask_bn
        s = s - jnp.max(s, axis=-1, keepdims=True)
        p = jnp.exp(s)
        p = p * pl.reciprocal(jnp.sum(p, axis=-1, keepdims=True), approx=True)
        ctx = jnp.einsum('bqk,bkd->bqd', _bf16(p), vh,
                         preferred_element_type=f32)                 # (B*nh,S,hd)

        attn = (jnp.dot(_bf16(merge_heads(ctx)), wo_ref[l],
                        preferred_element_type=f32) + bo_ref[l]).reshape(B, S, H)
        # dropout (hidden_dropout_prob) is identity in eval/inference mode
        y = _layernorm(x + attn, ln1g_ref[l], ln1b_ref[l])

        y2 = _bf16(y.reshape(T, H))
        h1 = _gelu(jnp.dot(y2, w1_ref[l], preferred_element_type=f32) + b1_ref[l])
        h2 = (jnp.dot(_bf16(h1), w2_ref[l],
                      preferred_element_type=f32) + b2_ref[l]).reshape(B, S, H)
        x = _layernorm(y + h2, ln2g_ref[l], ln2b_ref[l])
        cls_toks.append(x[:, 0:2, :])

    # --- head: CustomBertPooler(pool_ind=0/1) + classifiers --------------------
    # torch.cat(hidden_states[-num_hidden:], dim=2) restricted to the two CLS
    # token rows: lane-concat of the last `num_hidden` (B,H) feature chunks.
    lasts = cls_toks[-num_hidden:]
    feat_q = jnp.concatenate([_bf16(t[:, 0, :]) for t in lasts], axis=-1)  # (B,HC)
    feat_a = jnp.concatenate([_bf16(t[:, 1, :]) for t in lasts], axis=-1)  # (B,HC)
    pooled_q = jnp.tanh(jnp.dot(feat_q, wpq_ref[...],
                                preferred_element_type=f32) + bpq_ref[...])
    pooled_a = jnp.tanh(jnp.dot(feat_a, wpa_ref[...],
                                preferred_element_type=f32) + bpa_ref[...])
    # nn.Dropout is identity in eval/inference mode.
    # both classifiers fused into one lane-dense (2*HC, 128) matmul:
    # rows [0,HC) carry the question classifier into cols [0,21),
    # rows [HC,2HC) carry the answer classifier into cols [21,30).
    pooled = jnp.concatenate([_bf16(pooled_q), _bf16(pooled_a)], axis=-1)
    logits = jnp.dot(pooled, wc_ref[...], preferred_element_type=f32) + bc_ref[...]
    out_ref[...] = logits                                            # (B, 128)


# ----------------------------------------------------------------------------
# parameter init (torch-like pytree) and packing for the fused kernel
# ----------------------------------------------------------------------------
def init_params(key, *, vocab, max_pos, type_vocab, H, I, L, num_hidden):
    ks = iter(jax.random.split(key, 64))

    def w(shape):
        return (0.02 * jax.random.normal(next(ks), shape)).astype(jnp.float32)

    def b(dim):
        return jnp.zeros((1, dim), jnp.float32)

    p = {
        "word_emb": w((vocab, H)),
        "pos_emb": w((max_pos, H)),
        "type_emb": w((type_vocab, H)),
        "emb_ln_g": jnp.ones((1, H), jnp.float32),
        "emb_ln_b": jnp.zeros((1, H), jnp.float32),
        "layers": [],
    }
    for _ in range(L):
        p["layers"].append({
            "wq": w((H, H)), "bq": b(H),
            "wk": w((H, H)), "bk": b(H),
            "wv": w((H, H)), "bv": b(H),
            "wo": w((H, H)), "bo": b(H),
            "ln1_g": jnp.ones((1, H), jnp.float32),
            "ln1_b": jnp.zeros((1, H), jnp.float32),
            "w1": w((H, I)), "b1": b(I),
            "w2": w((I, H)), "b2": b(H),
            "ln2_g": jnp.ones((1, H), jnp.float32),
            "ln2_b": jnp.zeros((1, H), jnp.float32),
        })
    HC = H * num_hidden
    p["head"] = {
        "wpq": w((HC, HC)), "bpq": b(HC),      # pooler_question
        "wpa": w((HC, HC)), "bpa": b(HC),      # pooler_answer
        "wcq": w((HC, NUM_Q_CLASSES)), "bcq": b(NUM_Q_CLASSES),
        "wca": w((HC, NUM_A_CLASSES)), "bca": b(NUM_A_CLASSES),
    }
    return p


def pack_params(params, *, num_hidden, num_heads):
    """Stack per-layer weights, fuse QKV (+ fold attention scale), pack heads."""
    H = params["word_emb"].shape[1]
    HC = H * num_hidden
    hd = H // num_heads
    scale = 1.0 / (hd ** 0.5)
    hp = params["head"]

    def stack(name, dtype=jnp.bfloat16):
        return jnp.stack([lp[name] for lp in params["layers"]],
                         axis=0).astype(dtype)

    # fused QKV slabs; 1/sqrt(hd) folded into the Q block (free at runtime)
    wqkv = jnp.stack(
        [jnp.concatenate([lp["wq"] * scale, lp["wk"], lp["wv"]], axis=-1)
         for lp in params["layers"]], axis=0).astype(jnp.bfloat16)      # (L,H,3H)
    bqkv = jnp.stack(
        [jnp.concatenate([lp["bq"] * scale, lp["bk"], lp["bv"]], axis=-1)
         for lp in params["layers"]], axis=0).astype(jnp.float32)       # (L,1,3H)

    # fused, lane-dense classifier slab: rows [0,HC)=question, [HC,2HC)=answer
    wc = jnp.zeros((2 * HC, OUT_PAD), jnp.float32)
    wc = wc.at[:HC, :NUM_Q_CLASSES].set(hp["wcq"])
    wc = wc.at[HC:, NUM_Q_CLASSES:NUM_Q_CLASSES + NUM_A_CLASSES].set(hp["wca"])
    bc = jnp.zeros((1, OUT_PAD), jnp.float32)
    bc = bc.at[:, :NUM_Q_CLASSES].set(hp["bcq"])
    bc = bc.at[:, NUM_Q_CLASSES:NUM_Q_CLASSES + NUM_A_CLASSES].set(hp["bca"])

    return {
        "word_emb": params["word_emb"],
        "pos_emb": params["pos_emb"],
        "type_emb": params["type_emb"],
        "emb_ln_g": params["emb_ln_g"],
        "emb_ln_b": params["emb_ln_b"],
        # matmul operands stored bf16 (halves weight VMEM/DMA); biases/LN f32
        "wqkv": wqkv, "bqkv": bqkv,
        "wo": stack("wo"), "bo": stack("bo", jnp.float32),
        "ln1_g": stack("ln1_g", jnp.float32), "ln1_b": stack("ln1_b", jnp.float32),
        "w1": stack("w1"), "b1": stack("b1", jnp.float32),
        "w2": stack("w2"), "b2": stack("b2", jnp.float32),
        "ln2_g": stack("ln2_g", jnp.float32), "ln2_b": stack("ln2_b", jnp.float32),
        "wpq": hp["wpq"].astype(jnp.bfloat16), "bpq": hp["bpq"],
        "wpa": hp["wpa"].astype(jnp.bfloat16), "bpa": hp["bpa"],
        "wc": wc.astype(jnp.bfloat16), "bc": bc,
    }


# ----------------------------------------------------------------------------
# forward wrapper: one pallas_call for the whole post-embedding model
# ----------------------------------------------------------------------------
def bert_classifier_cls_tokens(packed, features, attention_mask, token_type_ids,
                               *, num_heads):
    assert attention_mask is not None, "attention mask is none"
    B, S = features.shape

    # embedding gather + sum is XLA glue; everything else runs in the kernel
    emb = (packed["word_emb"][features]
           + packed["pos_emb"][:S][None, :, :]
           + packed["type_emb"][token_type_ids]).astype(jnp.float32)
    mask_f = attention_mask.astype(jnp.float32)

    args = (emb, mask_f, packed["emb_ln_g"], packed["emb_ln_b"],
            packed["wqkv"], packed["bqkv"], packed["wo"], packed["bo"],
            packed["ln1_g"], packed["ln1_b"],
            packed["w1"], packed["b1"], packed["w2"], packed["b2"],
            packed["ln2_g"], packed["ln2_b"],
            packed["wpq"], packed["bpq"], packed["wpa"], packed["bpa"],
            packed["wc"], packed["bc"])

    logits_padded = pl.pallas_call(
        functools.partial(fused_bert_kernel, num_heads),
        out_shape=jax.ShapeDtypeStruct((B, OUT_PAD), jnp.float32),
        in_specs=[pl.BlockSpec(memory_space=pltpu.MemorySpace.VMEM)] * len(args),
        out_specs=pl.BlockSpec(memory_space=pltpu.MemorySpace.VMEM),
        compiler_params=pltpu.CompilerParams(
            vmem_limit_bytes=64 * 1024 * 1024),
    )(*args)
    return logits_padded[:, :NUM_Q_CLASSES + NUM_A_CLASSES]


# ----------------------------------------------------------------------------
if __name__ == "__main__":
    B, S, H = 2, 8, 32
    NUM_HEADS, INTER, LAYERS = 2, 64, 2
    NUM_HIDDEN = 2
    VOCAB, MAX_POS, TYPE_VOCAB = 100, 16, 2

    key = jax.random.PRNGKey(0)
    k_param, k_ids, k_type = jax.random.split(key, 3)

    params = init_params(k_param, vocab=VOCAB, max_pos=MAX_POS,
                         type_vocab=TYPE_VOCAB, H=H, I=INTER, L=LAYERS,
                         num_hidden=NUM_HIDDEN)
    packed = pack_params(params, num_hidden=NUM_HIDDEN, num_heads=NUM_HEADS)

    features = jax.random.randint(k_ids, (B, S), 0, VOCAB, dtype=jnp.int32)
    token_type_ids = jax.random.randint(k_type, (B, S), 0, TYPE_VOCAB,
                                        dtype=jnp.int32)
    attention_mask = jnp.ones((B, S), jnp.int32).at[1, S - 2:].set(0)

    fwd = jax.jit(functools.partial(bert_classifier_cls_tokens,
                                    num_heads=NUM_HEADS))
    logits = fwd(packed, features, attention_mask, token_type_ids)
    logits = jax.block_until_ready(logits)
    assert logits.shape == (B, NUM_Q_CLASSES + NUM_A_CLASSES)
    assert logits.dtype == jnp.float32
    print("KERNEL_OK")
</pallas_src>

<mosaic_0001>
module attributes {stable_mosaic.version = 11 : i64} {
  func.func @fused_bert_kernel(%arg0: memref<2x8x32xf32, #tpu.memory_space<vmem>>, %arg1: memref<2x8xf32, #tpu.memory_space<vmem>>, %arg2: memref<1x32xf32, #tpu.memory_space<vmem>>, %arg3: memref<1x32xf32, #tpu.memory_space<vmem>>, %arg4: memref<2x32x96xbf16, #tpu.memory_space<vmem>>, %arg5: memref<2x1x96xf32, #tpu.memory_space<vmem>>, %arg6: memref<2x32x32xbf16, #tpu.memory_space<vmem>>, %arg7: memref<2x1x32xf32, #tpu.memory_space<vmem>>, %arg8: memref<2x1x32xf32, #tpu.memory_space<vmem>>, %arg9: memref<2x1x32xf32, #tpu.memory_space<vmem>>, %arg10: memref<2x32x64xbf16, #tpu.memory_space<vmem>>, %arg11: memref<2x1x64xf32, #tpu.memory_space<vmem>>, %arg12: memref<2x64x32xbf16, #tpu.memory_space<vmem>>, %arg13: memref<2x1x32xf32, #tpu.memory_space<vmem>>, %arg14: memref<2x1x32xf32, #tpu.memory_space<vmem>>, %arg15: memref<2x1x32xf32, #tpu.memory_space<vmem>>, %arg16: memref<64x64xbf16, #tpu.memory_space<vmem>>, %arg17: memref<1x64xf32, #tpu.memory_space<vmem>>, %arg18: memref<64x64xbf16, #tpu.memory_space<vmem>>, %arg19: memref<1x64xf32, #tpu.memory_space<vmem>>, %arg20: memref<128x128xbf16, #tpu.memory_space<vmem>>, %arg21: memref<1x128xf32, #tpu.memory_space<vmem>>, %arg22: memref<2x128xf32, #tpu.memory_space<vmem>>) attributes {dimension_semantics = [], scalar_prefetch = 0 : i64, scratch_operands = 0 : i64, tpu.core_type = #tpu.core_type<tc>} {
    %c0 = arith.constant 0 : index
    %c0_0 = arith.constant 0 : index
    %c0_1 = arith.constant 0 : index
    %0 = vector.load %arg0[%c0, %c0_0, %c0_1] : memref<2x8x32xf32, #tpu.memory_space<vmem>>, vector<2x8x32xf32>
    %c0_2 = arith.constant 0 : index
    %c0_3 = arith.constant 0 : index
    %1 = vector.load %arg2[%c0_2, %c0_3] : memref<1x32xf32, #tpu.memory_space<vmem>>, vector<1x32xf32>
    %c0_4 = arith.constant 0 : index
    %c0_5 = arith.constant 0 : index
    %2 = vector.load %arg3[%c0_4, %c0_5] : memref<1x32xf32, #tpu.memory_space<vmem>>, vector<1x32xf32>
    %cst = arith.constant dense<0.000000e+00> : vector<2x8xf32>
    %3 = vector.multi_reduction <add>, %0, %cst [2] : vector<2x8x32xf32> to vector<2x8xf32>
    %4 = vector.shape_cast %3 : vector<2x8xf32> to vector<2x8x1xf32>
    %cst_6 = arith.constant 3.200000e+01 : f32
    %5 = vector.broadcast %cst_6 : f32 to vector<2x8x1xf32>
    %6 = arith.divf %4, %5 : vector<2x8x1xf32>
    %7 = vector.broadcast %6 : vector<2x8x1xf32> to vector<2x8x32xf32>
    %8 = arith.subf %0, %7 : vector<2x8x32xf32>
    %9 = arith.mulf %8, %8 : vector<2x8x32xf32>
    %cst_7 = arith.constant dense<0.000000e+00> : vector<2x8xf32>
    %10 = vector.multi_reduction <add>, %9, %cst_7 [2] : vector<2x8x32xf32> to vector<2x8xf32>
    %11 = vector.shape_cast %10 : vector<2x8xf32> to vector<2x8x1xf32>
    %cst_8 = arith.constant 3.200000e+01 : f32
    %12 = vector.broadcast %cst_8 : f32 to vector<2x8x1xf32>
    %13 = arith.divf %11, %12 : vector<2x8x1xf32>
    %14 = vector.broadcast %6 : vector<2x8x1xf32> to vector<2x8x32xf32>
    %15 = arith.subf %0, %14 : vector<2x8x32xf32>
    %cst_9 = arith.constant 9.99999996E-13 : f32
    %16 = vector.broadcast %cst_9 : f32 to vector<2x8x1xf32>
    %17 = arith.addf %13, %16 : vector<2x8x1xf32>
    %18 = math.rsqrt %17 : vector<2x8x1xf32>
    %19 = vector.broadcast %18 : vector<2x8x1xf32> to vector<2x8x32xf32>
    %20 = arith.mulf %15, %19 : vector<2x8x32xf32>
    %21 = vector.shape_cast %1 : vector<1x32xf32> to vector<1x1x32xf32>
    %22 = vector.broadcast %21 : vector<1x1x32xf32> to vector<2x8x32xf32>
    %23 = arith.mulf %20, %22 : vector<2x8x32xf32>
    %24 = vector.shape_cast %2 : vector<1x32xf32> to vector<1x1x32xf32>
    %25 = vector.broadcast %24 : vector<1x1x32xf32> to vector<2x8x32xf32>
    %26 = arith.addf %23, %25 : vector<2x8x32xf32>
    %c0_10 = arith.constant 0 : index
    %c0_11 = arith.constant 0 : index
    %27 = vector.load %arg1[%c0_10, %c0_11] : memref<2x8xf32, #tpu.memory_space<vmem>>, vector<2x8xf32>
    %cst_12 = arith.constant 1.000000e+00 : f32
    %28 = vector.broadcast %cst_12 : f32 to vector<2x8xf32>
    %29 = arith.subf %28, %27 : vector<2x8xf32>
    %30 = vector.shape_cast %29 : vector<2x8xf32> to vector<2x1x8xf32>
    %cst_13 = arith.constant -1.000000e+04 : f32
    %31 = vector.broadcast %cst_13 : f32 to vector<2x1x8xf32>
    %32 = arith.mulf %30, %31 : vector<2x1x8xf32>
    %33 = vector.shape_cast %32 : vector<2x1x8xf32> to vector<2x1x1x8xf32>
    %34 = vector.shape_cast %33 : vector<2x1x1x8xf32> to vector<2x1x1x8xf32>
    %35 = vector.broadcast %34 : vector<2x1x1x8xf32> to vector<2x2x1x8xf32>
    %36 = vector.shape_cast %35 : vector<2x2x1x8xf32> to vector<4x1x8xf32>
    %37 = vector.shape_cast %26 : vector<2x8x32xf32> to vector<16x32xf32>
    %38 = arith.truncf %37 : vector<16x32xf32> to vector<16x32xbf16>
    %c0_14 = arith.constant 0 : index
    %c0_15 = arith.constant 0 : index
    %c0_16 = arith.constant 0 : index
    %39 = vector.load %arg4[%c0_14, %c0_15, %c0_16] : memref<2x32x96xbf16, #tpu.memory_space<vmem>>, vector<1x32x96xbf16>
    %40 = vector.shape_cast %39 : vector<1x32x96xbf16> to vector<32x96xbf16>
    %cst_17 = arith.constant dense<0.000000e+00> : vector<16x96xf32>
    %41 = tpu.matmul %38, %40, %cst_17 {dimension_numbers = #tpu.dot_dimension_numbers<[1], [0], [0], [1], [0, 0, 1, 1], [], []>} : vector<16x32xbf16>, vector<32x96xbf16>, vector<16x96xf32> -> vector<16x96xf32>
    %c0_18 = arith.constant 0 : index
    %c0_19 = arith.constant 0 : index
    %c0_20 = arith.constant 0 : index
    %42 = vector.load %arg5[%c0_18, %c0_19, %c0_20] : memref<2x1x96xf32, #tpu.memory_space<vmem>>, vector<1x1x96xf32>
    %43 = vector.shape_cast %42 : vector<1x1x96xf32> to vector<1x96xf32>
    %44 = vector.broadcast %43 : vector<1x96xf32> to vector<16x96xf32>
    %45 = arith.addf %41, %44 : vector<16x96xf32>
    %46 = arith.truncf %45 : vector<16x96xf32> to vector<16x96xbf16>
    %47 = vector.shape_cast %46 : vector<16x96xbf16> to vector<2x8x96xbf16>
    %48 = vector.extract_strided_slice %47 {offsets = [0, 0, 0], sizes = [2, 8, 16], strides = [1, 1, 1]} : vector<2x8x96xbf16> to vector<2x8x16xbf16>
    %49 = vector.extract_strided_slice %47 {offsets = [0, 0, 16], sizes = [2, 8, 16], strides = [1, 1, 1]} : vector<2x8x96xbf16> to vector<2x8x16xbf16>
    %50 = vector.shape_cast %48 : vector<2x8x16xbf16> to vector<2x1x8x16xbf16>
    %51 = vector.shape_cast %49 : vector<2x8x16xbf16> to vector<2x1x8x16xbf16>
    %52 = tpu.concatenate %50, %51 in 1 : vector<2x1x8x16xbf16>, vector<2x1x8x16xbf16> -> vector<2x2x8x16xbf16>
    %53 = vector.shape_cast %52 : vector<2x2x8x16xbf16> to vector<4x8x16xbf16>
    %54 = vector.extract_strided_slice %47 {offsets = [0, 0, 32], sizes = [2, 8, 16], strides = [1, 1, 1]} : vector<2x8x96xbf16> to vector<2x8x16xbf16>
    %55 = vector.extract_strided_slice %47 {offsets = [0, 0, 48], sizes = [2, 8, 16], strides = [1, 1, 1]} : vector<2x8x96xbf16> to vector<2x8x16xbf16>
    %56 = vector.shape_cast %54 : vector<2x8x16xbf16> to vector<2x1x8x16xbf16>
    %57 = vector.shape_cast %55 : vector<2x8x16xbf16> to vector<2x1x8x16xbf16>
    %58 = tpu.concatenate %56, %57 in 1 : vector<2x1x8x16xbf16>, vector<2x1x8x16xbf16> -> vector<2x2x8x16xbf16>
    %59 = vector.shape_cast %58 : vector<2x2x8x16xbf16> to vector<4x8x16xbf16>
    %60 = vector.extract_strided_slice %47 {offsets = [0, 0, 64], sizes = [2, 8, 16], strides = [1, 1, 1]} : vector<2x8x96xbf16> to vector<2x8x16xbf16>
    %61 = vector.extract_strided_slice %47 {offsets = [0, 0, 80], sizes = [2, 8, 16], strides = [1, 1, 1]} : vector<2x8x96xbf16> to vector<2x8x16xbf16>
    %62 = vector.shape_cast %60 : vector<2x8x16xbf16> to vector<2x1x8x16xbf16>
    %63 = vector.shape_cast %61 : vector<2x8x16xbf16> to vector<2x1x8x16xbf16>
    %64 = tpu.concatenate %62, %63 in 1 : vector<2x1x8x16xbf16>, vector<2x1x8x16xbf16> -> vector<2x2x8x16xbf16>
    %65 = vector.shape_cast %64 : vector<2x2x8x16xbf16> to vector<4x8x16xbf16>
    "tpu.trace_start"() <{level = 10 : i32, message = "bqd,bkd->bqk"}> : () -> ()
    %cst_21 = arith.constant dense<0.000000e+00> : vector<4x8x8xf32>
    %66 = tpu.matmul %53, %59, %cst_21 {dimension_numbers = #tpu.dot_dimension_numbers<[2], [2], [1], [1], [0, 0, 0, 1, 1, 1], [0], [0]>} : vector<4x8x16xbf16>, vector<4x8x16xbf16>, vector<4x8x8xf32> -> vector<4x8x8xf32>
    "tpu.trace_stop"() : () -> ()
    %67 = vector.broadcast %36 : vector<4x1x8xf32> to vector<4x8x8xf32>
    %68 = arith.addf %66, %67 : vector<4x8x8xf32>
    %cst_22 = arith.constant dense<0xFF800000> : vector<4x8xf32>
    %69 = vector.multi_reduction <maximumf>, %68, %cst_22 [2] : vector<4x8x8xf32> to vector<4x8xf32>
    %70 = vector.shape_cast %69 : vector<4x8xf32> to vector<4x8x1xf32>
    %71 = vector.broadcast %70 : vector<4x8x1xf32> to vector<4x8x8xf32>
    %72 = arith.subf %68, %71 : vector<4x8x8xf32>
    %73 = math.exp %72 : vector<4x8x8xf32>
    %cst_23 = arith.constant dense<0.000000e+00> : vector<4x8xf32>
    %74 = vector.multi_reduction <add>, %73, %cst_23 [2] : vector<4x8x8xf32> to vector<4x8xf32>
    %75 = vector.shape_cast %74 : vector<4x8xf32> to vector<4x8x1xf32>
    %76 = tpu.reciprocal %75 {approx = true} : vector<4x8x1xf32> -> vector<4x8x1xf32>
    %77 = vector.broadcast %76 : vector<4x8x1xf32> to vector<4x8x8xf32>
    %78 = arith.mulf %73, %77 : vector<4x8x8xf32>
    %79 = arith.truncf %78 : vector<4x8x8xf32> to vector<4x8x8xbf16>
    "tpu.trace_start"() <{level = 10 : i32, message = "bqk,bkd->bqd"}> : () -> ()
    %cst_24 = arith.constant dense<0.000000e+00> : vector<4x8x16xf32>
    %80 = tpu.matmul %79, %65, %cst_24 {dimension_numbers = #tpu.dot_dimension_numbers<[2], [1], [1], [2], [0, 0, 0, 1, 1, 2], [0], [0]>} : vector<4x8x8xbf16>, vector<4x8x16xbf16>, vector<4x8x16xf32> -> vector<4x8x16xf32>
    "tpu.trace_stop"() : () -> ()
    %81 = vector.shape_cast %80 : vector<4x8x16xf32> to vector<2x2x8x16xf32>
    %82 = vector.extract_strided_slice %81 {offsets = [0, 0, 0, 0], sizes = [2, 1, 8, 16], strides = [1, 1, 1, 1]} : vector<2x2x8x16xf32> to vector<2x1x8x16xf32>
    %83 = vector.shape_cast %82 : vector<2x1x8x16xf32> to vector<2x8x16xf32>
    %84 = vector.extract_strided_slice %81 {offsets = [0, 1, 0, 0], sizes = [2, 1, 8, 16], strides = [1, 1, 1, 1]} : vector<2x2x8x16xf32> to vector<2x1x8x16xf32>
    %85 = vector.shape_cast %84 : vector<2x1x8x16xf32> to vector<2x8x16xf32>
    %86 = tpu.concatenate %83, %85 in 2 : vector<2x8x16xf32>, vector<2x8x16xf32> -> vector<2x8x32xf32>
    %87 = vector.shape_cast %86 : vector<2x8x32xf32> to vector<16x32xf32>
    %88 = arith.truncf %87 : vector<16x32xf32> to vector<16x32xbf16>
    %c0_25 = arith.constant 0 : index
    %c0_26 = arith.constant 0 : index
    %c0_27 = arith.constant 0 : index
    %89 = vector.load %arg6[%c0_25, %c0_26, %c0_27] : memref<2x32x32xbf16, #tpu.memory_space<vmem>>, vector<1x32x32xbf16>
    %90 = vector.shape_cast %89 : vector<1x32x32xbf16> to vector<32x32xbf16>
    %cst_28 = arith.constant dense<0.000000e+00> : vector<16x32xf32>
    %91 = tpu.matmul %88, %90, %cst_28 {dimension_numbers = #tpu.dot_dimension_numbers<[1], [0], [0], [1], [0, 0, 1, 1], [], []>} : vector<16x32xbf16>, vector<32x32xbf16>, vector<16x32xf32> -> vector<16x32xf32>
    %c0_29 = arith.constant 0 : index
    %c0_30 = arith.constant 0 : index
    %c0_31 = arith.constant 0 : index
    %92 = vector.load %arg7[%c0_29, %c0_30, %c0_31] : memref<2x1x32xf32, #tpu.memory_space<vmem>>, vector<1x1x32xf32>
    %93 = vector.shape_cast %92 : vector<1x1x32xf32> to vector<1x32xf32>
    %94 = vector.broadcast %93 : vector<1x32xf32> to vector<16x32xf32>
    %95 = arith.addf %91, %94 : vector<16x32xf32>
    %96 = vector.shape_cast %95 : vector<16x32xf32> to vector<2x8x32xf32>
    %97 = arith.addf %26, %96 : vector<2x8x32xf32>
    %c0_32 = arith.constant 0 : index
    %c0_33 = arith.constant 0 : index
    %c0_34 = arith.constant 0 : index
    %98 = vector.load %arg8[%c0_32, %c0_33, %c0_34] : memref<2x1x32xf32, #tpu.memory_space<vmem>>, vector<1x1x32xf32>
    %99 = vector.shape_cast %98 : vector<1x1x32xf32> to vector<1x32xf32>
    %c0_35 = arith.constant 0 : index
    %c0_36 = arith.constant 0 : index
    %c0_37 = arith.constant 0 : index
    %100 = vector.load %arg9[%c0_35, %c0_36, %c0_37] : memref<2x1x32xf32, #tpu.memory_space<vmem>>, vector<1x1x32xf32>
    %101 = vector.shape_cast %100 : vector<1x1x32xf32> to vector<1x32xf32>
    %cst_38 = arith.constant dense<0.000000e+00> : vector<2x8xf32>
    %102 = vector.multi_reduction <add>, %97, %cst_38 [2] : vector<2x8x32xf32> to vector<2x8xf32>
    %103 = vector.shape_cast %102 : vector<2x8xf32> to vector<2x8x1xf32>
    %cst_39 = arith.constant 3.200000e+01 : f32
    %104 = vector.broadcast %cst_39 : f32 to vector<2x8x1xf32>
    %105 = arith.divf %103, %104 : vector<2x8x1xf32>
    %106 = vector.broadcast %105 : vector<2x8x1xf32> to vector<2x8x32xf32>
    %107 = arith.subf %97, %106 : vector<2x8x32xf32>
    %108 = arith.mulf %107, %107 : vector<2x8x32xf32>
    %cst_40 = arith.constant dense<0.000000e+00> : vector<2x8xf32>
    %109 = vector.multi_reduction <add>, %108, %cst_40 [2] : vector<2x8x32xf32> to vector<2x8xf32>
    %110 = vector.shape_cast %109 : vector<2x8xf32> to vector<2x8x1xf32>
    %cst_41 = arith.constant 3.200000e+01 : f32
    %111 = vector.broadcast %cst_41 : f32 to vector<2x8x1xf32>
    %112 = arith.divf %110, %111 : vector<2x8x1xf32>
    %113 = vector.broadcast %105 : vector<2x8x1xf32> to vector<2x8x32xf32>
    %114 = arith.subf %97, %113 : vector<2x8x32xf32>
    %cst_42 = arith.constant 9.99999996E-13 : f32
    %115 = vector.broadcast %cst_42 : f32 to vector<2x8x1xf32>
    %116 = arith.addf %112, %115 : vector<2x8x1xf32>
    %117 = math.rsqrt %116 : vector<2x8x1xf32>
    %118 = vector.broadcast %117 : vector<2x8x1xf32> to vector<2x8x32xf32>
    %119 = arith.mulf %114, %118 : vector<2x8x32xf32>
    %120 = vector.shape_cast %99 : vector<1x32xf32> to vector<1x1x32xf32>
    %121 = vector.broadcast %120 : vector<1x1x32xf32> to vector<2x8x32xf32>
    %122 = arith.mulf %119, %121 : vector<2x8x32xf32>
    %123 = vector.shape_cast %101 : vector<1x32xf32> to vector<1x1x32xf32>
    %124 = vector.broadcast %123 : vector<1x1x32xf32> to vector<2x8x32xf32>
    %125 = arith.addf %122, %124 : vector<2x8x32xf32>
    %126 = vector.shape_cast %125 : vector<2x8x32xf32> to vector<16x32xf32>
    %127 = arith.truncf %126 : vector<16x32xf32> to vector<16x32xbf16>
    %c0_43 = arith.constant 0 : index
    %c0_44 = arith.constant 0 : index
    %c0_45 = arith.constant 0 : index
    %128 = vector.load %arg10[%c0_43, %c0_44, %c0_45] : memref<2x32x64xbf16, #tpu.memory_space<vmem>>, vector<1x32x64xbf16>
    %129 = vector.shape_cast %128 : vector<1x32x64xbf16> to vector<32x64xbf16>
    %cst_46 = arith.constant dense<0.000000e+00> : vector<16x64xf32>
    %130 = tpu.matmul %127, %129, %cst_46 {dimension_numbers = #tpu.dot_dimension_numbers<[1], [0], [0], [1], [0, 0, 1, 1], [], []>} : vector<16x32xbf16>, vector<32x64xbf16>, vector<16x64xf32> -> vector<16x64xf32>
    %c0_47 = arith.constant 0 : index
    %c0_48 = arith.constant 0 : index
    %c0_49 = arith.constant 0 : index
    %131 = vector.load %arg11[%c0_47, %c0_48, %c0_49] : memref<2x1x64xf32, #tpu.memory_space<vmem>>, vector<1x1x64xf32>
    %132 = vector.shape_cast %131 : vector<1x1x64xf32> to vector<1x64xf32>
    %133 = vector.broadcast %132 : vector<1x64xf32> to vector<16x64xf32>
    %134 = arith.addf %130, %133 : vector<16x64xf32>
    %cst_50 = arith.constant 5.000000e-01 : f32
    %135 = vector.broadcast %cst_50 : f32 to vector<16x64xf32>
    %136 = arith.mulf %135, %134 : vector<16x64xf32>
    %cst_51 = arith.constant 4.471500e-02 : f32
    %137 = vector.broadcast %cst_51 : f32 to vector<16x64xf32>
    %138 = arith.mulf %137, %134 : vector<16x64xf32>
    %139 = arith.mulf %138, %134 : vector<16x64xf32>
    %140 = arith.mulf %139, %134 : vector<16x64xf32>
    %141 = arith.addf %134, %140 : vector<16x64xf32>
    %cst_52 = arith.constant 0.797884583 : f32
    %142 = vector.broadcast %cst_52 : f32 to vector<16x64xf32>
    %143 = arith.mulf %142, %141 : vector<16x64xf32>
    %144 = math.tanh %143 : vector<16x64xf32>
    %cst_53 = arith.constant 1.000000e+00 : f32
    %145 = vector.broadcast %cst_53 : f32 to vector<16x64xf32>
    %146 = arith.addf %145, %144 : vector<16x64xf32>
    %147 = arith.mulf %136, %146 : vector<16x64xf32>
    %148 = arith.truncf %147 : vector<16x64xf32> to vector<16x64xbf16>
    %c0_54 = arith.constant 0 : index
    %c0_55 = arith.constant 0 : index
    %c0_56 = arith.constant 0 : index
    %149 = vector.load %arg12[%c0_54, %c0_55, %c0_56] : memref<2x64x32xbf16, #tpu.memory_space<vmem>>, vector<1x64x32xbf16>
    %150 = vector.shape_cast %149 : vector<1x64x32xbf16> to vector<64x32xbf16>
    %cst_57 = arith.constant dense<0.000000e+00> : vector<16x32xf32>
    %151 = tpu.matmul %148, %150, %cst_57 {dimension_numbers = #tpu.dot_dimension_numbers<[1], [0], [0], [1], [0, 0, 1, 1], [], []>} : vector<16x64xbf16>, vector<64x32xbf16>, vector<16x32xf32> -> vector<16x32xf32>
    %c0_58 = arith.constant 0 : index
    %c0_59 = arith.constant 0 : index
    %c0_60 = arith.constant 0 : index
    %152 = vector.load %arg13[%c0_58, %c0_59, %c0_60] : memref<2x1x32xf32, #tpu.memory_space<vmem>>, vector<1x1x32xf32>
    %153 = vector.shape_cast %152 : vector<1x1x32xf32> to vector<1x32xf32>
    %154 = vector.broadcast %153 : vector<1x32xf32> to vector<16x32xf32>
    %155 = arith.addf %151, %154 : vector<16x32xf32>
    %156 = vector.shape_cast %155 : vector<16x32xf32> to vector<2x8x32xf32>
    %157 = arith.addf %125, %156 : vector<2x8x32xf32>
    %c0_61 = arith.constant 0 : index
    %c0_62 = arith.constant 0 : index
    %c0_63 = arith.constant 0 : index
    %158 = vector.load %arg14[%c0_61, %c0_62, %c0_63] : memref<2x1x32xf32, #tpu.memory_space<vmem>>, vector<1x1x32xf32>
    %159 = vector.shape_cast %158 : vector<1x1x32xf32> to vector<1x32xf32>
    %c0_64 = arith.constant 0 : index
    %c0_65 = arith.constant 0 : index
    %c0_66 = arith.constant 0 : index
    %160 = vector.load %arg15[%c0_64, %c0_65, %c0_66] : memref<2x1x32xf32, #tpu.memory_space<vmem>>, vector<1x1x32xf32>
    %161 = vector.shape_cast %160 : vector<1x1x32xf32> to vector<1x32xf32>
    %cst_67 = arith.constant dense<0.000000e+00> : vector<2x8xf32>
    %162 = vector.multi_reduction <add>, %157, %cst_67 [2] : vector<2x8x32xf32> to vector<2x8xf32>
    %163 = vector.shape_cast %162 : vector<2x8xf32> to vector<2x8x1xf32>
    %cst_68 = arith.constant 3.200000e+01 : f32
    %164 = vector.broadcast %cst_68 : f32 to vector<2x8x1xf32>
    %165 = arith.divf %163, %164 : vector<2x8x1xf32>
    %166 = vector.broadcast %165 : vector<2x8x1xf32> to vector<2x8x32xf32>
    %167 = arith.subf %157, %166 : vector<2x8x32xf32>
    %168 = arith.mulf %167, %167 : vector<2x8x32xf32>
    %cst_69 = arith.constant dense<0.000000e+00> : vector<2x8xf32>
    %169 = vector.multi_reduction <add>, %168, %cst_69 [2] : vector<2x8x32xf32> to vector<2x8xf32>
    %170 = vector.shape_cast %169 : vector<2x8xf32> to vector<2x8x1xf32>
    %cst_70 = arith.constant 3.200000e+01 : f32
    %171 = vector.broadcast %cst_70 : f32 to vector<2x8x1xf32>
    %172 = arith.divf %170, %171 : vector<2x8x1xf32>
    %173 = vector.broadcast %165 : vector<2x8x1xf32> to vector<2x8x32xf32>
    %174 = arith.subf %157, %173 : vector<2x8x32xf32>
    %cst_71 = arith.constant 9.99999996E-13 : f32
    %175 = vector.broadcast %cst_71 : f32 to vector<2x8x1xf32>
    %176 = arith.addf %172, %175 : vector<2x8x1xf32>
    %177 = math.rsqrt %176 : vector<2x8x1xf32>
    %178 = vector.broadcast %177 : vector<2x8x1xf32> to vector<2x8x32xf32>
    %179 = arith.mulf %174, %178 : vector<2x8x32xf32>
    %180 = vector.shape_cast %159 : vector<1x32xf32> to vector<1x1x32xf32>
    %181 = vector.broadcast %180 : vector<1x1x32xf32> to vector<2x8x32xf32>
    %182 = arith.mulf %179, %181 : vector<2x8x32xf32>
    %183 = vector.shape_cast %161 : vector<1x32xf32> to vector<1x1x32xf32>
    %184 = vector.broadcast %183 : vector<1x1x32xf32> to vector<2x8x32xf32>
    %185 = arith.addf %182, %184 : vector<2x8x32xf32>
    %186 = vector.extract_strided_slice %185 {offsets = [0, 0, 0], sizes = [2, 2, 32], strides = [1, 1, 1]} : vector<2x8x32xf32> to vector<2x2x32xf32>
    %187 = vector.shape_cast %185 : vector<2x8x32xf32> to vector<16x32xf32>
    %188 = arith.truncf %187 : vector<16x32xf32> to vector<16x32xbf16>
    %c1 = arith.constant 1 : index
    %c0_72 = arith.constant 0 : index
    %c0_73 = arith.constant 0 : index
    %189 = vector.load %arg4[%c1, %c0_72, %c0_73] : memref<2x32x96xbf16, #tpu.memory_space<vmem>>, vector<1x32x96xbf16>
    %190 = vector.shape_cast %189 : vector<1x32x96xbf16> to vector<32x96xbf16>
    %cst_74 = arith.constant dense<0.000000e+00> : vector<16x96xf32>
    %191 = tpu.matmul %188, %190, %cst_74 {dimension_numbers = #tpu.dot_dimension_numbers<[1], [0], [0], [1], [0, 0, 1, 1], [], []>} : vector<16x32xbf16>, vector<32x96xbf16>, vector<16x96xf32> -> vector<16x96xf32>
    %c1_75 = arith.constant 1 : index
    %c0_76 = arith.constant 0 : index
    %c0_77 = arith.constant 0 : index
    %192 = vector.load %arg5[%c1_75, %c0_76, %c0_77] : memref<2x1x96xf32, #tpu.memory_space<vmem>>, vector<1x1x96xf32>
    %193 = vector.shape_cast %192 : vector<1x1x96xf32> to vector<1x96xf32>
    %194 = vector.broadcast %193 : vector<1x96xf32> to vector<16x96xf32>
    %195 = arith.addf %191, %194 : vector<16x96xf32>
    %196 = arith.truncf %195 : vector<16x96xf32> to vector<16x96xbf16>
    %197 = vector.shape_cast %196 : vector<16x96xbf16> to vector<2x8x96xbf16>
    %198 = vector.extract_strided_slice %197 {offsets = [0, 0, 0], sizes = [2, 8, 16], strides = [1, 1, 1]} : vector<2x8x96xbf16> to vector<2x8x16xbf16>
    %199 = vector.extract_strided_slice %197 {offsets = [0, 0, 16], sizes = [2, 8, 16], strides = [1, 1, 1]} : vector<2x8x96xbf16> to vector<2x8x16xbf16>
    %200 = vector.shape_cast %198 : vector<2x8x16xbf16> to vector<2x1x8x16xbf16>
    %201 = vector.shape_cast %199 : vector<2x8x16xbf16> to vector<2x1x8x16xbf16>
    %202 = tpu.concatenate %200, %201 in 1 : vector<2x1x8x16xbf16>, vector<2x1x8x16xbf16> -> vector<2x2x8x16xbf16>
    %203 = vector.shape_cast %202 : vector<2x2x8x16xbf16> to vector<4x8x16xbf16>
    %204 = vector.extract_strided_slice %197 {offsets = [0, 0, 32], sizes = [2, 8, 16], strides = [1, 1, 1]} : vector<2x8x96xbf16> to vector<2x8x16xbf16>
    %205 = vector.extract_strided_slice %197 {offsets = [0, 0, 48], sizes = [2, 8, 16], strides = [1, 1, 1]} : vector<2x8x96xbf16> to vector<2x8x16xbf16>
    %206 = vector.shape_cast %204 : vector<2x8x16xbf16> to vector<2x1x8x16xbf16>
    %207 = vector.shape_cast %205 : vector<2x8x16xbf16> to vector<2x1x8x16xbf16>
    %208 = tpu.concatenate %206, %207 in 1 : vector<2x1x8x16xbf16>, vector<2x1x8x16xbf16> -> vector<2x2x8x16xbf16>
    %209 = vector.shape_cast %208 : vector<2x2x8x16xbf16> to vector<4x8x16xbf16>
    %210 = vector.extract_strided_slice %197 {offsets = [0, 0, 64], sizes = [2, 8, 16], strides = [1, 1, 1]} : vector<2x8x96xbf16> to vector<2x8x16xbf16>
    %211 = vector.extract_strided_slice %197 {offsets = [0, 0, 80], sizes = [2, 8, 16], strides = [1, 1, 1]} : vector<2x8x96xbf16> to vector<2x8x16xbf16>
    %212 = vector.shape_cast %210 : vector<2x8x16xbf16> to vector<2x1x8x16xbf16>
    %213 = vector.shape_cast %211 : vector<2x8x16xbf16> to vector<2x1x8x16xbf16>
    %214 = tpu.concatenate %212, %213 in 1 : vector<2x1x8x16xbf16>, vector<2x1x8x16xbf16> -> vector<2x2x8x16xbf16>
    %215 = vector.shape_cast %214 : vector<2x2x8x16xbf16> to vector<4x8x16xbf16>
    "tpu.trace_start"() <{level = 10 : i32, message = "bqd,bkd->bqk"}> : () -> ()
    %cst_78 = arith.constant dense<0.000000e+00> : vector<4x8x8xf32>
    %216 = tpu.matmul %203, %209, %cst_78 {dimension_numbers = #tpu.dot_dimension_numbers<[2], [2], [1], [1], [0, 0, 0, 1, 1, 1], [0], [0]>} : vector<4x8x16xbf16>, vector<4x8x16xbf16>, vector<4x8x8xf32> -> vector<4x8x8xf32>
    "tpu.trace_stop"() : () -> ()
    %217 = vector.broadcast %36 : vector<4x1x8xf32> to vector<4x8x8xf32>
    %218 = arith.addf %216, %217 : vector<4x8x8xf32>
    %cst_79 = arith.constant dense<0xFF800000> : vector<4x8xf32>
    %219 = vector.multi_reduction <maximumf>, %218, %cst_79 [2] : vector<4x8x8xf32> to vector<4x8xf32>
    %220 = vector.shape_cast %219 : vector<4x8xf32> to vector<4x8x1xf32>
    %221 = vector.broadcast %220 : vector<4x8x1xf32> to vector<4x8x8xf32>
    %222 = arith.subf %218, %221 : vector<4x8x8xf32>
    %223 = math.exp %222 : vector<4x8x8xf32>
    %cst_80 = arith.constant dense<0.000000e+00> : vector<4x8xf32>
    %224 = vector.multi_reduction <add>, %223, %cst_80 [2] : vector<4x8x8xf32> to vector<4x8xf32>
    %225 = vector.shape_cast %224 : vector<4x8xf32> to vector<4x8x1xf32>
    %226 = tpu.reciprocal %225 {approx = true} : vector<4x8x1xf32> -> vector<4x8x1xf32>
    %227 = vector.broadcast %226 : vector<4x8x1xf32> to vector<4x8x8xf32>
    %228 = arith.mulf %223, %227 : vector<4x8x8xf32>
    %229 = arith.truncf %228 : vector<4x8x8xf32> to vector<4x8x8xbf16>
    "tpu.trace_start"() <{level = 10 : i32, message = "bqk,bkd->bqd"}> : () -> ()
    %cst_81 = arith.constant dense<0.000000e+00> : vector<4x8x16xf32>
    %230 = tpu.matmul %229, %215, %cst_81 {dimension_numbers = #tpu.dot_dimension_numbers<[2], [1], [1], [2], [0, 0, 0, 1, 1, 2], [0], [0]>} : vector<4x8x8xbf16>, vector<4x8x16xbf16>, vector<4x8x16xf32> -> vector<4x8x16xf32>
    "tpu.trace_stop"() : () -> ()
    %231 = vector.shape_cast %230 : vector<4x8x16xf32> to vector<2x2x8x16xf32>
    %232 = vector.extract_strided_slice %231 {offsets = [0, 0, 0, 0], sizes = [2, 1, 8, 16], strides = [1, 1, 1, 1]} : vector<2x2x8x16xf32> to vector<2x1x8x16xf32>
    %233 = vector.shape_cast %232 : vector<2x1x8x16xf32> to vector<2x8x16xf32>
    %234 = vector.extract_strided_slice %231 {offsets = [0, 1, 0, 0], sizes = [2, 1, 8, 16], strides = [1, 1, 1, 1]} : vector<2x2x8x16xf32> to vector<2x1x8x16xf32>
    %235 = vector.shape_cast %234 : vector<2x1x8x16xf32> to vector<2x8x16xf32>
    %236 = tpu.concatenate %233, %235 in 2 : vector<2x8x16xf32>, vector<2x8x16xf32> -> vector<2x8x32xf32>
    %237 = vector.shape_cast %236 : vector<2x8x32xf32> to vector<16x32xf32>
    %238 = arith.truncf %237 : vector<16x32xf32> to vector<16x32xbf16>
    %c1_82 = arith.constant 1 : index
    %c0_83 = arith.constant 0 : index
    %c0_84 = arith.constant 0 : index
    %239 = vector.load %arg6[%c1_82, %c0_83, %c0_84] : memref<2x32x32xbf16, #tpu.memory_space<vmem>>, vector<1x32x32xbf16>
    %240 = vector.shape_cast %239 : vector<1x32x32xbf16> to vector<32x32xbf16>
    %cst_85 = arith.constant dense<0.000000e+00> : vector<16x32xf32>
    %241 = tpu.matmul %238, %240, %cst_85 {dimension_numbers = #tpu.dot_dimension_numbers<[1], [0], [0], [1], [0, 0, 1, 1], [], []>} : vector<16x32xbf16>, vector<32x32xbf16>, vector<16x32xf32> -> vector<16x32xf32>
    %c1_86 = arith.constant 1 : index
    %c0_87 = arith.constant 0 : index
    %c0_88 = arith.constant 0 : index
    %242 = vector.load %arg7[%c1_86, %c0_87, %c0_88] : memref<2x1x32xf32, #tpu.memory_space<vmem>>, vector<1x1x32xf32>
    %243 = vector.shape_cast %242 : vector<1x1x32xf32> to vector<1x32xf32>
    %244 = vector.broadcast %243 : vector<1x32xf32> to vector<16x32xf32>
    %245 = arith.addf %241, %244 : vector<16x32xf32>
    %246 = vector.shape_cast %245 : vector<16x32xf32> to vector<2x8x32xf32>
    %247 = arith.addf %185, %246 : vector<2x8x32xf32>
    %c1_89 = arith.constant 1 : index
    %c0_90 = arith.constant 0 : index
    %c0_91 = arith.constant 0 : index
    %248 = vector.load %arg8[%c1_89, %c0_90, %c0_91] : memref<2x1x32xf32, #tpu.memory_space<vmem>>, vector<1x1x32xf32>
    %249 = vector.shape_cast %248 : vector<1x1x32xf32> to vector<1x32xf32>
    %c1_92 = arith.constant 1 : index
    %c0_93 = arith.constant 0 : index
    %c0_94 = arith.constant 0 : index
    %250 = vector.load %arg9[%c1_92, %c0_93, %c0_94] : memref<2x1x32xf32, #tpu.memory_space<vmem>>, vector<1x1x32xf32>
    %251 = vector.shape_cast %250 : vector<1x1x32xf32> to vector<1x32xf32>
    %cst_95 = arith.constant dense<0.000000e+00> : vector<2x8xf32>
    %252 = vector.multi_reduction <add>, %247, %cst_95 [2] : vector<2x8x32xf32> to vector<2x8xf32>
    %253 = vector.shape_cast %252 : vector<2x8xf32> to vector<2x8x1xf32>
    %cst_96 = arith.constant 3.200000e+01 : f32
    %254 = vector.broadcast %cst_96 : f32 to vector<2x8x1xf32>
    %255 = arith.divf %253, %254 : vector<2x8x1xf32>
    %256 = vector.broadcast %255 : vector<2x8x1xf32> to vector<2x8x32xf32>
    %257 = arith.subf %247, %256 : vector<2x8x32xf32>
    %258 = arith.mulf %257, %257 : vector<2x8x32xf32>
    %cst_97 = arith.constant dense<0.000000e+00> : vector<2x8xf32>
    %259 = vector.multi_reduction <add>, %258, %cst_97 [2] : vector<2x8x32xf32> to vector<2x8xf32>
    %260 = vector.shape_cast %259 : vector<2x8xf32> to vector<2x8x1xf32>
    %cst_98 = arith.constant 3.200000e+01 : f32
    %261 = vector.broadcast %cst_98 : f32 to vector<2x8x1xf32>
    %262 = arith.divf %260, %261 : vector<2x8x1xf32>
    %263 = vector.broadcast %255 : vector<2x8x1xf32> to vector<2x8x32xf32>
    %264 = arith.subf %247, %263 : vector<2x8x32xf32>
    %cst_99 = arith.constant 9.99999996E-13 : f32
    %265 = vector.broadcast %cst_99 : f32 to vector<2x8x1xf32>
    %266 = arith.addf %262, %265 : vector<2x8x1xf32>
    %267 = math.rsqrt %266 : vector<2x8x1xf32>
    %268 = vector.broadcast %267 : vector<2x8x1xf32> to vector<2x8x32xf32>
    %269 = arith.mulf %264, %268 : vector<2x8x32xf32>
    %270 = vector.shape_cast %249 : vector<1x32xf32> to vector<1x1x32xf32>
    %271 = vector.broadcast %270 : vector<1x1x32xf32> to vector<2x8x32xf32>
    %272 = arith.mulf %269, %271 : vector<2x8x32xf32>
    %273 = vector.shape_cast %251 : vector<1x32xf32> to vector<1x1x32xf32>
    %274 = vector.broadcast %273 : vector<1x1x32xf32> to vector<2x8x32xf32>
    %275 = arith.addf %272, %274 : vector<2x8x32xf32>
    %276 = vector.shape_cast %275 : vector<2x8x32xf32> to vector<16x32xf32>
    %277 = arith.truncf %276 : vector<16x32xf32> to vector<16x32xbf16>
    %c1_100 = arith.constant 1 : index
    %c0_101 = arith.constant 0 : index
    %c0_102 = arith.constant 0 : index
    %278 = vector.load %arg10[%c1_100, %c0_101, %c0_102] : memref<2x32x64xbf16, #tpu.memory_space<vmem>>, vector<1x32x64xbf16>
    %279 = vector.shape_cast %278 : vector<1x32x64xbf16> to vector<32x64xbf16>
    %cst_103 = arith.constant dense<0.000000e+00> : vector<16x64xf32>
    %280 = tpu.matmul %277, %279, %cst_103 {dimension_numbers = #tpu.dot_dimension_numbers<[1], [0], [0], [1], [0, 0, 1, 1], [], []>} : vector<16x32xbf16>, vector<32x64xbf16>, vector<16x64xf32> -> vector<16x64xf32>
    %c1_104 = arith.constant 1 : index
    %c0_105 = arith.constant 0 : index
    %c0_106 = arith.constant 0 : index
    %281 = vector.load %arg11[%c1_104, %c0_105, %c0_106] : memref<2x1x64xf32, #tpu.memory_space<vmem>>, vector<1x1x64xf32>
    %282 = vector.shape_cast %281 : vector<1x1x64xf32> to vector<1x64xf32>
    %283 = vector.broadcast %282 : vector<1x64xf32> to vector<16x64xf32>
    %284 = arith.addf %280, %283 : vector<16x64xf32>
    %cst_107 = arith.constant 5.000000e-01 : f32
    %285 = vector.broadcast %cst_107 : f32 to vector<16x64xf32>
    %286 = arith.mulf %285, %284 : vector<16x64xf32>
    %cst_108 = arith.constant 4.471500e-02 : f32
    %287 = vector.broadcast %cst_108 : f32 to vector<16x64xf32>
    %288 = arith.mulf %287, %284 : vector<16x64xf32>
    %289 = arith.mulf %288, %284 : vector<16x64xf32>
    %290 = arith.mulf %289, %284 : vector<16x64xf32>
    %291 = arith.addf %284, %290 : vector<16x64xf32>
    %cst_109 = arith.constant 0.797884583 : f32
    %292 = vector.broadcast %cst_109 : f32 to vector<16x64xf32>
    %293 = arith.mulf %292, %291 : vector<16x64xf32>
    %294 = math.tanh %293 : vector<16x64xf32>
    %cst_110 = arith.constant 1.000000e+00 : f32
    %295 = vector.broadcast %cst_110 : f32 to vector<16x64xf32>
    %296 = arith.addf %295, %294 : vector<16x64xf32>
    %297 = arith.mulf %286, %296 : vector<16x64xf32>
    %298 = arith.truncf %297 : vector<16x64xf32> to vector<16x64xbf16>
    %c1_111 = arith.constant 1 : index
    %c0_112 = arith.constant 0 : index
    %c0_113 = arith.constant 0 : index
    %299 = vector.load %arg12[%c1_111, %c0_112, %c0_113] : memref<2x64x32xbf16, #tpu.memory_space<vmem>>, vector<1x64x32xbf16>
    %300 = vector.shape_cast %299 : vector<1x64x32xbf16> to vector<64x32xbf16>
    %cst_114 = arith.constant dense<0.000000e+00> : vector<16x32xf32>
    %301 = tpu.matmul %298, %300, %cst_114 {dimension_numbers = #tpu.dot_dimension_numbers<[1], [0], [0], [1], [0, 0, 1, 1], [], []>} : vector<16x64xbf16>, vector<64x32xbf16>, vector<16x32xf32> -> vector<16x32xf32>
    %c1_115 = arith.constant 1 : index
    %c0_116 = arith.constant 0 : index
    %c0_117 = arith.constant 0 : index
    %302 = vector.load %arg13[%c1_115, %c0_116, %c0_117] : memref<2x1x32xf32, #tpu.memory_space<vmem>>, vector<1x1x32xf32>
    %303 = vector.shape_cast %302 : vector<1x1x32xf32> to vector<1x32xf32>
    %304 = vector.broadcast %303 : vector<1x32xf32> to vector<16x32xf32>
    %305 = arith.addf %301, %304 : vector<16x32xf32>
    %306 = vector.shape_cast %305 : vector<16x32xf32> to vector<2x8x32xf32>
    %307 = arith.addf %275, %306 : vector<2x8x32xf32>
    %c1_118 = arith.constant 1 : index
    %c0_119 = arith.constant 0 : index
    %c0_120 = arith.constant 0 : index
    %308 = vector.load %arg14[%c1_118, %c0_119, %c0_120] : memref<2x1x32xf32, #tpu.memory_space<vmem>>, vector<1x1x32xf32>
    %309 = vector.shape_cast %308 : vector<1x1x32xf32> to vector<1x32xf32>
    %c1_121 = arith.constant 1 : index
    %c0_122 = arith.constant 0 : index
    %c0_123 = arith.constant 0 : index
    %310 = vector.load %arg15[%c1_121, %c0_122, %c0_123] : memref<2x1x32xf32, #tpu.memory_space<vmem>>, vector<1x1x32xf32>
    %311 = vector.shape_cast %310 : vector<1x1x32xf32> to vector<1x32xf32>
    %cst_124 = arith.constant dense<0.000000e+00> : vector<2x8xf32>
    %312 = vector.multi_reduction <add>, %307, %cst_124 [2] : vector<2x8x32xf32> to vector<2x8xf32>
    %313 = vector.shape_cast %312 : vector<2x8xf32> to vector<2x8x1xf32>
    %cst_125 = arith.constant 3.200000e+01 : f32
    %314 = vector.broadcast %cst_125 : f32 to vector<2x8x1xf32>
    %315 = arith.divf %313, %314 : vector<2x8x1xf32>
    %316 = vector.broadcast %315 : vector<2x8x1xf32> to vector<2x8x32xf32>
    %317 = arith.subf %307, %316 : vector<2x8x32xf32>
    %318 = arith.mulf %317, %317 : vector<2x8x32xf32>
    %cst_126 = arith.constant dense<0.000000e+00> : vector<2x8xf32>
    %319 = vector.multi_reduction <add>, %318, %cst_126 [2] : vector<2x8x32xf32> to vector<2x8xf32>
    %320 = vector.shape_cast %319 : vector<2x8xf32> to vector<2x8x1xf32>
    %cst_127 = arith.constant 3.200000e+01 : f32
    %321 = vector.broadcast %cst_127 : f32 to vector<2x8x1xf32>
    %322 = arith.divf %320, %321 : vector<2x8x1xf32>
    %323 = vector.broadcast %315 : vector<2x8x1xf32> to vector<2x8x32xf32>
    %324 = arith.subf %307, %323 : vector<2x8x32xf32>
    %cst_128 = arith.constant 9.99999996E-13 : f32
    %325 = vector.broadcast %cst_128 : f32 to vector<2x8x1xf32>
    %326 = arith.addf %322, %325 : vector<2x8x1xf32>
    %327 = math.rsqrt %326 : vector<2x8x1xf32>
    %328 = vector.broadcast %327 : vector<2x8x1xf32> to vector<2x8x32xf32>
    %329 = arith.mulf %324, %328 : vector<2x8x32xf32>
    %330 = vector.shape_cast %309 : vector<1x32xf32> to vector<1x1x32xf32>
    %331 = vector.broadcast %330 : vector<1x1x32xf32> to vector<2x8x32xf32>
    %332 = arith.mulf %329, %331 : vector<2x8x32xf32>
    %333 = vector.shape_cast %311 : vector<1x32xf32> to vector<1x1x32xf32>
    %334 = vector.broadcast %333 : vector<1x1x32xf32> to vector<2x8x32xf32>
    %335 = arith.addf %332, %334 : vector<2x8x32xf32>
    %336 = vector.extract_strided_slice %335 {offsets = [0, 0, 0], sizes = [2, 2, 32], strides = [1, 1, 1]} : vector<2x8x32xf32> to vector<2x2x32xf32>
    %337 = vector.extract_strided_slice %186 {offsets = [0, 0, 0], sizes = [2, 1, 32], strides = [1, 1, 1]} : vector<2x2x32xf32> to vector<2x1x32xf32>
    %338 = vector.shape_cast %337 : vector<2x1x32xf32> to vector<2x32xf32>
    %339 = arith.truncf %338 : vector<2x32xf32> to vector<2x32xbf16>
    %340 = vector.extract_strided_slice %336 {offsets = [0, 0, 0], sizes = [2, 1, 32], strides = [1, 1, 1]} : vector<2x2x32xf32> to vector<2x1x32xf32>
    %341 = vector.shape_cast %340 : vector<2x1x32xf32> to vector<2x32xf32>
    %342 = arith.truncf %341 : vector<2x32xf32> to vector<2x32xbf16>
    %343 = tpu.concatenate %339, %342 in 1 : vector<2x32xbf16>, vector<2x32xbf16> -> vector<2x64xbf16>
    %344 = vector.extract_strided_slice %186 {offsets = [0, 1, 0], sizes = [2, 1, 32], strides = [1, 1, 1]} : vector<2x2x32xf32> to vector<2x1x32xf32>
    %345 = vector.shape_cast %344 : vector<2x1x32xf32> to vector<2x32xf32>
    %346 = arith.truncf %345 : vector<2x32xf32> to vector<2x32xbf16>
    %347 = vector.extract_strided_slice %336 {offsets = [0, 1, 0], sizes = [2, 1, 32], strides = [1, 1, 1]} : vector<2x2x32xf32> to vector<2x1x32xf32>
    %348 = vector.shape_cast %347 : vector<2x1x32xf32> to vector<2x32xf32>
    %349 = arith.truncf %348 : vector<2x32xf32> to vector<2x32xbf16>
    %350 = tpu.concatenate %346, %349 in 1 : vector<2x32xbf16>, vector<2x32xbf16> -> vector<2x64xbf16>
    %c0_129 = arith.constant 0 : index
    %c0_130 = arith.constant 0 : index
    %351 = vector.load %arg16[%c0_129, %c0_130] : memref<64x64xbf16, #tpu.memory_space<vmem>>, vector<64x64xbf16>
    %cst_131 = arith.constant dense<0.000000e+00> : vector<2x64xf32>
    %352 = tpu.matmul %343, %351, %cst_131 {dimension_numbers = #tpu.dot_dimension_numbers<[1], [0], [0], [1], [0, 0, 1, 1], [], []>} : vector<2x64xbf16>, vector<64x64xbf16>, vector<2x64xf32> -> vector<2x64xf32>
    %c0_132 = arith.constant 0 : index
    %c0_133 = arith.constant 0 : index
    %353 = vector.load %arg17[%c0_132, %c0_133] : memref<1x64xf32, #tpu.memory_space<vmem>>, vector<1x64xf32>
    %354 = vector.broadcast %353 : vector<1x64xf32> to vector<2x64xf32>
    %355 = arith.addf %352, %354 : vector<2x64xf32>
    %356 = math.tanh %355 : vector<2x64xf32>
    %c0_134 = arith.constant 0 : index
    %c0_135 = arith.constant 0 : index
    %357 = vector.load %arg18[%c0_134, %c0_135] : memref<64x64xbf16, #tpu.memory_space<vmem>>, vector<64x64xbf16>
    %cst_136 = arith.constant dense<0.000000e+00> : vector<2x64xf32>
    %358 = tpu.matmul %350, %357, %cst_136 {dimension_numbers = #tpu.dot_dimension_numbers<[1], [0], [0], [1], [0, 0, 1, 1], [], []>} : vector<2x64xbf16>, vector<64x64xbf16>, vector<2x64xf32> -> vector<2x64xf32>
    %c0_137 = arith.constant 0 : index
    %c0_138 = arith.constant 0 : index
    %359 = vector.load %arg19[%c0_137, %c0_138] : memref<1x64xf32, #tpu.memory_space<vmem>>, vector<1x64xf32>
    %360 = vector.broadcast %359 : vector<1x64xf32> to vector<2x64xf32>
    %361 = arith.addf %358, %360 : vector<2x64xf32>
    %362 = math.tanh %361 : vector<2x64xf32>
    %363 = arith.truncf %356 : vector<2x64xf32> to vector<2x64xbf16>
    %364 = arith.truncf %362 : vector<2x64xf32> to vector<2x64xbf16>
    %365 = tpu.concatenate %363, %364 in 1 : vector<2x64xbf16>, vector<2x64xbf16> -> vector<2x128xbf16>
    %c0_139 = arith.constant 0 : index
    %c0_140 = arith.constant 0 : index
    %366 = vector.load %arg20[%c0_139, %c0_140] : memref<128x128xbf16, #tpu.memory_space<vmem>>, vector<128x128xbf16>
    %cst_141 = arith.constant dense<0.000000e+00> : vector<2x128xf32>
    %367 = tpu.matmul %365, %366, %cst_141 {dimension_numbers = #tpu.dot_dimension_numbers<[1], [0], [0], [1], [0, 0, 1, 1], [], []>} : vector<2x128xbf16>, vector<128x128xbf16>, vector<2x128xf32> -> vector<2x128xf32>
    %c0_142 = arith.constant 0 : index
    %c0_143 = arith.constant 0 : index
    %368 = vector.load %arg21[%c0_142, %c0_143] : memref<1x128xf32, #tpu.memory_space<vmem>>, vector<1x128xf32>
    %369 = vector.broadcast %368 : vector<1x128xf32> to vector<2x128xf32>
    %370 = arith.addf %367, %369 : vector<2x128xf32>
    %c0_144 = arith.constant 0 : index
    %c0_145 = arith.constant 0 : index
    %371 = vector.load %arg22[%c0_144, %c0_145] : memref<2x128xf32, #tpu.memory_space<vmem>>, vector<2x128xf32>
    tpu.vector_store %arg22[%c0_144, %c0_145], %370 {strides = array<i32>} : memref<2x128xf32, #tpu.memory_space<vmem>>, vector<2x128xf32>,
    return
  }
}

</mosaic_0001>

<llo_original>
// kernel: bert_classifier_cls_tokens.1
$region0: #{bert_classifier_cls_tokens.1}
  #allocation0 [shape = 'u32[]', space=smem, size = 0x4, offset = 0x4, fixed_abs, tag = 'smem constant byte address 0x4 - core index']
  #allocation1 [shape = 'u32[144,128]{1,0:T(1,128)}', space=vmem, size = 0x12000, scoped, tag = 'internal scratch']
  %s0 = inlined_call_operand.hbm [shape: f32[2,8,32], index: 0, kind: input, shape index: {}]
  %s1 = inlined_call_operand.hbm [shape: f32[2,8], index: 1, kind: input, shape index: {}]
  %s2 = inlined_call_operand.hbm [shape: f32[1,32], index: 2, kind: input, shape index: {}]
  %s3 = inlined_call_operand.hbm [shape: f32[1,32], index: 3, kind: input, shape index: {}]
  %s4 = inlined_call_operand.hbm [shape: bf16[2,32,96], index: 4, kind: input, shape index: {}]
  %s5 = inlined_call_operand.hbm [shape: f32[2,1,96], index: 5, kind: input, shape index: {}]
  %s6 = inlined_call_operand.hbm [shape: bf16[2,32,32], index: 6, kind: input, shape index: {}]
  %s7 = inlined_call_operand.hbm [shape: f32[2,1,32], index: 7, kind: input, shape index: {}]
  %s8 = inlined_call_operand.hbm [shape: f32[2,1,32], index: 8, kind: input, shape index: {}]
  %s9 = inlined_call_operand.hbm [shape: f32[2,1,32], index: 9, kind: input, shape index: {}]
  %s10 = inlined_call_operand.hbm [shape: bf16[2,32,64], index: 10, kind: input, shape index: {}]
  %s11 = inlined_call_operand.hbm [shape: f32[2,1,64], index: 11, kind: input, shape index: {}]
  %s12 = inlined_call_operand.hbm [shape: bf16[2,64,32], index: 12, kind: input, shape index: {}]
  %s13 = inlined_call_operand.hbm [shape: f32[2,1,32], index: 13, kind: input, shape index: {}]
  %s14 = inlined_call_operand.hbm [shape: f32[2,1,32], index: 14, kind: input, shape index: {}]
  %s15 = inlined_call_operand.hbm [shape: f32[2,1,32], index: 15, kind: input, shape index: {}]
  %s16 = inlined_call_operand.hbm [shape: bf16[64,64], index: 16, kind: input, shape index: {}]
  %s17 = inlined_call_operand.hbm [shape: f32[1,64], index: 17, kind: input, shape index: {}]
  %s18 = inlined_call_operand.hbm [shape: bf16[64,64], index: 18, kind: input, shape index: {}]
  %s19 = inlined_call_operand.hbm [shape: f32[1,64], index: 19, kind: input, shape index: {}]
  %s20 = inlined_call_operand.hbm [shape: bf16[128,128], index: 20, kind: input, shape index: {}]
  %s21 = inlined_call_operand.hbm [shape: f32[1,128], index: 21, kind: input, shape index: {}]
  %s22 = inlined_call_operand.hbm [shape: f32[2,128], index: 22, kind: output, shape index: {}]
  %s23 = sld [smem:[#allocation0]]
  $region186: #{bert_classifier_cls_tokens.1} parent=0
    _
  %s25 = ssub.s32 1, %s23
  %s26 = scalar_select 0, %s25, %s23
  $region1: #{bert_classifier_cls_tokens.1} parent=0
    #allocation2 [shape = 'u8[8192]{0}', space=vmem, size = 0x2000, scoped, tag = 'input window, operand 0, single buffered']
    #allocation3 [shape = 's32[1]{0}', space=sflag, size = 0x4, scoped, tag = 'scoped memory for bert_classifier_cls_tokens.1']
    #allocation4 [shape = 's32[1]{0}', space=sflag, size = 0x4, scoped, tag = 'scoped memory for bert_classifier_cls_tokens.1']
    #allocation5 [shape = 'u8[1024]{0}', space=vmem, size = 0x400, scoped, tag = 'input window, operand 1, single buffered']
    #allocation6 [shape = 's32[1]{0}', space=sflag, size = 0x4, scoped, tag = 'scoped memory for bert_classifier_cls_tokens.1']
    #allocation7 [shape = 'u8[512]{0}', space=vmem, size = 0x400, scoped, tag = 'input window, operand 2, single buffered']
    #allocation8 [shape = 'u8[512]{0}', space=vmem, size = 0x400, scoped, tag = 'input window, operand 3, single buffered']
    #allocation9 [shape = 's32[1]{0}', space=sflag, size = 0x4, scoped, tag = 'scoped memory for bert_classifier_cls_tokens.1']
    #allocation10 [shape = 'u8[16384]{0}', space=vmem, size = 0x4000, scoped, tag = 'input window, operand 4, single buffered']
    #allocation11 [shape = 'u8[1024]{0}', space=vmem, size = 0x400, scoped, tag = 'input window, operand 5, single buffered']
    #allocation12 [shape = 's32[1]{0}', space=sflag, size = 0x4, scoped, tag = 'scoped memory for bert_classifier_cls_tokens.1']
    #allocation13 [shape = 'u8[16384]{0}', space=vmem, size = 0x4000, scoped, tag = 'input window, operand 6, single buffered']
    #allocation14 [shape = 'u8[1024]{0}', space=vmem, size = 0x400, scoped, tag = 'input window, operand 7, single buffered']
    #allocation15 [shape = 's32[1]{0}', space=sflag, size = 0x4, scoped, tag = 'scoped memory for bert_classifier_cls_tokens.1']
    #allocation16 [shape = 'u8[1024]{0}', space=vmem, size = 0x400, scoped, tag = 'input window, operand 8, single buffered']
    #allocation17 [shape = 'u8[1024]{0}', space=vmem, size = 0x400, scoped, tag = 'input window, operand 9, single buffered']
    #allocation18 [shape = 's32[1]{0}', space=sflag, size = 0x4, scoped, tag = 'scoped memory for bert_classifier_cls_tokens.1']
    #allocation19 [shape = 'u8[16384]{0}', space=vmem, size = 0x4000, scoped, tag = 'input window, operand 10, single buffered']
    #allocation20 [shape = 'u8[1024]{0}', space=vmem, size = 0x400, scoped, tag = 'input window, operand 11, single buffered']
    #allocation21 [shape = 's32[1]{0}', space=sflag, size = 0x4, scoped, tag = 'scoped memory for bert_classifier_cls_tokens.1']
    #allocation22 [shape = 'u8[32768]{0}', space=vmem, size = 0x8000, scoped, tag = 'input window, operand 12, single buffered']
    #allocation23 [shape = 'u8[1024]{0}', space=vmem, size = 0x400, scoped, tag = 'input window, operand 13, single buffered']
    #allocation24 [shape = 's32[1]{0}', space=sflag, size = 0x4, scoped, tag = 'scoped memory for bert_classifier_cls_tokens.1']
    #allocation25 [shape = 'u8[1024]{0}', space=vmem, size = 0x400, scoped, tag = 'input window, operand 14, single buffered']
    #allocation26 [shape = 'u8[1024]{0}', space=vmem, size = 0x400, scoped, tag = 'input window, operand 15, single buffered']
    #allocation27 [shape = 's32[1]{0}', space=sflag, size = 0x4, scoped, tag = 'scoped memory for bert_classifier_cls_tokens.1']
    #allocation28 [shape = 'u8[16384]{0}', space=vmem, size = 0x4000, scoped, tag = 'input window, operand 16, single buffered']
    #allocation29 [shape = 'u8[512]{0}', space=vmem, size = 0x400, scoped, tag = 'input window, operand 17, single buffered']
    #allocation30 [shape = 's32[1]{0}', space=sflag, size = 0x4, scoped, tag = 'scoped memory for bert_classifier_cls_tokens.1']
    #allocation31 [shape = 'u8[16384]{0}', space=vmem, size = 0x4000, scoped, tag = 'input window, operand 18, single buffered']
    #allocation32 [shape = 'u8[512]{0}', space=vmem, size = 0x400, scoped, tag = 'input window, operand 19, single buffered']
    #allocation33 [shape = 's32[1]{0}', space=sflag, size = 0x4, scoped, tag = 'scoped memory for bert_classifier_cls_tokens.1']
    #allocation34 [shape = 'u8[32768]{0}', space=vmem, size = 0x8000, scoped, tag = 'input window, operand 20, single buffered']
    #allocation35 [shape = 'u8[512]{0}', space=vmem, size = 0x400, scoped, tag = 'input window, operand 21, single buffered']
    #allocation36 [shape = 's32[1]{0}', space=sflag, size = 0x4, scoped, tag = 'scoped memory for bert_classifier_cls_tokens.1']
    #allocation37 [shape = 'u8[1024]{0}', space=vmem, size = 0x400, scoped, tag = 'output window, operand 0, single buffered']
    %27 = vsyncpa [#allocation3], 0
    %28 = vsyncpa [#allocation6], 0
    %29 = vsyncpa [#allocation9], 0
    %30 = vsyncpa [#allocation12], 0
    %31 = vsyncpa [#allocation15], 0
    %32 = vsyncpa [#allocation18], 0
    %33 = vsyncpa [#allocation21], 0
    %34 = vsyncpa [#allocation24], 0
    %35 = vsyncpa [#allocation27], 0
    %36 = vsyncpa [#allocation30], 0
    %37 = vsyncpa [#allocation33], 0
    %38 = vsyncpa [#allocation36], 0
    %39 = vsyncpa [#allocation4], 0
    // Predicated region
    $region2: #{bert_classifier_cls_tokens.1} parent=1 // pred_check
      _
    $region3: #{bert_classifier_cls_tokens.1} parent=1 // pred_check_branch
      %41 = sbr.rel (0) target = $region5
    $region4: #{bert_classifier_cls_tokens.1} parent=1 // pred_region
      %s43 = ssub.s32 256, 256
      %44 = vsyncadd [#allocation3], %s43
      %s45 = sshll.u32 [#allocation2], 4
      %s46 = int_to_ptr.vmem [resolvable:$true] %s45
      %51 = dma.hbm_to_vmem [thread:$0]  %s0, 256, %s46, [#allocation3], 128, 128, 8
    $region5: #{bert_classifier_cls_tokens.1} parent=1 // pred_fallthru
      _
    // Predicated region
    $region6: #{bert_classifier_cls_tokens.1} parent=1 // pred_check
      _
    $region7: #{bert_classifier_cls_tokens.1} parent=1 // pred_check_branch
      %53 = sbr.rel (0) target = $region9
    $region8: #{bert_classifier_cls_tokens.1} parent=1 // pred_region
      %s55 = ssub.s32 32, 32
      %56 = vsyncadd [#allocation6], %s55
      %s58 = sshll.u32 [#allocation5], 4
      %s59 = int_to_ptr.vmem [resolvable:$true] %s58
      %61 = dma.hbm_to_vmem [thread:$0]  %s1, 32, %s59, [#allocation6]
    $region9: #{bert_classifier_cls_tokens.1} parent=1 // pred_fallthru
      _
    // Predicated region
    $region10: #{bert_classifier_cls_tokens.1} parent=1 // pred_check
      _
    $region11: #{bert_classifier_cls_tokens.1} parent=1 // pred_check_branch
      %63 = sbr.rel (0) target = $region13
    $region12: #{bert_classifier_cls_tokens.1} parent=1 // pred_region
      %s65 = ssub.s32 16, 16
      %66 = vsyncadd [#allocation6], %s65
      %s68 = sshll.u32 [#allocation7], 4
      %s69 = int_to_ptr.vmem [resolvable:$true] %s68
      %71 = dma.hbm_to_vmem [thread:$0]  %s2, 16, %s69, [#allocation6]
    $region13: #{bert_classifier_cls_tokens.1} parent=1 // pred_fallthru
      _
    // Predicated region
    $region14: #{bert_classifier_cls_tokens.1} parent=1 // pred_check
      _
    $region15: #{bert_classifier_cls_tokens.1} parent=1 // pred_check_branch
      %73 = sbr.rel (0) target = $region17
    $region16: #{bert_classifier_cls_tokens.1} parent=1 // pred_region
      %s75 = ssub.s32 16, 16
      %76 = vsyncadd [#allocation9], %s75
      %s78 = sshll.u32 [#allocation8], 4
      %s79 = int_to_ptr.vmem [resolvable:$true] %s78
      %81 = dma.hbm_to_vmem [thread:$0]  %s3, 16, %s79, [#allocation9]
    $region17: #{bert_classifier_cls_tokens.1} parent=1 // pred_fallthru
      _
    // Predicated region
    $region18: #{bert_classifier_cls_tokens.1} parent=1 // pred_check
      _
    $region19: #{bert_classifier_cls_tokens.1} parent=1 // pred_check_branch
      %83 = sbr.rel (0) target = $region21
    $region20: #{bert_classifier_cls_tokens.1} parent=1 // pred_region
      %s85 = ssub.s32 512, 512
      %86 = vsyncadd [#allocation9], %s85
      %s87 = sshll.u32 [#allocation10], 4
      %s88 = int_to_ptr.vmem [resolvable:$true] %s87
      %93 = dma.hbm_to_vmem [thread:$0]  %s4, 512, %s88, [#allocation9], 64, 64, 4
    $region21: #{bert_classifier_cls_tokens.1} parent=1 // pred_fallthru
      _
    // Predicated region
    $region22: #{bert_classifier_cls_tokens.1} parent=1 // pred_check
      _
    $region23: #{bert_classifier_cls_tokens.1} parent=1 // pred_check_branch
      %95 = sbr.rel (0) target = $region25
    $region24: #{bert_classifier_cls_tokens.1} parent=1 // pred_region
      %s97 = ssub.s32 32, 32
      %98 = vsyncadd [#allocation12], %s97
      %s99 = sshll.u32 [#allocation11], 4
      %s100 = int_to_ptr.vmem [resolvable:$true] %s99
      %105 = dma.hbm_to_vmem [thread:$0]  %s5, 32, %s100, [#allocation12], 16, 16, 1
    $region25: #{bert_classifier_cls_tokens.1} parent=1 // pred_fallthru
      _
    // Predicated region
    $region26: #{bert_classifier_cls_tokens.1} parent=1 // pred_check
      _
    $region27: #{bert_classifier_cls_tokens.1} parent=1 // pred_check_branch
      %107 = sbr.rel (0) target = $region29
    $region28: #{bert_classifier_cls_tokens.1} parent=1 // pred_region
      %s109 = ssub.s32 512, 512
      %110 = vsyncadd [#allocation12], %s109
      %s111 = sshll.u32 [#allocation13], 4
      %s112 = int_to_ptr.vmem [resolvable:$true] %s111
      %117 = dma.hbm_to_vmem [thread:$0]  %s6, 512, %s112, [#allocation12], 64, 64, 4
    $region29: #{bert_classifier_cls_tokens.1} parent=1 // pred_fallthru
      _
    // Predicated region
    $region30: #{bert_classifier_cls_tokens.1} parent=1 // pred_check
      _
    $region31: #{bert_classifier_cls_tokens.1} parent=1 // pred_check_branch
      %119 = sbr.rel (0) target = $region33
    $region32: #{bert_classifier_cls_tokens.1} parent=1 // pred_region
      %s121 = ssub.s32 32, 32
      %122 = vsyncadd [#allocation15], %s121
      %s123 = sshll.u32 [#allocation14], 4
      %s124 = int_to_ptr.vmem [resolvable:$true] %s123
      %129 = dma.hbm_to_vmem [thread:$0]  %s7, 32, %s124, [#allocation15], 16, 16, 1
    $region33: #{bert_classifier_cls_tokens.1} parent=1 // pred_fallthru
      _
    // Predicated region
    $region34: #{bert_classifier_cls_tokens.1} parent=1 // pred_check
      _
    $region35: #{bert_classifier_cls_tokens.1} parent=1 // pred_check_branch
      %131 = sbr.rel (0) target = $region37
    $region36: #{bert_classifier_cls_tokens.1} parent=1 // pred_region
      %s133 = ssub.s32 32, 32
      %134 = vsyncadd [#allocation15], %s133
      %s135 = sshll.u32 [#allocation16], 4
      %s136 = int_to_ptr.vmem [resolvable:$true] %s135
      %141 = dma.hbm_to_vmem [thread:$0]  %s8, 32, %s136, [#allocation15], 16, 16, 1
    $region37: #{bert_classifier_cls_tokens.1} parent=1 // pred_fallthru
      _
    // Predicated region
    $region38: #{bert_classifier_cls_tokens.1} parent=1 // pred_check
      _
    $region39: #{bert_classifier_cls_tokens.1} parent=1 // pred_check_branch
      %143 = sbr.rel (0) target = $region41
    $region40: #{bert_classifier_cls_tokens.1} parent=1 // pred_region
      %s145 = ssub.s32 32, 32
      %146 = vsyncadd [#allocation18], %s145
      %s147 = sshll.u32 [#allocation17], 4
      %s148 = int_to_ptr.vmem [resolvable:$true] %s147
      %153 = dma.hbm_to_vmem [thread:$0]  %s9, 32, %s148, [#allocation18], 16, 16, 1
    $region41: #{bert_classifier_cls_tokens.1} parent=1 // pred_fallthru
      _
    // Predicated region
    $region42: #{bert_classifier_cls_tokens.1} parent=1 // pred_check
      _
    $region43: #{bert_classifier_cls_tokens.1} parent=1 // pred_check_branch
      %155 = sbr.rel (0) target = $region45
    $region44: #{bert_classifier_cls_tokens.1} parent=1 // pred_region
      %s157 = ssub.s32 512, 512
      %158 = vsyncadd [#allocation18], %s157
      %s159 = sshll.u32 [#allocation19], 4
      %s160 = int_to_ptr.vmem [resolvable:$true] %s159
      %165 = dma.hbm_to_vmem [thread:$0]  %s10, 512, %s160, [#allocation18], 64, 64, 4
    $region45: #{bert_classifier_cls_tokens.1} parent=1 // pred_fallthru
      _
    // Predicated region
    $region46: #{bert_classifier_cls_tokens.1} parent=1 // pred_check
      _
    $region47: #{bert_classifier_cls_tokens.1} parent=1 // pred_check_branch
      %167 = sbr.rel (0) target = $region49
    $region48: #{bert_classifier_cls_tokens.1} parent=1 // pred_region
      %s169 = ssub.s32 32, 32
      %170 = vsyncadd [#allocation21], %s169
      %s171 = sshll.u32 [#allocation20], 4
      %s172 = int_to_ptr.vmem [resolvable:$true] %s171
      %177 = dma.hbm_to_vmem [thread:$0]  %s11, 32, %s172, [#allocation21], 16, 16, 1
    $region49: #{bert_classifier_cls_tokens.1} parent=1 // pred_fallthru
      _
    // Predicated region
    $region50: #{bert_classifier_cls_tokens.1} parent=1 // pred_check
      _
    $region51: #{bert_classifier_cls_tokens.1} parent=1 // pred_check_branch
      %179 = sbr.rel (0) target = $region53
    $region52: #{bert_classifier_cls_tokens.1} parent=1 // pred_region
      %s181 = ssub.s32 1024, 1024
      %182 = vsyncadd [#allocation21], %s181
      %s183 = sshll.u32 [#allocation22], 4
      %s184 = int_to_ptr.vmem [resolvable:$true] %s183
      %189 = dma.hbm_to_vmem [thread:$0]  %s12, 1024, %s184, [#allocation21], 64, 64, 4
    $region53: #{bert_classifier_cls_tokens.1} parent=1 // pred_fallthru
      _
    // Predicated region
    $region54: #{bert_classifier_cls_tokens.1} parent=1 // pred_check
      _
    $region55: #{bert_classifier_cls_tokens.1} parent=1 // pred_check_branch
      %191 = sbr.rel (0) target = $region57
    $region56: #{bert_classifier_cls_tokens.1} parent=1 // pred_region
      %s193 = ssub.s32 32, 32
      %194 = vsyncadd [#allocation24], %s193
      %s195 = sshll.u32 [#allocation23], 4
      %s196 = int_to_ptr.vmem [resolvable:$true] %s195
      %201 = dma.hbm_to_vmem [thread:$0]  %s13, 32, %s196, [#allocation24], 16, 16, 1
    $region57: #{bert_classifier_cls_tokens.1} parent=1 // pred_fallthru
      _
    // Predicated region
    $region58: #{bert_classifier_cls_tokens.1} parent=1 // pred_check
      _
    $region59: #{bert_classifier_cls_tokens.1} parent=1 // pred_check_branch
      %203 = sbr.rel (0) target = $region61
    $region60: #{bert_classifier_cls_tokens.1} parent=1 // pred_region
      %s205 = ssub.s32 32, 32
      %206 = vsyncadd [#allocation24], %s205
      %s207 = sshll.u32 [#allocation25], 4
      %s208 = int_to_ptr.vmem [resolvable:$true] %s207
      %213 = dma.hbm_to_vmem [thread:$0]  %s14, 32, %s208, [#allocation24], 16, 16, 1
    $region61: #{bert_classifier_cls_tokens.1} parent=1 // pred_fallthru
      _
    // Predicated region
    $region62: #{bert_classifier_cls_tokens.1} parent=1 // pred_check
      _
    $region63: #{bert_classifier_cls_tokens.1} parent=1 // pred_check_branch
      %215 = sbr.rel (0) target = $region65
    $region64: #{bert_classifier_cls_tokens.1} parent=1 // pred_region
      %s217 = ssub.s32 32, 32
      %218 = vsyncadd [#allocation27], %s217
      %s219 = sshll.u32 [#allocation26], 4
      %s220 = int_to_ptr.vmem [resolvable:$true] %s219
      %225 = dma.hbm_to_vmem [thread:$0]  %s15, 32, %s220, [#allocation27], 16, 16, 1
    $region65: #{bert_classifier_cls_tokens.1} parent=1 // pred_fallthru
      _
    // Predicated region
    $region66: #{bert_classifier_cls_tokens.1} parent=1 // pred_check
      _
    $region67: #{bert_classifier_cls_tokens.1} parent=1 // pred_check_branch
      %227 = sbr.rel (0) target = $region69
    $region68: #{bert_classifier_cls_tokens.1} parent=1 // pred_region
      %s229 = ssub.s32 512, 512
      %230 = vsyncadd [#allocation27], %s229
      %s231 = sshll.u32 [#allocation28], 4
      %s232 = int_to_ptr.vmem [resolvable:$true] %s231
      %237 = dma.hbm_to_vmem [thread:$0]  %s16, 512, %s232, [#allocation27], 64, 64, 4
    $region69: #{bert_classifier_cls_tokens.1} parent=1 // pred_fallthru
      _
    // Predicated region
    $region70: #{bert_classifier_cls_tokens.1} parent=1 // pred_check
      _
    $region71: #{bert_classifier_cls_tokens.1} parent=1 // pred_check_branch
      %239 = sbr.rel (0) target = $region73
    $region72: #{bert_classifier_cls_tokens.1} parent=1 // pred_region
      %s241 = ssub.s32 16, 16
      %242 = vsyncadd [#allocation30], %s241
      %s244 = sshll.u32 [#allocation29], 4
      %s245 = int_to_ptr.vmem [resolvable:$true] %s244
      %247 = dma.hbm_to_vmem [thread:$0]  %s17, 16, %s245, [#allocation30]
    $region73: #{bert_classifier_cls_tokens.1} parent=1 // pred_fallthru
      _
    // Predicated region
    $region74: #{bert_classifier_cls_tokens.1} parent=1 // pred_check
      _
    $region75: #{bert_classifier_cls_tokens.1} parent=1 // pred_check_branch
      %249 = sbr.rel (0) target = $region77
    $region76: #{bert_classifier_cls_tokens.1} parent=1 // pred_region
      %s251 = ssub.s32 512, 512
      %252 = vsyncadd [#allocation30], %s251
      %s253 = sshll.u32 [#allocation31], 4
      %s254 = int_to_ptr.vmem [resolvable:$true] %s253
      %259 = dma.hbm_to_vmem [thread:$0]  %s18, 512, %s254, [#allocation30], 64, 64, 4
    $region77: #{bert_classifier_cls_tokens.1} parent=1 // pred_fallthru
      _
    // Predicated region
    $region78: #{bert_classifier_cls_tokens.1} parent=1 // pred_check
      _
    $region79: #{bert_classifier_cls_tokens.1} parent=1 // pred_check_branch
      %261 = sbr.rel (0) target = $region81
    $region80: #{bert_classifier_cls_tokens.1} parent=1 // pred_region
      %s263 = ssub.s32 16, 16
      %264 = vsyncadd [#allocation33], %s263
      %s266 = sshll.u32 [#allocation32], 4
      %s267 = int_to_ptr.vmem [resolvable:$true] %s266
      %269 = dma.hbm_to_vmem [thread:$0]  %s19, 16, %s267, [#allocation33]
    $region81: #{bert_classifier_cls_tokens.1} parent=1 // pred_fallthru
      _
    // Predicated region
    $region82: #{bert_classifier_cls_tokens.1} parent=1 // pred_check
      _
    $region83: #{bert_classifier_cls_tokens.1} parent=1 // pred_check_branch
      %271 = sbr.rel (0) target = $region85
    $region84: #{bert_classifier_cls_tokens.1} parent=1 // pred_region
      %s273 = ssub.s32 1024, 1024
      %274 = vsyncadd [#allocation33], %s273
      %s275 = sshll.u32 [#allocation34], 4
      %s276 = int_to_ptr.vmem [resolvable:$true] %s275
      %281 = dma.hbm_to_vmem [thread:$0]  %s20, 1024, %s276, [#allocation33], 64, 64, 4
    $region85: #{bert_classifier_cls_tokens.1} parent=1 // pred_fallthru
      _
    // Predicated region
    $region86: #{bert_classifier_cls_tokens.1} parent=1 // pred_check
      _
    $region87: #{bert_classifier_cls_tokens.1} parent=1 // pred_check_branch
      %283 = sbr.rel (0) target = $region89
    $region88: #{bert_classifier_cls_tokens.1} parent=1 // pred_region
      %s285 = ssub.s32 16, 16
      %286 = vsyncadd [#allocation36], %s285
      %s288 = sshll.u32 [#allocation35], 4
      %s289 = int_to_ptr.vmem [resolvable:$true] %s288
      %291 = dma.hbm_to_vmem [thread:$0]  %s21, 16, %s289, [#allocation36]
    $region89: #{bert_classifier_cls_tokens.1} parent=1 // pred_fallthru
      _
    // Predicated region
    $region90: #{bert_classifier_cls_tokens.1} parent=1 // pred_check
      _
    $region91: #{bert_classifier_cls_tokens.1} parent=1 // pred_check_branch
      %293 = sbr.rel (0) target = $region93
    $region92: #{bert_classifier_cls_tokens.1} parent=1 // pred_region
      %294 = dma.done [#allocation3], 256
    $region93: #{bert_classifier_cls_tokens.1} parent=1 // pred_fallthru
      _
    // Predicated region
    $region94: #{bert_classifier_cls_tokens.1} parent=1 // pred_check
      _
    $region95: #{bert_classifier_cls_tokens.1} parent=1 // pred_check_branch
      %296 = sbr.rel (0) target = $region97
    $region96: #{bert_classifier_cls_tokens.1} parent=1 // pred_region
      %297 = dma.done [#allocation6], 32
    $region97: #{bert_classifier_cls_tokens.1} parent=1 // pred_fallthru
      _
    // Predicated region
    $region98: #{bert_classifier_cls_tokens.1} parent=1 // pred_check
      _
    $region99: #{bert_classifier_cls_tokens.1} parent=1 // pred_check_branch
      %299 = sbr.rel (0) target = $region101
    $region100: #{bert_classifier_cls_tokens.1} parent=1 // pred_region
      %300 = dma.done [#allocation6], 16
    $region101: #{bert_classifier_cls_tokens.1} parent=1 // pred_fallthru
      _
    // Predicated region
    $region102: #{bert_classifier_cls_tokens.1} parent=1 // pred_check
      _
    $region103: #{bert_classifier_cls_tokens.1} parent=1 // pred_check_branch
      %302 = sbr.rel (0) target = $region105
    $region104: #{bert_classifier_cls_tokens.1} parent=1 // pred_region
      %303 = dma.done [#allocation9], 16
    $region105: #{bert_classifier_cls_tokens.1} parent=1 // pred_fallthru
      _
    // Predicated region
    $region106: #{bert_classifier_cls_tokens.1} parent=1 // pred_check
      _
    $region107: #{bert_classifier_cls_tokens.1} parent=1 // pred_check_branch
      %305 = sbr.rel (0) target = $region109
    $region108: #{bert_classifier_cls_tokens.1} parent=1 // pred_region
      %306 = dma.done [#allocation9], 512
    $region109: #{bert_classifier_cls_tokens.1} parent=1 // pred_fallthru
      _
    // Predicated region
    $region110: #{bert_classifier_cls_tokens.1} parent=1 // pred_check
      _
    $region111: #{bert_classifier_cls_tokens.1} parent=1 // pred_check_branch
      %308 = sbr.rel (0) target = $region113
    $region112: #{bert_classifier_cls_tokens.1} parent=1 // pred_region
      %309 = dma.done [#allocation12], 32
    $region113: #{bert_classifier_cls_tokens.1} parent=1 // pred_fallthru
      _
    // Predicated region
    $region114: #{bert_classifier_cls_tokens.1} parent=1 // pred_check
      _
    $region115: #{bert_classifier_cls_tokens.1} parent=1 // pred_check_branch
      %311 = sbr.rel (0) target = $region117
    $region116: #{bert_classifier_cls_tokens.1} parent=1 // pred_region
      %312 = dma.done [#allocation12], 512
    $region117: #{bert_classifier_cls_tokens.1} parent=1 // pred_fallthru
      _
    // Predicated region
    $region118: #{bert_classifier_cls_tokens.1} parent=1 // pred_check
      _
    $region119: #{bert_classifier_cls_tokens.1} parent=1 // pred_check_branch
      %314 = sbr.rel (0) target = $region121
    $region120: #{bert_classifier_cls_tokens.1} parent=1 // pred_region
      %315 = dma.done [#allocation15], 32
    $region121: #{bert_classifier_cls_tokens.1} parent=1 // pred_fallthru
      _
    // Predicated region
    $region122: #{bert_classifier_cls_tokens.1} parent=1 // pred_check
      _
    $region123: #{bert_classifier_cls_tokens.1} parent=1 // pred_check_branch
      %317 = sbr.rel (0) target = $region125
    $region124: #{bert_classifier_cls_tokens.1} parent=1 // pred_region
      %318 = dma.done [#allocation15], 32
    $region125: #{bert_classifier_cls_tokens.1} parent=1 // pred_fallthru
      _
    // Predicated region
    $region126: #{bert_classifier_cls_tokens.1} parent=1 // pred_check
      _
    $region127: #{bert_classifier_cls_tokens.1} parent=1 // pred_check_branch
      %320 = sbr.rel (0) target = $region129
    $region128: #{bert_classifier_cls_tokens.1} parent=1 // pred_region
      %321 = dma.done [#allocation18], 32
    $region129: #{bert_classifier_cls_tokens.1} parent=1 // pred_fallthru
      _
    // Predicated region
    $region130: #{bert_classifier_cls_tokens.1} parent=1 // pred_check
      _
    $region131: #{bert_classifier_cls_tokens.1} parent=1 // pred_check_branch
      %323 = sbr.rel (0) target = $region133
    $region132: #{bert_classifier_cls_tokens.1} parent=1 // pred_region
      %324 = dma.done [#allocation18], 512
    $region133: #{bert_classifier_cls_tokens.1} parent=1 // pred_fallthru
      _
    // Predicated region
    $region134: #{bert_classifier_cls_tokens.1} parent=1 // pred_check
      _
    $region135: #{bert_classifier_cls_tokens.1} parent=1 // pred_check_branch
      %326 = sbr.rel (0) target = $region137
    $region136: #{bert_classifier_cls_tokens.1} parent=1 // pred_region
      %327 = dma.done [#allocation21], 32
    $region137: #{bert_classifier_cls_tokens.1} parent=1 // pred_fallthru
      _
    // Predicated region
    $region138: #{bert_classifier_cls_tokens.1} parent=1 // pred_check
      _
    $region139: #{bert_classifier_cls_tokens.1} parent=1 // pred_check_branch
      %329 = sbr.rel (0) target = $region141
    $region140: #{bert_classifier_cls_tokens.1} parent=1 // pred_region
      %330 = dma.done [#allocation21], 1024
    $region141: #{bert_classifier_cls_tokens.1} parent=1 // pred_fallthru
      _
    // Predicated region
    $region142: #{bert_classifier_cls_tokens.1} parent=1 // pred_check
      _
    $region143: #{bert_classifier_cls_tokens.1} parent=1 // pred_check_branch
      %332 = sbr.rel (0) target = $region145
    $region144: #{bert_classifier_cls_tokens.1} parent=1 // pred_region
      %333 = dma.done [#allocation24], 32
    $region145: #{bert_classifier_cls_tokens.1} parent=1 // pred_fallthru
      _
    // Predicated region
    $region146: #{bert_classifier_cls_tokens.1} parent=1 // pred_check
      _
    $region147: #{bert_classifier_cls_tokens.1} parent=1 // pred_check_branch
      %335 = sbr.rel (0) target = $region149
    $region148: #{bert_classifier_cls_tokens.1} parent=1 // pred_region
      %336 = dma.done [#allocation24], 32
    $region149: #{bert_classifier_cls_tokens.1} parent=1 // pred_fallthru
      _
    // Predicated region
    $region150: #{bert_classifier_cls_tokens.1} parent=1 // pred_check
      _
    $region151: #{bert_classifier_cls_tokens.1} parent=1 // pred_check_branch
      %338 = sbr.rel (0) target = $region153
    $region152: #{bert_classifier_cls_tokens.1} parent=1 // pred_region
      %339 = dma.done [#allocation27], 32
    $region153: #{bert_classifier_cls_tokens.1} parent=1 // pred_fallthru
      _
    // Predicated region
    $region154: #{bert_classifier_cls_tokens.1} parent=1 // pred_check
      _
    $region155: #{bert_classifier_cls_tokens.1} parent=1 // pred_check_branch
      %341 = sbr.rel (0) target = $region157
    $region156: #{bert_classifier_cls_tokens.1} parent=1 // pred_region
      %342 = dma.done [#allocation27], 512
    $region157: #{bert_classifier_cls_tokens.1} parent=1 // pred_fallthru
      _
    // Predicated region
    $region158: #{bert_classifier_cls_tokens.1} parent=1 // pred_check
      _
    $region159: #{bert_classifier_cls_tokens.1} parent=1 // pred_check_branch
      %344 = sbr.rel (0) target = $region161
    $region160: #{bert_classifier_cls_tokens.1} parent=1 // pred_region
      %345 = dma.done [#allocation30], 16
    $region161: #{bert_classifier_cls_tokens.1} parent=1 // pred_fallthru
      _
    // Predicated region
    $region162: #{bert_classifier_cls_tokens.1} parent=1 // pred_check
      _
    $region163: #{bert_classifier_cls_tokens.1} parent=1 // pred_check_branch
      %347 = sbr.rel (0) target = $region165
    $region164: #{bert_classifier_cls_tokens.1} parent=1 // pred_region
      %348 = dma.done [#allocation30], 512
    $region165: #{bert_classifier_cls_tokens.1} parent=1 // pred_fallthru
      _
    // Predicated region
    $region166: #{bert_classifier_cls_tokens.1} parent=1 // pred_check
      _
    $region167: #{bert_classifier_cls_tokens.1} parent=1 // pred_check_branch
      %350 = sbr.rel (0) target = $region169
    $region168: #{bert_classifier_cls_tokens.1} parent=1 // pred_region
      %351 = dma.done [#allocation33], 16
    $region169: #{bert_classifier_cls_tokens.1} parent=1 // pred_fallthru
      _
    // Predicated region
    $region170: #{bert_classifier_cls_tokens.1} parent=1 // pred_check
      _
    $region171: #{bert_classifier_cls_tokens.1} parent=1 // pred_check_branch
      %353 = sbr.rel (0) target = $region173
    $region172: #{bert_classifier_cls_tokens.1} parent=1 // pred_region
      %354 = dma.done [#allocation33], 1024
    $region173: #{bert_classifier_cls_tokens.1} parent=1 // pred_fallthru
      _
    // Predicated region
    $region174: #{bert_classifier_cls_tokens.1} parent=1 // pred_check
      _
    $region175: #{bert_classifier_cls_tokens.1} parent=1 // pred_check_branch
      %356 = sbr.rel (0) target = $region177
    $region176: #{bert_classifier_cls_tokens.1} parent=1 // pred_region
      %357 = dma.done [#allocation36], 16
    $region177: #{bert_classifier_cls_tokens.1} parent=1 // pred_fallthru
      _
    %v359 = vld [vmem:[#allocation2] sm:$0xff]
    %v360 = vld [vmem:[#allocation2 + $0x8] sm:$0xff]
    %v361 = vld [vmem:[#allocation7] sm:$0x1]
    %v362 = vld [vmem:[#allocation8] sm:$0x1]
    %vm363 = vcmask 261120
    %v364 = vsel %vm363, %v359, 0.0
    %365 = vadd.xlane.f32.xlu0 %v364
    %v366 = vpop.xlane.xlu0 %365
    %v367 = vsel %vm363, %v360, 0.0
    %368 = vadd.xlane.f32.xlu0 %v367
    %v369 = vpop.xlane.xlu0 %368
    %v370 = vrcp.pop 32.0
    %v371 = vmul.f32 %v366, %v370
    %v372 = vmul.f32 %v369, %v370
    %v373 = vsub.f32 %v359, %v371
    %v374 = vsub.f32 %v360, %v372
    %v375 = vmul.f32 %v373, %v373
    %v376 = vmul.f32 %v374, %v374
    %v377 = vsel %vm363, %v375, 0.0
    %378 = vadd.xlane.f32.xlu0 %v377
    %v379 = vpop.xlane.xlu0 %378
    %v380 = vsel %vm363, %v376, 0.0
    %381 = vadd.xlane.f32.xlu0 %v380
    %v382 = vpop.xlane.xlu0 %381
    %v383 = vmul.f32 %v379, %v370
    %v384 = vmul.f32 %v382, %v370
    %v385 = vadd.f32 %v383, 1e-12
    %v386 = vadd.f32 %v384, 1e-12
    %v387 = vrsqrt.pop %v385
    %v388 = vrsqrt.pop %v386
    %v389 = vmul.f32 %v373, %v387
    %v390 = vmul.f32 %v374, %v388
    %v392 = vlaneseq
    %v393 = vshrl.u32 %v392, 7
    %v394 = vsub.s32 0, %v393
    %v395 = vrot.slane %v361, %v394
    %v397 = vmul.f32 %v389, %v395
    %v398 = vmul.f32 %v390, %v395
    %v400 = vlaneseq
    %v401 = vshrl.u32 %v400, 7
    %v402 = vsub.s32 0, %v401
    %v403 = vrot.slane %v362, %v402
    %v405 = vadd.f32 %v397, %v403
    %v406 = vadd.f32 %v398, %v403
    %v407 = vld [vmem:[#allocation5] sm:$0x3]
    %v408 = vsub.f32 1.0, %v407
    %v411 = vunpack.c.l.s4 1966171168
    %v412 = vunpack.c.0.s8 %v411
    %v413 = vlaneseq
    %v414 = vshrl.u32 %v413, 7
    %v415 = vsub.s32 %v412, %v414
    %v416 = vrot.slane %v408, %v415
    %v417 = vcombine.high %v416, %v416
    %v419 = vunpack.c.l.s4 1966171168
    %v420 = vunpack.c.0.s8 %v419
    %v421 = vlaneseq
    %v422 = vshrl.u32 %v421, 7
    %v423 = vsub.s32 %v420, %v422
    %v424 = vrot.slane %v416, %v423
    %v426 = vunpack.c.l.s4 1966171168
    %v427 = vunpack.c.0.s8 %v426
    %v428 = vlaneseq
    %v429 = vshrl.u32 %v428, 7
    %v430 = vsub.s32 %v427, %v429
    %v431 = vrot.slane %v417, %v430
    %v434 = vmul.f32 %v424, -10000.0
    %v435 = vmul.f32 %v431, -10000.0
    %v436 = vpack.c.bf16 %v406, %v405
    %v437 = vld [vmem:[#allocation10] sm:$0xf]
    %v438 = vld [vmem:[#allocation10 + $0x4] sm:$0xf]
    %v439 = vld [vmem:[#allocation10 + $0x8] sm:$0xf]
    %v440 = vld [vmem:[#allocation10 + $0xc] sm:$0xf]
    %v441 = vld [vmem:[#allocation11] sm:$0x1]
    %v443 = vlaneseq
    %v444 = vshrl.u32 %v443, 7
    %v445 = vsub.s32 0, %v444
    %v446 = vrot.slane %v441, %v445
    %v452 = vunpack.c.l.b16 %v437
    %v453 = vunpack.c.l.b16 %v438
    %v454 = vunpack.c.l.b16 %v439
    %v455 = vunpack.c.l.b16 %v440
    %v456 = vpack.c.b16 %v453, %v452
    %v457 = vpack.c.b16 %v455, %v454
    %v461 = vsel %vm363, %v436, 0
    %463 = vmatprep.subr.bf16.mxu0 0
    %464 = vmatpush1.bf16.msra.mxu0 %v456
    %465 = vmatprep.subr.bf16.mxu0 0
    %466 = vmatpush1.bf16.msra.mxu0 %v457
    %467 = vmatprep.subr.bf16.mxu0 0
    %468 = vmatpush1.bf16.msra.mxu0 0
    %469 = vmatprep.subr.bf16.mxu0 0
    %470 = vmatpush1.bf16.msra.mxu0 0
    %471 = vmatprep.subr.bf16.mxu0 0
    %472 = vmatpush1.bf16.msra.mxu0 0
    %473 = vmatprep.subr.bf16.mxu0 0
    %474 = vmatpush1.bf16.msra.mxu0 0
    %475 = vmatprep.subr.bf16.mxu0 0
    %476 = vmatpush1.bf16.msra.mxu0 0
    %477 = vmatprep.subr.bf16.mxu0 0
    %478 = vmatpush1.bf16.msra.mxu0 0
    %479 = vmatprep.subr.bf16.mxu0 0
    %480 = vmatpush1.bf16.msra.mxu0 0
    %481 = vmatprep.subr.bf16.mxu0 0
    %482 = vmatpush1.bf16.msra.mxu0 0
    %483 = vmatprep.subr.bf16.mxu0 0
    %484 = vmatpush1.bf16.msra.mxu0 0
    %485 = vmatprep.subr.bf16.mxu0 0
    %486 = vmatpush1.bf16.msra.mxu0 0
    %487 = vmatprep.subr.bf16.mxu0 0
    %488 = vmatpush1.bf16.msra.mxu0 0
    %489 = vmatprep.subr.bf16.mxu0 0
    %490 = vmatpush1.bf16.msra.mxu0 0
    %491 = vmatprep.subr.bf16.mxu0 0
    %492 = vmatpush1.bf16.msra.mxu0 0
    %493 = vmatprep.subr.bf16.mxu0 0
    %494 = vmatpush1.bf16.msra.mxu0 0
    %495 = vmatprep.mubr.bf16.mxu0 0
    %496 = vmatmul.mubr.bf16.gmra.mrb[0].mxu0 %v461
    %v497 = vpop.f32.mrb[0].mxu0
    %v498 = vadd.f32 %v446, %v497
    %v499 = vpop.f32.mrb[0].mxu0
    %v500 = vpop.f32.mrb[0].mxu0
    %v501 = vadd.f32 %v446, %v500
    %v502 = vpop.f32.mrb[0].mxu0
    %503 = vdwg.mxu0
    %v504 = vpack.c.bf16 %v501, %v498
    %v506 = vunpack.c.l.b16 %v504
    %v507 = vunpack.c.h.b16 %v504
    %v508 = vpack.c.b16 %v506, %v506
    %v509 = vpack.c.b16 %v507, %v507
    %510 = vrot.lane.b32.xlu0 %v508, 112
    %v511 = vpop.permute.xlu0 %510
    %512 = vrot.lane.b32.xlu0 %v509, 112
    %v513 = vpop.permute.xlu0 %512
    %v516 = vlaneseq
    %v517 = vshrl.u32 %v516, 7
    %v518 = vsub.s32 0, %v517
    %v519 = vrot.slane %v434, %v518
    %v520 = vlaneseq
    %v521 = vshrl.u32 %v520, 7
    %v522 = vsub.s32 0, %v521
    %v523 = vrot.slane %v435, %v522
    %526 = vrot.lane.b32.xlu0 %v508, 96
    %v527 = vpop.permute.xlu0 %526
    %vm528 = vcmask 130048
    %v530 = vsel %vm528, %v508, 0
    %v533 = vsel %vm528, %v527, 0
    %535 = vmatprep.subr.bf16.mxu0 0
    %536 = vmatpush1.bf16.xpose.msra.mxu0 %v533
    %537 = vmatprep.subr.bf16.mxu0 0
    %538 = vmatpush1.bf16.xpose.msra.mxu0 0
    %539 = vmatprep.subr.bf16.mxu0 0
    %540 = vmatpush1.bf16.xpose.msra.mxu0 0
    %541 = vmatprep.subr.bf16.mxu0 0
    %542 = vmatpush1.bf16.xpose.msra.mxu0 0
    %543 = vmatprep.subr.bf16.mxu0 0
    %544 = vmatpush1.bf16.xpose.msra.mxu0 0
    %545 = vmatprep.subr.bf16.mxu0 0
    %546 = vmatpush1.bf16.xpose.msra.mxu0 0
    %547 = vmatprep.subr.bf16.mxu0 0
    %548 = vmatpush1.bf16.xpose.msra.mxu0 0
    %549 = vmatprep.subr.bf16.mxu0 0
    %550 = vmatpush1.bf16.xpose.msra.mxu0 0
    %551 = vmatprep.subr.bf16.mxu0 0
    %552 = vmatpush1.bf16.xpose.msra.mxu0 0
    %553 = vmatprep.subr.bf16.mxu0 0
    %554 = vmatpush1.bf16.xpose.msra.mxu0 0
    %555 = vmatprep.subr.bf16.mxu0 0
    %556 = vmatpush1.bf16.xpose.msra.mxu0 0
    %557 = vmatprep.subr.bf16.mxu0 0
    %558 = vmatpush1.bf16.xpose.msra.mxu0 0
    %559 = vmatprep.subr.bf16.mxu0 0
    %560 = vmatpush1.bf16.xpose.msra.mxu0 0
    %561 = vmatprep.subr.bf16.mxu0 0
    %562 = vmatpush1.bf16.xpose.msra.mxu0 0
    %563 = vmatprep.subr.bf16.mxu0 0
    %564 = vmatpush1.bf16.xpose.msra.mxu0 0
    %565 = vmatprep.subr.bf16.mxu0 0
    %566 = vmatpush1.bf16.xpose.msra.mxu0 0
    %567 = vmatprep.mubr.bf16.mxu0 0
    %568 = vmatmul.mubr.bf16.gmra.mrb[0].mxu0 %v530
    %v569 = vpop.f32.mrb[0].mxu0
    %v570 = vadd.f32 %v519, %v569
    %v571 = vpop.f32.mrb[0].mxu0
    %v572 = vpop.f32.mrb[0].mxu0
    %v573 = vpop.f32.mrb[0].mxu0
    %574 = vdwg.mxu0
    %v575 = vunpack.c.l.b16 %v511
    %v576 = vpack.c.b16 %v575, %v575
    %577 = vrot.lane.b32.xlu0 %v576, 96
    %v578 = vpop.permute.xlu0 %577
    %v580 = vsel %vm528, %v511, 0
    %v583 = vsel %vm528, %v578, 0
    %585 = vmatprep.subr.bf16.mxu0 0
    %586 = vmatpush1.bf16.xpose.msra.mxu0 %v583
    %587 = vmatprep.subr.bf16.mxu0 0
    %588 = vmatpush1.bf16.xpose.msra.mxu0 0
    %589 = vmatprep.subr.bf16.mxu0 0
    %590 = vmatpush1.bf16.xpose.msra.mxu0 0
    %591 = vmatprep.subr.bf16.mxu0 0
    %592 = vmatpush1.bf16.xpose.msra.mxu0 0
    %593 = vmatprep.subr.bf16.mxu0 0
    %594 = vmatpush1.bf16.xpose.msra.mxu0 0
    %595 = vmatprep.subr.bf16.mxu0 0
    %596 = vmatpush1.bf16.xpose.msra.mxu0 0
    %597 = vmatprep.subr.bf16.mxu0 0
    %598 = vmatpush1.bf16.xpose.msra.mxu0 0
    %599 = vmatprep.subr.bf16.mxu0 0
    %600 = vmatpush1.bf16.xpose.msra.mxu0 0
    %601 = vmatprep.subr.bf16.mxu0 0
    %602 = vmatpush1.bf16.xpose.msra.mxu0 0
    %603 = vmatprep.subr.bf16.mxu0 0
    %604 = vmatpush1.bf16.xpose.msra.mxu0 0
    %605 = vmatprep.subr.bf16.mxu0 0
    %606 = vmatpush1.bf16.xpose.msra.mxu0 0
    %607 = vmatprep.subr.bf16.mxu0 0
    %608 = vmatpush1.bf16.xpose.msra.mxu0 0
    %609 = vmatprep.subr.bf16.mxu0 0
    %610 = vmatpush1.bf16.xpose.msra.mxu0 0
    %611 = vmatprep.subr.bf16.mxu0 0
    %612 = vmatpush1.bf16.xpose.msra.mxu0 0
    %613 = vmatprep.subr.bf16.mxu0 0
    %614 = vmatpush1.bf16.xpose.msra.mxu0 0
    %615 = vmatprep.subr.bf16.mxu0 0
    %616 = vmatpush1.bf16.xpose.msra.mxu0 0
    %617 = vmatprep.mubr.bf16.mxu0 0
    %618 = vmatmul.mubr.bf16.gmra.mrb[0].mxu0 %v580
    %v619 = vpop.f32.mrb[0].mxu0
    %v620 = vadd.f32 %v519, %v619
    %v621 = vpop.f32.mrb[0].mxu0
    %v622 = vpop.f32.mrb[0].mxu0
    %v623 = vpop.f32.mrb[0].mxu0
    %624 = vdwg.mxu0
    %625 = vrot.lane.b32.xlu0 %v509, 96
    %v626 = vpop.permute.xlu0 %625
    %v628 = vsel %vm528, %v509, 0
    %v631 = vsel %vm528, %v626, 0
    %633 = vmatprep.subr.bf16.mxu0 0
    %634 = vmatpush1.bf16.xpose.msra.mxu0 %v631
    %635 = vmatprep.subr.bf16.mxu0 0
    %636 = vmatpush1.bf16.xpose.msra.mxu0 0
    %637 = vmatprep.subr.bf16.mxu0 0
    %638 = vmatpush1.bf16.xpose.msra.mxu0 0
    %639 = vmatprep.subr.bf16.mxu0 0
    %640 = vmatpush1.bf16.xpose.msra.mxu0 0
    %641 = vmatprep.subr.bf16.mxu0 0
    %642 = vmatpush1.bf16.xpose.msra.mxu0 0
    %643 = vmatprep.subr.bf16.mxu0 0
    %644 = vmatpush1.bf16.xpose.msra.mxu0 0
    %645 = vmatprep.subr.bf16.mxu0 0
    %646 = vmatpush1.bf16.xpose.msra.mxu0 0
    %647 = vmatprep.subr.bf16.mxu0 0
    %648 = vmatpush1.bf16.xpose.msra.mxu0 0
    %649 = vmatprep.subr.bf16.mxu0 0
    %650 = vmatpush1.bf16.xpose.msra.mxu0 0
    %651 = vmatprep.subr.bf16.mxu0 0
    %652 = vmatpush1.bf16.xpose.msra.mxu0 0
    %653 = vmatprep.subr.bf16.mxu0 0
    %654 = vmatpush1.bf16.xpose.msra.mxu0 0
    %655 = vmatprep.subr.bf16.mxu0 0
    %656 = vmatpush1.bf16.xpose.msra.mxu0 0
    %657 = vmatprep.subr.bf16.mxu0 0
    %658 = vmatpush1.bf16.xpose.msra.mxu0 0
    %659 = vmatprep.subr.bf16.mxu0 0
    %660 = vmatpush1.bf16.xpose.msra.mxu0 0
    %661 = vmatprep.subr.bf16.mxu0 0
    %662 = vmatpush1.bf16.xpose.msra.mxu0 0
    %663 = vmatprep.subr.bf16.mxu0 0
    %664 = vmatpush1.bf16.xpose.msra.mxu0 0
    %665 = vmatprep.mubr.bf16.mxu0 0
    %666 = vmatmul.mubr.bf16.gmra.mrb[0].mxu0 %v628
    %v667 = vpop.f32.mrb[0].mxu0
    %v668 = vadd.f32 %v523, %v667
    %v669 = vpop.f32.mrb[0].mxu0
    %v670 = vpop.f32.mrb[0].mxu0
    %v671 = vpop.f32.mrb[0].mxu0
    %672 = vdwg.mxu0
    %v673 = vunpack.c.l.b16 %v513
    %v674 = vpack.c.b16 %v673, %v673
    %675 = vrot.lane.b32.xlu0 %v674, 96
    %v676 = vpop.permute.xlu0 %675
    %v678 = vsel %vm528, %v513, 0
    %v681 = vsel %vm528, %v676, 0
    %683 = vmatprep.subr.bf16.mxu0 0
    %684 = vmatpush1.bf16.xpose.msra.mxu0 %v681
    %685 = vmatprep.subr.bf16.mxu0 0
    %686 = vmatpush1.bf16.xpose.msra.mxu0 0
    %687 = vmatprep.subr.bf16.mxu0 0
    %688 = vmatpush1.bf16.xpose.msra.mxu0 0
    %689 = vmatprep.subr.bf16.mxu0 0
    %690 = vmatpush1.bf16.xpose.msra.mxu0 0
    %691 = vmatprep.subr.bf16.mxu0 0
    %692 = vmatpush1.bf16.xpose.msra.mxu0 0
    %693 = vmatprep.subr.bf16.mxu0 0
    %694 = vmatpush1.bf16.xpose.msra.mxu0 0
    %695 = vmatprep.subr.bf16.mxu0 0
    %696 = vmatpush1.bf16.xpose.msra.mxu0 0
    %697 = vmatprep.subr.bf16.mxu0 0
    %698 = vmatpush1.bf16.xpose.msra.mxu0 0
    %699 = vmatprep.subr.bf16.mxu0 0
    %700 = vmatpush1.bf16.xpose.msra.mxu0 0
    %701 = vmatprep.subr.bf16.mxu0 0
    %702 = vmatpush1.bf16.xpose.msra.mxu0 0
    %703 = vmatprep.subr.bf16.mxu0 0
    %704 = vmatpush1.bf16.xpose.msra.mxu0 0
    %705 = vmatprep.subr.bf16.mxu0 0
    %706 = vmatpush1.bf16.xpose.msra.mxu0 0
    %707 = vmatprep.subr.bf16.mxu0 0
    %708 = vmatpush1.bf16.xpose.msra.mxu0 0
    %709 = vmatprep.subr.bf16.mxu0 0
    %710 = vmatpush1.bf16.xpose.msra.mxu0 0
    %711 = vmatprep.subr.bf16.mxu0 0
    %712 = vmatpush1.bf16.xpose.msra.mxu0 0
    %713 = vmatprep.subr.bf16.mxu0 0
    %714 = vmatpush1.bf16.xpose.msra.mxu0 0
    %715 = vmatprep.mubr.bf16.mxu0 0
    %716 = vmatmul.mubr.bf16.gmra.mrb[0].mxu0 %v678
    %v717 = vpop.f32.mrb[0].mxu0
    %v718 = vadd.f32 %v523, %v717
    %v719 = vpop.f32.mrb[0].mxu0
    %v720 = vpop.f32.mrb[0].mxu0
    %v721 = vpop.f32.mrb[0].mxu0
    %722 = vdwg.mxu0
    %vm723 = vcmask 64512
    %v724 = vsel %vm723, %v570, -inf
    %725 = vmax.xlane.f32.xlu0 %v724
    %v726 = vpop.xlane.xlu0 %725
    %v727 = vsel %vm723, %v620, -inf
    %728 = vmax.xlane.f32.xlu0 %v727
    %v729 = vpop.xlane.xlu0 %728
    %v730 = vsel %vm723, %v668, -inf
    %731 = vmax.xlane.f32.xlu0 %v730
    %v732 = vpop.xlane.xlu0 %731
    %v733 = vsel %vm723, %v718, -inf
    %734 = vmax.xlane.f32.xlu0 %v733
    %v735 = vpop.xlane.xlu0 %734
    %v736 = vsub.f32 %v570, %v726
    %v737 = vsub.f32 %v620, %v729
    %v738 = vsub.f32 %v668, %v732
    %v739 = vsub.f32 %v718, %v735
    %v740 = vmul.f32 %v736, 1.442695
    %v741 = vpow.pop %v740
    %v742 = vmul.f32 %v737, 1.442695
    %v743 = vpow.pop %v742
    %v744 = vmul.f32 %v738, 1.442695
    %v745 = vpow.pop %v744
    %v746 = vmul.f32 %v739, 1.442695
    %v747 = vpow.pop %v746
    %v748 = vsel %vm723, %v741, 0.0
    %749 = vadd.xlane.f32.xlu0 %v748
    %v750 = vpop.xlane.xlu0 %749
    %v751 = vsel %vm723, %v743, 0.0
    %752 = vadd.xlane.f32.xlu0 %v751
    %v753 = vpop.xlane.xlu0 %752
    %v754 = vsel %vm723, %v745, 0.0
    %755 = vadd.xlane.f32.xlu0 %v754
    %v756 = vpop.xlane.xlu0 %755
    %v757 = vsel %vm723, %v747, 0.0
    %758 = vadd.xlane.f32.xlu0 %v757
    %v759 = vpop.xlane.xlu0 %758
    %v760 = vrcp.pop %v750
    %v761 = vrcp.pop %v753
    %v762 = vrcp.pop %v756
    %v763 = vrcp.pop %v759
    %v764 = vmul.f32 %v741, %v760
    %v765 = vmul.f32 %v743, %v761
    %v766 = vmul.f32 %v745, %v762
    %v767 = vmul.f32 %v747, %v763
    %v768 = vpack.c.bf16 %v764, %v764
    %v769 = vpack.c.bf16 %v765, %v765
    %v770 = vpack.c.bf16 %v766, %v766
    %v771 = vpack.c.bf16 %v767, %v767
    %772 = vrot.lane.b32.xlu0 %v508, 64
    %v773 = vpop.permute.xlu0 %772
    %v775 = vsel %vm723, %v768, 0
    %vm777 = vcmask 1043456
    %v779 = vsel %vm777, %v773, 0
    %781 = vmatprep.subr.bf16.mxu0 0
    %782 = vmatpush1.bf16.msra.mxu0 %v779
    %783 = vmatprep.subr.bf16.mxu0 0
    %784 = vmatpush1.bf16.msra.mxu0 0
    %785 = vmatprep.subr.bf16.mxu0 0
    %786 = vmatpush1.bf16.msra.mxu0 0
    %787 = vmatprep.subr.bf16.mxu0 0
    %788 = vmatpush1.bf16.msra.mxu0 0
    %789 = vmatprep.subr.bf16.mxu0 0
    %790 = vmatpush1.bf16.msra.mxu0 0
    %791 = vmatprep.subr.bf16.mxu0 0
    %792 = vmatpush1.bf16.msra.mxu0 0
    %793 = vmatprep.subr.bf16.mxu0 0
    %794 = vmatpush1.bf16.msra.mxu0 0
    %795 = vmatprep.subr.bf16.mxu0 0
    %796 = vmatpush1.bf16.msra.mxu0 0
    %797 = vmatprep.subr.bf16.mxu0 0
    %798 = vmatpush1.bf16.msra.mxu0 0
    %799 = vmatprep.subr.bf16.mxu0 0
    %800 = vmatpush1.bf16.msra.mxu0 0
    %801 = vmatprep.subr.bf16.mxu0 0
    %802 = vmatpush1.bf16.msra.mxu0 0
    %803 = vmatprep.subr.bf16.mxu0 0
    %804 = vmatpush1.bf16.msra.mxu0 0
    %805 = vmatprep.subr.bf16.mxu0 0
    %806 = vmatpush1.bf16.msra.mxu0 0
    %807 = vmatprep.subr.bf16.mxu0 0
    %808 = vmatpush1.bf16.msra.mxu0 0
    %809 = vmatprep.subr.bf16.mxu0 0
    %810 = vmatpush1.bf16.msra.mxu0 0
    %811 = vmatprep.subr.bf16.mxu0 0
    %812 = vmatpush1.bf16.msra.mxu0 0
    %813 = vmatprep.mubr.bf16.mxu0 0
    %814 = vmatmul.mubr.bf16.gmra.mrb[0].mxu0 %v775
    %v815 = vpop.f32.mrb[0].mxu0
    %v816 = vadd.f32 0.0, %v815
    %v817 = vpop.f32.mrb[0].mxu0
    %v818 = vpop.f32.mrb[0].mxu0
    %v819 = vpop.f32.mrb[0].mxu0
    %820 = vdwg.mxu0
    %821 = vrot.lane.b32.xlu0 %v576, 64
    %v822 = vpop.permute.xlu0 %821
    %v824 = vsel %vm723, %v769, 0
    %v827 = vsel %vm777, %v822, 0
    %829 = vmatprep.subr.bf16.mxu0 0
    %830 = vmatpush1.bf16.msra.mxu0 %v827
    %831 = vmatprep.subr.bf16.mxu0 0
    %832 = vmatpush1.bf16.msra.mxu0 0
    %833 = vmatprep.subr.bf16.mxu0 0
    %834 = vmatpush1.bf16.msra.mxu0 0
    %835 = vmatprep.subr.bf16.mxu0 0
    %836 = vmatpush1.bf16.msra.mxu0 0
    %837 = vmatprep.subr.bf16.mxu0 0
    %838 = vmatpush1.bf16.msra.mxu0 0
    %839 = vmatprep.subr.bf16.mxu0 0
    %840 = vmatpush1.bf16.msra.mxu0 0
    %841 = vmatprep.subr.bf16.mxu0 0
    %842 = vmatpush1.bf16.msra.mxu0 0
    %843 = vmatprep.subr.bf16.mxu0 0
    %844 = vmatpush1.bf16.msra.mxu0 0
    %845 = vmatprep.subr.bf16.mxu0 0
    %846 = vmatpush1.bf16.msra.mxu0 0
    %847 = vmatprep.subr.bf16.mxu0 0
    %848 = vmatpush1.bf16.msra.mxu0 0
    %849 = vmatprep.subr.bf16.mxu0 0
    %850 = vmatpush1.bf16.msra.mxu0 0
    %851 = vmatprep.subr.bf16.mxu0 0
    %852 = vmatpush1.bf16.msra.mxu0 0
    %853 = vmatprep.subr.bf16.mxu0 0
    %854 = vmatpush1.bf16.msra.mxu0 0
    %855 = vmatprep.subr.bf16.mxu0 0
    %856 = vmatpush1.bf16.msra.mxu0 0
    %857 = vmatprep.subr.bf16.mxu0 0
    %858 = vmatpush1.bf16.msra.mxu0 0
    %859 = vmatprep.subr.bf16.mxu0 0
    %860 = vmatpush1.bf16.msra.mxu0 0
    %861 = vmatprep.mubr.bf16.mxu0 0
    %862 = vmatmul.mubr.bf16.gmra.mrb[0].mxu0 %v824
    %v863 = vpop.f32.mrb[0].mxu0
    %v864 = vadd.f32 0.0, %v863
    %v865 = vpop.f32.mrb[0].mxu0
    %v866 = vpop.f32.mrb[0].mxu0
    %v867 = vpop.f32.mrb[0].mxu0
    %868 = vdwg.mxu0
    %869 = vrot.lane.b32.xlu0 %v509, 64
    %v870 = vpop.permute.xlu0 %869
    %v872 = vsel %vm723, %v770, 0
    %v875 = vsel %vm777, %v870, 0
    %877 = vmatprep.subr.bf16.mxu0 0
    %878 = vmatpush1.bf16.msra.mxu0 %v875
    %879 = vmatprep.subr.bf16.mxu0 0
    %880 = vmatpush1.bf16.msra.mxu0 0
    %881 = vmatprep.subr.bf16.mxu0 0
    %882 = vmatpush1.bf16.msra.mxu0 0
    %883 = vmatprep.subr.bf16.mxu0 0
    %884 = vmatpush1.bf16.msra.mxu0 0
    %885 = vmatprep.subr.bf16.mxu0 0
    %886 = vmatpush1.bf16.msra.mxu0 0
    %887 = vmatprep.subr.bf16.mxu0 0
    %888 = vmatpush1.bf16.msra.mxu0 0
    %889 = vmatprep.subr.bf16.mxu0 0
    %890 = vmatpush1.bf16.msra.mxu0 0
    %891 = vmatprep.subr.bf16.mxu0 0
    %892 = vmatpush1.bf16.msra.mxu0 0
    %893 = vmatprep.subr.bf16.mxu0 0
    %894 = vmatpush1.bf16.msra.mxu0 0
    %895 = vmatprep.subr.bf16.mxu0 0
    %896 = vmatpush1.bf16.msra.mxu0 0
    %897 = vmatprep.subr.bf16.mxu0 0
    %898 = vmatpush1.bf16.msra.mxu0 0
    %899 = vmatprep.subr.bf16.mxu0 0
    %900 = vmatpush1.bf16.msra.mxu0 0
    %901 = vmatprep.subr.bf16.mxu0 0
    %902 = vmatpush1.bf16.msra.mxu0 0
    %903 = vmatprep.subr.bf16.mxu0 0
    %904 = vmatpush1.bf16.msra.mxu0 0
    %905 = vmatprep.subr.bf16.mxu0 0
    %906 = vmatpush1.bf16.msra.mxu0 0
    %907 = vmatprep.subr.bf16.mxu0 0
    %908 = vmatpush1.bf16.msra.mxu0 0
    %909 = vmatprep.mubr.bf16.mxu0 0
    %910 = vmatmul.mubr.bf16.gmra.mrb[0].mxu0 %v872
    %v911 = vpop.f32.mrb[0].mxu0
    %v912 = vadd.f32 0.0, %v911
    %v913 = vpop.f32.mrb[0].mxu0
    %v914 = vpop.f32.mrb[0].mxu0
    %v915 = vpop.f32.mrb[0].mxu0
    %916 = vdwg.mxu0
    %917 = vrot.lane.b32.xlu0 %v674, 64
    %v918 = vpop.permute.xlu0 %917
    %v920 = vsel %vm723, %v771, 0
    %v923 = vsel %vm777, %v918, 0
    %925 = vmatprep.subr.bf16.mxu0 0
    %926 = vmatpush1.bf16.msra.mxu0 %v923
    %927 = vmatprep.subr.bf16.mxu0 0
    %928 = vmatpush1.bf16.msra.mxu0 0
    %929 = vmatprep.subr.bf16.mxu0 0
    %930 = vmatpush1.bf16.msra.mxu0 0
    %931 = vmatprep.subr.bf16.mxu0 0
    %932 = vmatpush1.bf16.msra.mxu0 0
    %933 = vmatprep.subr.bf16.mxu0 0
    %934 = vmatpush1.bf16.msra.mxu0 0
    %935 = vmatprep.subr.bf16.mxu0 0
    %936 = vmatpush1.bf16.msra.mxu0 0
    %937 = vmatprep.subr.bf16.mxu0 0
    %938 = vmatpush1.bf16.msra.mxu0 0
    %939 = vmatprep.subr.bf16.mxu0 0
    %940 = vmatpush1.bf16.msra.mxu0 0
    %941 = vmatprep.subr.bf16.mxu0 0
    %942 = vmatpush1.bf16.msra.mxu0 0
    %943 = vmatprep.subr.bf16.mxu0 0
    %944 = vmatpush1.bf16.msra.mxu0 0
    %945 = vmatprep.subr.bf16.mxu0 0
    %946 = vmatpush1.bf16.msra.mxu0 0
    %947 = vmatprep.subr.bf16.mxu0 0
    %948 = vmatpush1.bf16.msra.mxu0 0
    %949 = vmatprep.subr.bf16.mxu0 0
    %950 = vmatpush1.bf16.msra.mxu0 0
    %951 = vmatprep.subr.bf16.mxu0 0
    %952 = vmatpush1.bf16.msra.mxu0 0
    %953 = vmatprep.subr.bf16.mxu0 0
    %954 = vmatpush1.bf16.msra.mxu0 0
    %955 = vmatprep.subr.bf16.mxu0 0
    %956 = vmatpush1.bf16.msra.mxu0 0
    %957 = vmatprep.mubr.bf16.mxu0 0
    %958 = vmatmul.mubr.bf16.gmra.mrb[0].mxu0 %v920
    %v959 = vpop.f32.mrb[0].mxu0
    %v960 = vadd.f32 0.0, %v959
    %v961 = vpop.f32.mrb[0].mxu0
    %v962 = vpop.f32.mrb[0].mxu0
    %v963 = vpop.f32.mrb[0].mxu0
    %964 = vdwg.mxu0
    %967 = vrot.lane.b32.xlu0 %v864, 16
    %v968 = vpop.permute.xlu0 %967
    %969 = vrot.lane.b32.xlu0 %v960, 16
    %v970 = vpop.permute.xlu0 %969
    %v973 = vsel %vm528, %v816, %v968
    %v974 = vsel %vm528, %v912, %v970
    %v975 = vpack.c.bf16 %v974, %v973
    %v976 = vld [vmem:[#allocation13] sm:$0xf]
    %v977 = vld [vmem:[#allocation13 + $0x4] sm:$0xf]
    %v978 = vld [vmem:[#allocation13 + $0x8] sm:$0xf]
    %v979 = vld [vmem:[#allocation13 + $0xc] sm:$0xf]
    %v980 = vld [vmem:[#allocation14] sm:$0x1]
    %v982 = vlaneseq
    %v983 = vshrl.u32 %v982, 7
    %v984 = vsub.s32 0, %v983
    %v985 = vrot.slane %v980, %v984
    %v991 = vunpack.c.l.b16 %v976
    %v992 = vunpack.c.l.b16 %v977
    %v993 = vunpack.c.l.b16 %v978
    %v994 = vunpack.c.l.b16 %v979
    %v995 = vpack.c.b16 %v992, %v991
    %v996 = vpack.c.b16 %v994, %v993
    %v1000 = vsel %vm363, %v975, 0
    %1002 = vmatprep.subr.bf16.mxu0 0
    %1003 = vmatpush1.bf16.msra.mxu0 %v995
    %1004 = vmatprep.subr.bf16.mxu0 0
    %1005 = vmatpush1.bf16.msra.mxu0 %v996
    %1006 = vmatprep.subr.bf16.mxu0 0
    %1007 = vmatpush1.bf16.msra.mxu0 0
    %1008 = vmatprep.subr.bf16.mxu0 0
    %1009 = vmatpush1.bf16.msra.mxu0 0
    %1010 = vmatprep.subr.bf16.mxu0 0
    %1011 = vmatpush1.bf16.msra.mxu0 0
    %1012 = vmatprep.subr.bf16.mxu0 0
    %1013 = vmatpush1.bf16.msra.mxu0 0
    %1014 = vmatprep.subr.bf16.mxu0 0
    %1015 = vmatpush1.bf16.msra.mxu0 0
    %1016 = vmatprep.subr.bf16.mxu0 0
    %1017 = vmatpush1.bf16.msra.mxu0 0
    %1018 = vmatprep.subr.bf16.mxu0 0
    %1019 = vmatpush1.bf16.msra.mxu0 0
    %1020 = vmatprep.subr.bf16.mxu0 0
    %1021 = vmatpush1.bf16.msra.mxu0 0
    %1022 = vmatprep.subr.bf16.mxu0 0
    %1023 = vmatpush1.bf16.msra.mxu0 0
    %1024 = vmatprep.subr.bf16.mxu0 0
    %1025 = vmatpush1.bf16.msra.mxu0 0
    %1026 = vmatprep.subr.bf16.mxu0 0
    %1027 = vmatpush1.bf16.msra.mxu0 0
    %1028 = vmatprep.subr.bf16.mxu0 0
    %1029 = vmatpush1.bf16.msra.mxu0 0
    %1030 = vmatprep.subr.bf16.mxu0 0
    %1031 = vmatpush1.bf16.msra.mxu0 0
    %1032 = vmatprep.subr.bf16.mxu0 0
    %1033 = vmatpush1.bf16.msra.mxu0 0
    %1034 = vmatprep.mubr.bf16.mxu0 0
    %1035 = vmatmul.mubr.bf16.gmra.mrb[0].mxu0 %v1000
    %v1036 = vpop.f32.mrb[0].mxu0
    %v1037 = vadd.f32 %v985, %v1036
    %v1038 = vpop.f32.mrb[0].mxu0
    %v1039 = vpop.f32.mrb[0].mxu0
    %v1040 = vadd.f32 %v985, %v1039
    %v1041 = vpop.f32.mrb[0].mxu0
    %1042 = vdwg.mxu0
    %v1043 = vadd.f32 %v405, %v1037
    %v1044 = vadd.f32 %v406, %v1040
    %v1045 = vld [vmem:[#allocation16] sm:$0x1]
    %v1046 = vld [vmem:[#allocation17] sm:$0x1]
    %v1047 = vsel %vm363, %v1043, 0.0
    %1048 = vadd.xlane.f32.xlu0 %v1047
    %v1049 = vpop.xlane.xlu0 %1048
    %v1050 = vsel %vm363, %v1044, 0.0
    %1051 = vadd.xlane.f32.xlu0 %v1050
    %v1052 = vpop.xlane.xlu0 %1051
    %v1053 = vmul.f32 %v1049, %v370
    %v1054 = vmul.f32 %v1052, %v370
    %v1055 = vsub.f32 %v1043, %v1053
    %v1056 = vsub.f32 %v1044, %v1054
    %v1057 = vmul.f32 %v1055, %v1055
    %v1058 = vmul.f32 %v1056, %v1056
    %v1059 = vsel %vm363, %v1057, 0.0
    %1060 = vadd.xlane.f32.xlu0 %v1059
    %v1061 = vpop.xlane.xlu0 %1060
    %v1062 = vsel %vm363, %v1058, 0.0
    %1063 = vadd.xlane.f32.xlu0 %v1062
    %v1064 = vpop.xlane.xlu0 %1063
    %v1065 = vmul.f32 %v1061, %v370
    %v1066 = vmul.f32 %v1064, %v370
    %v1067 = vadd.f32 %v1065, 1e-12
    %v1068 = vadd.f32 %v1066, 1e-12
    %v1069 = vrsqrt.pop %v1067
    %v1070 = vrsqrt.pop %v1068
    %v1071 = vmul.f32 %v1055, %v1069
    %v1072 = vmul.f32 %v1056, %v1070
    %v1074 = vlaneseq
    %v1075 = vshrl.u32 %v1074, 7
    %v1076 = vsub.s32 0, %v1075
    %v1077 = vrot.slane %v1045, %v1076
    %v1079 = vmul.f32 %v1071, %v1077
    %v1080 = vmul.f32 %v1072, %v1077
    %v1082 = vlaneseq
    %v1083 = vshrl.u32 %v1082, 7
    %v1084 = vsub.s32 0, %v1083
    %v1085 = vrot.slane %v1046, %v1084
    %v1087 = vadd.f32 %v1079, %v1085
    %v1088 = vadd.f32 %v1080, %v1085
    %v1089 = vpack.c.bf16 %v1088, %v1087
    %v1090 = vld [vmem:[#allocation19] sm:$0xf]
    %v1091 = vld [vmem:[#allocation19 + $0x4] sm:$0xf]
    %v1092 = vld [vmem:[#allocation19 + $0x8] sm:$0xf]
    %v1093 = vld [vmem:[#allocation19 + $0xc] sm:$0xf]
    %v1094 = vld [vmem:[#allocation20] sm:$0x1]
    %v1096 = vlaneseq
    %v1097 = vshrl.u32 %v1096, 7
    %v1098 = vsub.s32 0, %v1097
    %v1099 = vrot.slane %v1094, %v1098
    %v1105 = vunpack.c.l.b16 %v1090
    %v1106 = vunpack.c.l.b16 %v1091
    %v1107 = vunpack.c.l.b16 %v1092
    %v1108 = vunpack.c.l.b16 %v1093
    %v1109 = vpack.c.b16 %v1106, %v1105
    %v1110 = vpack.c.b16 %v1108, %v1107
    %v1114 = vsel %vm363, %v1089, 0
    %1116 = vmatprep.subr.bf16.mxu0 0
    %1117 = vmatpush1.bf16.msra.mxu0 %v1109
    %1118 = vmatprep.subr.bf16.mxu0 0
    %1119 = vmatpush1.bf16.msra.mxu0 %v1110
    %1120 = vmatprep.subr.bf16.mxu0 0
    %1121 = vmatpush1.bf16.msra.mxu0 0
    %1122 = vmatprep.subr.bf16.mxu0 0
    %1123 = vmatpush1.bf16.msra.mxu0 0
    %1124 = vmatprep.subr.bf16.mxu0 0
    %1125 = vmatpush1.bf16.msra.mxu0 0
    %1126 = vmatprep.subr.bf16.mxu0 0
    %1127 = vmatpush1.bf16.msra.mxu0 0
    %1128 = vmatprep.subr.bf16.mxu0 0
    %1129 = vmatpush1.bf16.msra.mxu0 0
    %1130 = vmatprep.subr.bf16.mxu0 0
    %1131 = vmatpush1.bf16.msra.mxu0 0
    %1132 = vmatprep.subr.bf16.mxu0 0
    %1133 = vmatpush1.bf16.msra.mxu0 0
    %1134 = vmatprep.subr.bf16.mxu0 0
    %1135 = vmatpush1.bf16.msra.mxu0 0
    %1136 = vmatprep.subr.bf16.mxu0 0
    %1137 = vmatpush1.bf16.msra.mxu0 0
    %1138 = vmatprep.subr.bf16.mxu0 0
    %1139 = vmatpush1.bf16.msra.mxu0 0
    %1140 = vmatprep.subr.bf16.mxu0 0
    %1141 = vmatpush1.bf16.msra.mxu0 0
    %1142 = vmatprep.subr.bf16.mxu0 0
    %1143 = vmatpush1.bf16.msra.mxu0 0
    %1144 = vmatprep.subr.bf16.mxu0 0
    %1145 = vmatpush1.bf16.msra.mxu0 0
    %1146 = vmatprep.subr.bf16.mxu0 0
    %1147 = vmatpush1.bf16.msra.mxu0 0
    %1148 = vmatprep.mubr.bf16.mxu0 0
    %1149 = vmatmul.mubr.bf16.gmra.mrb[0].mxu0 %v1114
    %v1150 = vpop.f32.mrb[0].mxu0
    %v1151 = vadd.f32 %v1099, %v1150
    %v1152 = vpop.f32.mrb[0].mxu0
    %v1153 = vpop.f32.mrb[0].mxu0
    %v1154 = vadd.f32 %v1099, %v1153
    %v1155 = vpop.f32.mrb[0].mxu0
    %1156 = vdwg.mxu0
    %v1157 = vmul.f32 %v1151, 0.5
    %v1158 = vmul.f32 %v1154, 0.5
    %v1159 = vmul.f32 %v1151, 0.044715
    %v1160 = vmul.f32 %v1154, 0.044715
    %v1161 = vmul.f32 %v1159, %v1151
    %v1162 = vmul.f32 %v1160, %v1154
    %v1163 = vmul.f32 %v1161, %v1151
    %v1164 = vmul.f32 %v1162, %v1154
    %v1165 = vadd.f32 %v1151, %v1163
    %v1166 = vadd.f32 %v1154, %v1164
    %v1167 = vmul.f32 %v1165, 0.7978846
    %v1168 = vmul.f32 %v1166, 0.7978846
    %v1169 = vtanh.pop %v1167
    %v1170 = vtanh.pop %v1168
    %v1171 = vadd.f32 %v1169, 1.0
    %v1172 = vadd.f32 %v1170, 1.0
    %v1173 = vmul.f32 %v1157, %v1171
    %v1174 = vmul.f32 %v1158, %v1172
    %v1175 = vpack.c.bf16 %v1174, %v1173
    %v1176 = vld [vmem:[#allocation22] sm:$0xf]
    %v1177 = vld [vmem:[#allocation22 + $0x4] sm:$0xf]
    %v1178 = vld [vmem:[#allocation22 + $0x8] sm:$0xf]
    %v1179 = vld [vmem:[#allocation22 + $0xc] sm:$0xf]
    %v1180 = vld [vmem:[#allocation22 + $0x10] sm:$0xf]
    %v1181 = vld [vmem:[#allocation22 + $0x14] sm:$0xf]
    %v1182 = vld [vmem:[#allocation22 + $0x18] sm:$0xf]
    %v1183 = vld [vmem:[#allocation22 + $0x1c] sm:$0xf]
    %v1184 = vld [vmem:[#allocation23] sm:$0x1]
    %v1186 = vlaneseq
    %v1187 = vshrl.u32 %v1186, 7
    %v1188 = vsub.s32 0, %v1187
    %v1189 = vrot.slane %v1184, %v1188
    %v1199 = vunpack.c.l.b16 %v1176
    %v1200 = vunpack.c.l.b16 %v1177
    %v1201 = vunpack.c.l.b16 %v1178
    %v1202 = vunpack.c.l.b16 %v1179
    %v1203 = vunpack.c.l.b16 %v1180
    %v1204 = vunpack.c.l.b16 %v1181
    %v1205 = vunpack.c.l.b16 %v1182
    %v1206 = vunpack.c.l.b16 %v1183
    %v1207 = vpack.c.b16 %v1200, %v1199
    %v1208 = vpack.c.b16 %v1202, %v1201
    %v1209 = vpack.c.b16 %v1204, %v1203
    %v1210 = vpack.c.b16 %v1206, %v1205
    %vm1215 = vcmask 523264
    %v1217 = vsel %vm1215, %v1175, 0
    %1219 = vmatprep.subr.bf16.mxu0 0
    %1220 = vmatpush1.bf16.msra.mxu0 %v1207
    %1221 = vmatprep.subr.bf16.mxu0 0
    %1222 = vmatpush1.bf16.msra.mxu0 %v1208
    %1223 = vmatprep.subr.bf16.mxu0 0
    %1224 = vmatpush1.bf16.msra.mxu0 %v1209
    %1225 = vmatprep.subr.bf16.mxu0 0
    %1226 = vmatpush1.bf16.msra.mxu0 %v1210
    %1227 = vmatprep.subr.bf16.mxu0 0
    %1228 = vmatpush1.bf16.msra.mxu0 0
    %1229 = vmatprep.subr.bf16.mxu0 0
    %1230 = vmatpush1.bf16.msra.mxu0 0
    %1231 = vmatprep.subr.bf16.mxu0 0
    %1232 = vmatpush1.bf16.msra.mxu0 0
    %1233 = vmatprep.subr.bf16.mxu0 0
    %1234 = vmatpush1.bf16.msra.mxu0 0
    %1235 = vmatprep.subr.bf16.mxu0 0
    %1236 = vmatpush1.bf16.msra.mxu0 0
    %1237 = vmatprep.subr.bf16.mxu0 0
    %1238 = vmatpush1.bf16.msra.mxu0 0
    %1239 = vmatprep.subr.bf16.mxu0 0
    %1240 = vmatpush1.bf16.msra.mxu0 0
    %1241 = vmatprep.subr.bf16.mxu0 0
    %1242 = vmatpush1.bf16.msra.mxu0 0
    %1243 = vmatprep.subr.bf16.mxu0 0
    %1244 = vmatpush1.bf16.msra.mxu0 0
    %1245 = vmatprep.subr.bf16.mxu0 0
    %1246 = vmatpush1.bf16.msra.mxu0 0
    %1247 = vmatprep.subr.bf16.mxu0 0
    %1248 = vmatpush1.bf16.msra.mxu0 0
    %1249 = vmatprep.subr.bf16.mxu0 0
    %1250 = vmatpush1.bf16.msra.mxu0 0
    %1251 = vmatprep.mubr.bf16.mxu0 0
    %1252 = vmatmul.mubr.bf16.gmra.mrb[0].mxu0 %v1217
    %v1253 = vpop.f32.mrb[0].mxu0
    %v1254 = vadd.f32 %v1189, %v1253
    %v1255 = vpop.f32.mrb[0].mxu0
    %v1256 = vpop.f32.mrb[0].mxu0
    %v1257 = vadd.f32 %v1189, %v1256
    %v1258 = vpop.f32.mrb[0].mxu0
    %1259 = vdwg.mxu0
    %v1260 = vadd.f32 %v1087, %v1254
    %v1261 = vadd.f32 %v1088, %v1257
    %v1262 = vld [vmem:[#allocation25] sm:$0x1]
    %v1263 = vld [vmem:[#allocation26] sm:$0x1]
    %v1264 = vsel %vm363, %v1260, 0.0
    %1265 = vadd.xlane.f32.xlu0 %v1264
    %v1266 = vpop.xlane.xlu0 %1265
    %v1267 = vsel %vm363, %v1261, 0.0
    %1268 = vadd.xlane.f32.xlu0 %v1267
    %v1269 = vpop.xlane.xlu0 %1268
    %v1270 = vmul.f32 %v1266, %v370
    %v1271 = vmul.f32 %v1269, %v370
    %v1272 = vsub.f32 %v1260, %v1270
    %v1273 = vsub.f32 %v1261, %v1271
    %v1274 = vmul.f32 %v1272, %v1272
    %v1275 = vmul.f32 %v1273, %v1273
    %v1276 = vsel %vm363, %v1274, 0.0
    %1277 = vadd.xlane.f32.xlu0 %v1276
    %v1278 = vpop.xlane.xlu0 %1277
    %v1279 = vsel %vm363, %v1275, 0.0
    %1280 = vadd.xlane.f32.xlu0 %v1279
    %v1281 = vpop.xlane.xlu0 %1280
    %v1282 = vmul.f32 %v1278, %v370
    %v1283 = vmul.f32 %v1281, %v370
    %v1284 = vadd.f32 %v1282, 1e-12
    %v1285 = vadd.f32 %v1283, 1e-12
    %v1286 = vrsqrt.pop %v1284
    %v1287 = vrsqrt.pop %v1285
    %v1288 = vmul.f32 %v1272, %v1286
    %v1289 = vmul.f32 %v1273, %v1287
    %v1291 = vlaneseq
    %v1292 = vshrl.u32 %v1291, 7
    %v1293 = vsub.s32 0, %v1292
    %v1294 = vrot.slane %v1262, %v1293
    %v1296 = vmul.f32 %v1288, %v1294
    %v1297 = vmul.f32 %v1289, %v1294
    %v1299 = vlaneseq
    %v1300 = vshrl.u32 %v1299, 7
    %v1301 = vsub.s32 0, %v1300
    %v1302 = vrot.slane %v1263, %v1301
    %v1304 = vadd.f32 %v1296, %v1302
    %v1305 = vadd.f32 %v1297, %v1302
    %v1306 = vpack.c.bf16 %v1305, %v1304
    %s1307 = scalar_lea.vmem [#allocation10], 16
    %v1308 = vld [vmem:[%s1307] sm:$0xf]
    %v1309 = vld [vmem:[%s1307 + $0x4] sm:$0xf]
    %v1310 = vld [vmem:[%s1307 + $0x8] sm:$0xf]
    %v1311 = vld [vmem:[%s1307 + $0xc] sm:$0xf]
    %s1312 = scalar_lea.vmem [#allocation11], 1
    %v1313 = vld [vmem:[%s1312] sm:$0x1]
    %v1315 = vlaneseq
    %v1316 = vshrl.u32 %v1315, 7
    %v1317 = vsub.s32 0, %v1316
    %v1318 = vrot.slane %v1313, %v1317
    %v1324 = vunpack.c.l.b16 %v1308
    %v1325 = vunpack.c.l.b16 %v1309
    %v1326 = vunpack.c.l.b16 %v1310
    %v1327 = vunpack.c.l.b16 %v1311
    %v1328 = vpack.c.b16 %v1325, %v1324
    %v1329 = vpack.c.b16 %v1327, %v1326
    %v1333 = vsel %vm363, %v1306, 0
    %1335 = vmatprep.subr.bf16.mxu0 0
    %1336 = vmatpush1.bf16.msra.mxu0 %v1328
    %1337 = vmatprep.subr.bf16.mxu0 0
    %1338 = vmatpush1.bf16.msra.mxu0 %v1329
    %1339 = vmatprep.subr.bf16.mxu0 0
    %1340 = vmatpush1.bf16.msra.mxu0 0
    %1341 = vmatprep.subr.bf16.mxu0 0
    %1342 = vmatpush1.bf16.msra.mxu0 0
    %1343 = vmatprep.subr.bf16.mxu0 0
    %1344 = vmatpush1.bf16.msra.mxu0 0
    %1345 = vmatprep.subr.bf16.mxu0 0
    %1346 = vmatpush1.bf16.msra.mxu0 0
    %1347 = vmatprep.subr.bf16.mxu0 0
    %1348 = vmatpush1.bf16.msra.mxu0 0
    %1349 = vmatprep.subr.bf16.mxu0 0
    %1350 = vmatpush1.bf16.msra.mxu0 0
    %1351 = vmatprep.subr.bf16.mxu0 0
    %1352 = vmatpush1.bf16.msra.mxu0 0
    %1353 = vmatprep.subr.bf16.mxu0 0
    %1354 = vmatpush1.bf16.msra.mxu0 0
    %1355 = vmatprep.subr.bf16.mxu0 0
    %1356 = vmatpush1.bf16.msra.mxu0 0
    %1357 = vmatprep.subr.bf16.mxu0 0
    %1358 = vmatpush1.bf16.msra.mxu0 0
    %1359 = vmatprep.subr.bf16.mxu0 0
    %1360 = vmatpush1.bf16.msra.mxu0 0
    %1361 = vmatprep.subr.bf16.mxu0 0
    %1362 = vmatpush1.bf16.msra.mxu0 0
    %1363 = vmatprep.subr.bf16.mxu0 0
    %1364 = vmatpush1.bf16.msra.mxu0 0
    %1365 = vmatprep.subr.bf16.mxu0 0
    %1366 = vmatpush1.bf16.msra.mxu0 0
    %1367 = vmatprep.mubr.bf16.mxu0 0
    %1368 = vmatmul.mubr.bf16.gmra.mrb[0].mxu0 %v1333
    %v1369 = vpop.f32.mrb[0].mxu0
    %v1370 = vadd.f32 %v1318, %v1369
    %v1371 = vpop.f32.mrb[0].mxu0
    %v1372 = vpop.f32.mrb[0].mxu0
    %v1373 = vadd.f32 %v1318, %v1372
    %v1374 = vpop.f32.mrb[0].mxu0
    %1375 = vdwg.mxu0
    %v1376 = vpack.c.bf16 %v1373, %v1370
    %v1378 = vunpack.c.l.b16 %v1376
    %v1379 = vunpack.c.h.b16 %v1376
    %v1380 = vpack.c.b16 %v1378, %v1378
    %v1381 = vpack.c.b16 %v1379, %v1379
    %1382 = vrot.lane.b32.xlu0 %v1380, 112
    %v1383 = vpop.permute.xlu0 %1382
    %1384 = vrot.lane.b32.xlu0 %v1381, 112
    %v1385 = vpop.permute.xlu0 %1384
    %1386 = vrot.lane.b32.xlu0 %v1380, 96
    %v1387 = vpop.permute.xlu0 %1386
    %v1389 = vsel %vm528, %v1380, 0
    %v1392 = vsel %vm528, %v1387, 0
    %1394 = vmatprep.subr.bf16.mxu0 0
    %1395 = vmatpush1.bf16.xpose.msra.mxu0 %v1392
    %1396 = vmatprep.subr.bf16.mxu0 0
    %1397 = vmatpush1.bf16.xpose.msra.mxu0 0
    %1398 = vmatprep.subr.bf16.mxu0 0
    %1399 = vmatpush1.bf16.xpose.msra.mxu0 0
    %1400 = vmatprep.subr.bf16.mxu0 0
    %1401 = vmatpush1.bf16.xpose.msra.mxu0 0
    %1402 = vmatprep.subr.bf16.mxu0 0
    %1403 = vmatpush1.bf16.xpose.msra.mxu0 0
    %1404 = vmatprep.subr.bf16.mxu0 0
    %1405 = vmatpush1.bf16.xpose.msra.mxu0 0
    %1406 = vmatprep.subr.bf16.mxu0 0
    %1407 = vmatpush1.bf16.xpose.msra.mxu0 0
    %1408 = vmatprep.subr.bf16.mxu0 0
    %1409 = vmatpush1.bf16.xpose.msra.mxu0 0
    %1410 = vmatprep.subr.bf16.mxu0 0
    %1411 = vmatpush1.bf16.xpose.msra.mxu0 0
    %1412 = vmatprep.subr.bf16.mxu0 0
    %1413 = vmatpush1.bf16.xpose.msra.mxu0 0
    %1414 = vmatprep.subr.bf16.mxu0 0
    %1415 = vmatpush1.bf16.xpose.msra.mxu0 0
    %1416 = vmatprep.subr.bf16.mxu0 0
    %1417 = vmatpush1.bf16.xpose.msra.mxu0 0
    %1418 = vmatprep.subr.bf16.mxu0 0
    %1419 = vmatpush1.bf16.xpose.msra.mxu0 0
    %1420 = vmatprep.subr.bf16.mxu0 0
    %1421 = vmatpush1.bf16.xpose.msra.mxu0 0
    %1422 = vmatprep.subr.bf16.mxu0 0
    %1423 = vmatpush1.bf16.xpose.msra.mxu0 0
    %1424 = vmatprep.subr.bf16.mxu0 0
    %1425 = vmatpush1.bf16.xpose.msra.mxu0 0
    %1426 = vmatprep.mubr.bf16.mxu0 0
    %1427 = vmatmul.mubr.bf16.gmra.mrb[0].mxu0 %v1389
    %v1428 = vpop.f32.mrb[0].mxu0
    %v1429 = vadd.f32 %v519, %v1428
    %v1430 = vpop.f32.mrb[0].mxu0
    %v1431 = vpop.f32.mrb[0].mxu0
    %v1432 = vpop.f32.mrb[0].mxu0
    %1433 = vdwg.mxu0
    %v1434 = vunpack.c.l.b16 %v1383
    %v1435 = vpack.c.b16 %v1434, %v1434
    %1436 = vrot.lane.b32.xlu0 %v1435, 96
    %v1437 = vpop.permute.xlu0 %1436
    %v1439 = vsel %vm528, %v1383, 0
    %v1442 = vsel %vm528, %v1437, 0
    %1444 = vmatprep.subr.bf16.mxu0 0
    %1445 = vmatpush1.bf16.xpose.msra.mxu0 %v1442
    %1446 = vmatprep.subr.bf16.mxu0 0
    %1447 = vmatpush1.bf16.xpose.msra.mxu0 0
    %1448 = vmatprep.subr.bf16.mxu0 0
    %1449 = vmatpush1.bf16.xpose.msra.mxu0 0
    %1450 = vmatprep.subr.bf16.mxu0 0
    %1451 = vmatpush1.bf16.xpose.msra.mxu0 0
    %1452 = vmatprep.subr.bf16.mxu0 0
    %1453 = vmatpush1.bf16.xpose.msra.mxu0 0
    %1454 = vmatprep.subr.bf16.mxu0 0
    %1455 = vmatpush1.bf16.xpose.msra.mxu0 0
    %1456 = vmatprep.subr.bf16.mxu0 0
    %1457 = vmatpush1.bf16.xpose.msra.mxu0 0
    %1458 = vmatprep.subr.bf16.mxu0 0
    %1459 = vmatpush1.bf16.xpose.msra.mxu0 0
    %1460 = vmatprep.subr.bf16.mxu0 0
    %1461 = vmatpush1.bf16.xpose.msra.mxu0 0
    %1462 = vmatprep.subr.bf16.mxu0 0
    %1463 = vmatpush1.bf16.xpose.msra.mxu0 0
    %1464 = vmatprep.subr.bf16.mxu0 0
    %1465 = vmatpush1.bf16.xpose.msra.mxu0 0
    %1466 = vmatprep.subr.bf16.mxu0 0
    %1467 = vmatpush1.bf16.xpose.msra.mxu0 0
    %1468 = vmatprep.subr.bf16.mxu0 0
    %1469 = vmatpush1.bf16.xpose.msra.mxu0 0
    %1470 = vmatprep.subr.bf16.mxu0 0
    %1471 = vmatpush1.bf16.xpose.msra.mxu0 0
    %1472 = vmatprep.subr.bf16.mxu0 0
    %1473 = vmatpush1.bf16.xpose.msra.mxu0 0
    %1474 = vmatprep.subr.bf16.mxu0 0
    %1475 = vmatpush1.bf16.xpose.msra.mxu0 0
    %1476 = vmatprep.mubr.bf16.mxu0 0
    %1477 = vmatmul.mubr.bf16.gmra.mrb[0].mxu0 %v1439
    %v1478 = vpop.f32.mrb[0].mxu0
    %v1479 = vadd.f32 %v519, %v1478
    %v1480 = vpop.f32.mrb[0].mxu0
    %v1481 = vpop.f32.mrb[0].mxu0
    %v1482 = vpop.f32.mrb[0].mxu0
    %1483 = vdwg.mxu0
    %1484 = vrot.lane.b32.xlu0 %v1381, 96
    %v1485 = vpop.permute.xlu0 %1484
    %v1487 = vsel %vm528, %v1381, 0
    %v1490 = vsel %vm528, %v1485, 0
    %1492 = vmatprep.subr.bf16.mxu0 0
    %1493 = vmatpush1.bf16.xpose.msra.mxu0 %v1490
    %1494 = vmatprep.subr.bf16.mxu0 0
    %1495 = vmatpush1.bf16.xpose.msra.mxu0 0
    %1496 = vmatprep.subr.bf16.mxu0 0
    %1497 = vmatpush1.bf16.xpose.msra.mxu0 0
    %1498 = vmatprep.subr.bf16.mxu0 0
    %1499 = vmatpush1.bf16.xpose.msra.mxu0 0
    %1500 = vmatprep.subr.bf16.mxu0 0
    %1501 = vmatpush1.bf16.xpose.msra.mxu0 0
    %1502 = vmatprep.subr.bf16.mxu0 0
    %1503 = vmatpush1.bf16.xpose.msra.mxu0 0
    %1504 = vmatprep.subr.bf16.mxu0 0
    %1505 = vmatpush1.bf16.xpose.msra.mxu0 0
    %1506 = vmatprep.subr.bf16.mxu0 0
    %1507 = vmatpush1.bf16.xpose.msra.mxu0 0
    %1508 = vmatprep.subr.bf16.mxu0 0
    %1509 = vmatpush1.bf16.xpose.msra.mxu0 0
    %1510 = vmatprep.subr.bf16.mxu0 0
    %1511 = vmatpush1.bf16.xpose.msra.mxu0 0
    %1512 = vmatprep.subr.bf16.mxu0 0
    %1513 = vmatpush1.bf16.xpose.msra.mxu0 0
    %1514 = vmatprep.subr.bf16.mxu0 0
    %1515 = vmatpush1.bf16.xpose.msra.mxu0 0
    %1516 = vmatprep.subr.bf16.mxu0 0
    %1517 = vmatpush1.bf16.xpose.msra.mxu0 0
    %1518 = vmatprep.subr.bf16.mxu0 0
    %1519 = vmatpush1.bf16.xpose.msra.mxu0 0
    %1520 = vmatprep.subr.bf16.mxu0 0
    %1521 = vmatpush1.bf16.xpose.msra.mxu0 0
    %1522 = vmatprep.subr.bf16.mxu0 0
    %1523 = vmatpush1.bf16.xpose.msra.mxu0 0
    %1524 = vmatprep.mubr.bf16.mxu0 0
    %1525 = vmatmul.mubr.bf16.gmra.mrb[0].mxu0 %v1487
    %v1526 = vpop.f32.mrb[0].mxu0
    %v1527 = vadd.f32 %v523, %v1526
    %v1528 = vpop.f32.mrb[0].mxu0
    %v1529 = vpop.f32.mrb[0].mxu0
    %v1530 = vpop.f32.mrb[0].mxu0
    %1531 = vdwg.mxu0
    %v1532 = vunpack.c.l.b16 %v1385
    %v1533 = vpack.c.b16 %v1532, %v1532
    %1534 = vrot.lane.b32.xlu0 %v1533, 96
    %v1535 = vpop.permute.xlu0 %1534
    %v1537 = vsel %vm528, %v1385, 0
    %v1540 = vsel %vm528, %v1535, 0
    %1542 = vmatprep.subr.bf16.mxu0 0
    %1543 = vmatpush1.bf16.xpose.msra.mxu0 %v1540
    %1544 = vmatprep.subr.bf16.mxu0 0
    %1545 = vmatpush1.bf16.xpose.msra.mxu0 0
    %1546 = vmatprep.subr.bf16.mxu0 0
    %1547 = vmatpush1.bf16.xpose.msra.mxu0 0
    %1548 = vmatprep.subr.bf16.mxu0 0
    %1549 = vmatpush1.bf16.xpose.msra.mxu0 0
    %1550 = vmatprep.subr.bf16.mxu0 0
    %1551 = vmatpush1.bf16.xpose.msra.mxu0 0
    %1552 = vmatprep.subr.bf16.mxu0 0
    %1553 = vmatpush1.bf16.xpose.msra.mxu0 0
    %1554 = vmatprep.subr.bf16.mxu0 0
    %1555 = vmatpush1.bf16.xpose.msra.mxu0 0
    %1556 = vmatprep.subr.bf16.mxu0 0
    %1557 = vmatpush1.bf16.xpose.msra.mxu0 0
    %1558 = vmatprep.subr.bf16.mxu0 0
    %1559 = vmatpush1.bf16.xpose.msra.mxu0 0
    %1560 = vmatprep.subr.bf16.mxu0 0
    %1561 = vmatpush1.bf16.xpose.msra.mxu0 0
    %1562 = vmatprep.subr.bf16.mxu0 0
    %1563 = vmatpush1.bf16.xpose.msra.mxu0 0
    %1564 = vmatprep.subr.bf16.mxu0 0
    %1565 = vmatpush1.bf16.xpose.msra.mxu0 0
    %1566 = vmatprep.subr.bf16.mxu0 0
    %1567 = vmatpush1.bf16.xpose.msra.mxu0 0
    %1568 = vmatprep.subr.bf16.mxu0 0
    %1569 = vmatpush1.bf16.xpose.msra.mxu0 0
    %1570 = vmatprep.subr.bf16.mxu0 0
    %1571 = vmatpush1.bf16.xpose.msra.mxu0 0
    %1572 = vmatprep.subr.bf16.mxu0 0
    %1573 = vmatpush1.bf16.xpose.msra.mxu0 0
    %1574 = vmatprep.mubr.bf16.mxu0 0
    %1575 = vmatmul.mubr.bf16.gmra.mrb[0].mxu0 %v1537
    %v1576 = vpop.f32.mrb[0].mxu0
    %v1577 = vadd.f32 %v523, %v1576
    %v1578 = vpop.f32.mrb[0].mxu0
    %v1579 = vpop.f32.mrb[0].mxu0
    %v1580 = vpop.f32.mrb[0].mxu0
    %1581 = vdwg.mxu0
    %v1582 = vsel %vm723, %v1429, -inf
    %1583 = vmax.xlane.f32.xlu0 %v1582
    %v1584 = vpop.xlane.xlu0 %1583
    %v1585 = vsel %vm723, %v1479, -inf
    %1586 = vmax.xlane.f32.xlu0 %v1585
    %v1587 = vpop.xlane.xlu0 %1586
    %v1588 = vsel %vm723, %v1527, -inf
    %1589 = vmax.xlane.f32.xlu0 %v1588
    %v1590 = vpop.xlane.xlu0 %1589
    %v1591 = vsel %vm723, %v1577, -inf
    %1592 = vmax.xlane.f32.xlu0 %v1591
    %v1593 = vpop.xlane.xlu0 %1592
    %v1594 = vsub.f32 %v1429, %v1584
    %v1595 = vsub.f32 %v1479, %v1587
    %v1596 = vsub.f32 %v1527, %v1590
    %v1597 = vsub.f32 %v1577, %v1593
    %v1598 = vmul.f32 %v1594, 1.442695
    %v1599 = vpow.pop %v1598
    %v1600 = vmul.f32 %v1595, 1.442695
    %v1601 = vpow.pop %v1600
    %v1602 = vmul.f32 %v1596, 1.442695
    %v1603 = vpow.pop %v1602
    %v1604 = vmul.f32 %v1597, 1.442695
    %v1605 = vpow.pop %v1604
    %v1606 = vsel %vm723, %v1599, 0.0
    %1607 = vadd.xlane.f32.xlu0 %v1606
    %v1608 = vpop.xlane.xlu0 %1607
    %v1609 = vsel %vm723, %v1601, 0.0
    %1610 = vadd.xlane.f32.xlu0 %v1609
    %v1611 = vpop.xlane.xlu0 %1610
    %v1612 = vsel %vm723, %v1603, 0.0
    %1613 = vadd.xlane.f32.xlu0 %v1612
    %v1614 = vpop.xlane.xlu0 %1613
    %v1615 = vsel %vm723, %v1605, 0.0
    %1616 = vadd.xlane.f32.xlu0 %v1615
    %v1617 = vpop.xlane.xlu0 %1616
    %v1618 = vrcp.pop %v1608
    %v1619 = vrcp.pop %v1611
    %v1620 = vrcp.pop %v1614
    %v1621 = vrcp.pop %v1617
    %v1622 = vmul.f32 %v1599, %v1618
    %v1623 = vmul.f32 %v1601, %v1619
    %v1624 = vmul.f32 %v1603, %v1620
    %v1625 = vmul.f32 %v1605, %v1621
    %v1626 = vpack.c.bf16 %v1622, %v1622
    %v1627 = vpack.c.bf16 %v1623, %v1623
    %v1628 = vpack.c.bf16 %v1624, %v1624
    %v1629 = vpack.c.bf16 %v1625, %v1625
    %1630 = vrot.lane.b32.xlu0 %v1380, 64
    %v1631 = vpop.permute.xlu0 %1630
    %v1633 = vsel %vm723, %v1626, 0
    %v1636 = vsel %vm777, %v1631, 0
    %1638 = vmatprep.subr.bf16.mxu0 0
    %1639 = vmatpush1.bf16.msra.mxu0 %v1636
    %1640 = vmatprep.subr.bf16.mxu0 0
    %1641 = vmatpush1.bf16.msra.mxu0 0
    %1642 = vmatprep.subr.bf16.mxu0 0
    %1643 = vmatpush1.bf16.msra.mxu0 0
    %1644 = vmatprep.subr.bf16.mxu0 0
    %1645 = vmatpush1.bf16.msra.mxu0 0
    %1646 = vmatprep.subr.bf16.mxu0 0
    %1647 = vmatpush1.bf16.msra.mxu0 0
    %1648 = vmatprep.subr.bf16.mxu0 0
    %1649 = vmatpush1.bf16.msra.mxu0 0
    %1650 = vmatprep.subr.bf16.mxu0 0
    %1651 = vmatpush1.bf16.msra.mxu0 0
    %1652 = vmatprep.subr.bf16.mxu0 0
    %1653 = vmatpush1.bf16.msra.mxu0 0
    %1654 = vmatprep.subr.bf16.mxu0 0
    %1655 = vmatpush1.bf16.msra.mxu0 0
    %1656 = vmatprep.subr.bf16.mxu0 0
    %1657 = vmatpush1.bf16.msra.mxu0 0
    %1658 = vmatprep.subr.bf16.mxu0 0
    %1659 = vmatpush1.bf16.msra.mxu0 0
    %1660 = vmatprep.subr.bf16.mxu0 0
    %1661 = vmatpush1.bf16.msra.mxu0 0
    %1662 = vmatprep.subr.bf16.mxu0 0
    %1663 = vmatpush1.bf16.msra.mxu0 0
    %1664 = vmatprep.subr.bf16.mxu0 0
    %1665 = vmatpush1.bf16.msra.mxu0 0
    %1666 = vmatprep.subr.bf16.mxu0 0
    %1667 = vmatpush1.bf16.msra.mxu0 0
    %1668 = vmatprep.subr.bf16.mxu0 0
    %1669 = vmatpush1.bf16.msra.mxu0 0
    %1670 = vmatprep.mubr.bf16.mxu0 0
    %1671 = vmatmul.mubr.bf16.gmra.mrb[0].mxu0 %v1633
    %v1672 = vpop.f32.mrb[0].mxu0
    %v1673 = vadd.f32 0.0, %v1672
    %v1674 = vpop.f32.mrb[0].mxu0
    %v1675 = vpop.f32.mrb[0].mxu0
    %v1676 = vpop.f32.mrb[0].mxu0
    %1677 = vdwg.mxu0
    %1678 = vrot.lane.b32.xlu0 %v1435, 64
    %v1679 = vpop.permute.xlu0 %1678
    %v1681 = vsel %vm723, %v1627, 0
    %v1684 = vsel %vm777, %v1679, 0
    %1686 = vmatprep.subr.bf16.mxu0 0
    %1687 = vmatpush1.bf16.msra.mxu0 %v1684
    %1688 = vmatprep.subr.bf16.mxu0 0
    %1689 = vmatpush1.bf16.msra.mxu0 0
    %1690 = vmatprep.subr.bf16.mxu0 0
    %1691 = vmatpush1.bf16.msra.mxu0 0
    %1692 = vmatprep.subr.bf16.mxu0 0
    %1693 = vmatpush1.bf16.msra.mxu0 0
    %1694 = vmatprep.subr.bf16.mxu0 0
    %1695 = vmatpush1.bf16.msra.mxu0 0
    %1696 = vmatprep.subr.bf16.mxu0 0
    %1697 = vmatpush1.bf16.msra.mxu0 0
    %1698 = vmatprep.subr.bf16.mxu0 0
    %1699 = vmatpush1.bf16.msra.mxu0 0
    %1700 = vmatprep.subr.bf16.mxu0 0
    %1701 = vmatpush1.bf16.msra.mxu0 0
    %1702 = vmatprep.subr.bf16.mxu0 0
    %1703 = vmatpush1.bf16.msra.mxu0 0
    %1704 = vmatprep.subr.bf16.mxu0 0
    %1705 = vmatpush1.bf16.msra.mxu0 0
    %1706 = vmatprep.subr.bf16.mxu0 0
    %1707 = vmatpush1.bf16.msra.mxu0 0
    %1708 = vmatprep.subr.bf16.mxu0 0
    %1709 = vmatpush1.bf16.msra.mxu0 0
    %1710 = vmatprep.subr.bf16.mxu0 0
    %1711 = vmatpush1.bf16.msra.mxu0 0
    %1712 = vmatprep.subr.bf16.mxu0 0
    %1713 = vmatpush1.bf16.msra.mxu0 0
    %1714 = vmatprep.subr.bf16.mxu0 0
    %1715 = vmatpush1.bf16.msra.mxu0 0
    %1716 = vmatprep.subr.bf16.mxu0 0
    %1717 = vmatpush1.bf16.msra.mxu0 0
    %1718 = vmatprep.mubr.bf16.mxu0 0
    %1719 = vmatmul.mubr.bf16.gmra.mrb[0].mxu0 %v1681
    %v1720 = vpop.f32.mrb[0].mxu0
    %v1721 = vadd.f32 0.0, %v1720
    %v1722 = vpop.f32.mrb[0].mxu0
    %v1723 = vpop.f32.mrb[0].mxu0
    %v1724 = vpop.f32.mrb[0].mxu0
    %1725 = vdwg.mxu0
    %1726 = vrot.lane.b32.xlu0 %v1381, 64
    %v1727 = vpop.permute.xlu0 %1726
    %v1729 = vsel %vm723, %v1628, 0
    %v1732 = vsel %vm777, %v1727, 0
    %1734 = vmatprep.subr.bf16.mxu0 0
    %1735 = vmatpush1.bf16.msra.mxu0 %v1732
    %1736 = vmatprep.subr.bf16.mxu0 0
    %1737 = vmatpush1.bf16.msra.mxu0 0
    %1738 = vmatprep.subr.bf16.mxu0 0
    %1739 = vmatpush1.bf16.msra.mxu0 0
    %1740 = vmatprep.subr.bf16.mxu0 0
    %1741 = vmatpush1.bf16.msra.mxu0 0
    %1742 = vmatprep.subr.bf16.mxu0 0
    %1743 = vmatpush1.bf16.msra.mxu0 0
    %1744 = vmatprep.subr.bf16.mxu0 0
    %1745 = vmatpush1.bf16.msra.mxu0 0
    %1746 = vmatprep.subr.bf16.mxu0 0
    %1747 = vmatpush1.bf16.msra.mxu0 0
    %1748 = vmatprep.subr.bf16.mxu0 0
    %1749 = vmatpush1.bf16.msra.mxu0 0
    %1750 = vmatprep.subr.bf16.mxu0 0
    %1751 = vmatpush1.bf16.msra.mxu0 0
    %1752 = vmatprep.subr.bf16.mxu0 0
    %1753 = vmatpush1.bf16.msra.mxu0 0
    %1754 = vmatprep.subr.bf16.mxu0 0
    %1755 = vmatpush1.bf16.msra.mxu0 0
    %1756 = vmatprep.subr.bf16.mxu0 0
    %1757 = vmatpush1.bf16.msra.mxu0 0
    %1758 = vmatprep.subr.bf16.mxu0 0
    %1759 = vmatpush1.bf16.msra.mxu0 0
    %1760 = vmatprep.subr.bf16.mxu0 0
    %1761 = vmatpush1.bf16.msra.mxu0 0
    %1762 = vmatprep.subr.bf16.mxu0 0
    %1763 = vmatpush1.bf16.msra.mxu0 0
    %1764 = vmatprep.subr.bf16.mxu0 0
    %1765 = vmatpush1.bf16.msra.mxu0 0
    %1766 = vmatprep.mubr.bf16.mxu0 0
    %1767 = vmatmul.mubr.bf16.gmra.mrb[0].mxu0 %v1729
    %v1768 = vpop.f32.mrb[0].mxu0
    %v1769 = vadd.f32 0.0, %v1768
    %v1770 = vpop.f32.mrb[0].mxu0
    %v1771 = vpop.f32.mrb[0].mxu0
    %v1772 = vpop.f32.mrb[0].mxu0
    %1773 = vdwg.mxu0
    %1774 = vrot.lane.b32.xlu0 %v1533, 64
    %v1775 = vpop.permute.xlu0 %1774
    %v1777 = vsel %vm723, %v1629, 0
    %v1780 = vsel %vm777, %v1775, 0
    %1782 = vmatprep.subr.bf16.mxu0 0
    %1783 = vmatpush1.bf16.msra.mxu0 %v1780
    %1784 = vmatprep.subr.bf16.mxu0 0
    %1785 = vmatpush1.bf16.msra.mxu0 0
    %1786 = vmatprep.subr.bf16.mxu0 0
    %1787 = vmatpush1.bf16.msra.mxu0 0
    %1788 = vmatprep.subr.bf16.mxu0 0
    %1789 = vmatpush1.bf16.msra.mxu0 0
    %1790 = vmatprep.subr.bf16.mxu0 0
    %1791 = vmatpush1.bf16.msra.mxu0 0
    %1792 = vmatprep.subr.bf16.mxu0 0
    %1793 = vmatpush1.bf16.msra.mxu0 0
    %1794 = vmatprep.subr.bf16.mxu0 0
    %1795 = vmatpush1.bf16.msra.mxu0 0
    %1796 = vmatprep.subr.bf16.mxu0 0
    %1797 = vmatpush1.bf16.msra.mxu0 0
    %1798 = vmatprep.subr.bf16.mxu0 0
    %1799 = vmatpush1.bf16.msra.mxu0 0
    %1800 = vmatprep.subr.bf16.mxu0 0
    %1801 = vmatpush1.bf16.msra.mxu0 0
    %1802 = vmatprep.subr.bf16.mxu0 0
    %1803 = vmatpush1.bf16.msra.mxu0 0
    %1804 = vmatprep.subr.bf16.mxu0 0
    %1805 = vmatpush1.bf16.msra.mxu0 0
    %1806 = vmatprep.subr.bf16.mxu0 0
    %1807 = vmatpush1.bf16.msra.mxu0 0
    %1808 = vmatprep.subr.bf16.mxu0 0
    %1809 = vmatpush1.bf16.msra.mxu0 0
    %1810 = vmatprep.subr.bf16.mxu0 0
    %1811 = vmatpush1.bf16.msra.mxu0 0
    %1812 = vmatprep.subr.bf16.mxu0 0
    %1813 = vmatpush1.bf16.msra.mxu0 0
    %1814 = vmatprep.mubr.bf16.mxu0 0
    %1815 = vmatmul.mubr.bf16.gmra.mrb[0].mxu0 %v1777
    %v1816 = vpop.f32.mrb[0].mxu0
    %v1817 = vadd.f32 0.0, %v1816
    %v1818 = vpop.f32.mrb[0].mxu0
    %v1819 = vpop.f32.mrb[0].mxu0
    %v1820 = vpop.f32.mrb[0].mxu0
    %1821 = vdwg.mxu0
    %1824 = vrot.lane.b32.xlu0 %v1721, 16
    %v1825 = vpop.permute.xlu0 %1824
    %1826 = vrot.lane.b32.xlu0 %v1817, 16
    %v1827 = vpop.permute.xlu0 %1826
    %v1830 = vsel %vm528, %v1673, %v1825
    %v1831 = vsel %vm528, %v1769, %v1827
    %v1832 = vpack.c.bf16 %v1831, %v1830
    %s1833 = scalar_lea.vmem [#allocation13], 16
    %v1834 = vld [vmem:[%s1833] sm:$0xf]
    %v1835 = vld [vmem:[%s1833 + $0x4] sm:$0xf]
    %v1836 = vld [vmem:[%s1833 + $0x8] sm:$0xf]
    %v1837 = vld [vmem:[%s1833 + $0xc] sm:$0xf]
    %s1838 = scalar_lea.vmem [#allocation14], 1
    %v1839 = vld [vmem:[%s1838] sm:$0x1]
    %v1841 = vlaneseq
    %v1842 = vshrl.u32 %v1841, 7
    %v1843 = vsub.s32 0, %v1842
    %v1844 = vrot.slane %v1839, %v1843
    %v1850 = vunpack.c.l.b16 %v1834
    %v1851 = vunpack.c.l.b16 %v1835
    %v1852 = vunpack.c.l.b16 %v1836
    %v1853 = vunpack.c.l.b16 %v1837
    %v1854 = vpack.c.b16 %v1851, %v1850
    %v1855 = vpack.c.b16 %v1853, %v1852
    %v1859 = vsel %vm363, %v1832, 0
    %1861 = vmatprep.subr.bf16.mxu0 0
    %1862 = vmatpush1.bf16.msra.mxu0 %v1854
    %1863 = vmatprep.subr.bf16.mxu0 0
    %1864 = vmatpush1.bf16.msra.mxu0 %v1855
    %1865 = vmatprep.subr.bf16.mxu0 0
    %1866 = vmatpush1.bf16.msra.mxu0 0
    %1867 = vmatprep.subr.bf16.mxu0 0
    %1868 = vmatpush1.bf16.msra.mxu0 0
    %1869 = vmatprep.subr.bf16.mxu0 0
    %1870 = vmatpush1.bf16.msra.mxu0 0
    %1871 = vmatprep.subr.bf16.mxu0 0
    %1872 = vmatpush1.bf16.msra.mxu0 0
    %1873 = vmatprep.subr.bf16.mxu0 0
    %1874 = vmatpush1.bf16.msra.mxu0 0
    %1875 = vmatprep.subr.bf16.mxu0 0
    %1876 = vmatpush1.bf16.msra.mxu0 0
    %1877 = vmatprep.subr.bf16.mxu0 0
    %1878 = vmatpush1.bf16.msra.mxu0 0
    %1879 = vmatprep.subr.bf16.mxu0 0
    %1880 = vmatpush1.bf16.msra.mxu0 0
    %1881 = vmatprep.subr.bf16.mxu0 0
    %1882 = vmatpush1.bf16.msra.mxu0 0
    %1883 = vmatprep.subr.bf16.mxu0 0
    %1884 = vmatpush1.bf16.msra.mxu0 0
    %1885 = vmatprep.subr.bf16.mxu0 0
    %1886 = vmatpush1.bf16.msra.mxu0 0
    %1887 = vmatprep.subr.bf16.mxu0 0
    %1888 = vmatpush1.bf16.msra.mxu0 0
    %1889 = vmatprep.subr.bf16.mxu0 0
    %1890 = vmatpush1.bf16.msra.mxu0 0
    %1891 = vmatprep.subr.bf16.mxu0 0
    %1892 = vmatpush1.bf16.msra.mxu0 0
    %1893 = vmatprep.mubr.bf16.mxu0 0
    %1894 = vmatmul.mubr.bf16.gmra.mrb[0].mxu0 %v1859
    %v1895 = vpop.f32.mrb[0].mxu0
    %v1896 = vadd.f32 %v1844, %v1895
    %v1897 = vpop.f32.mrb[0].mxu0
    %v1898 = vpop.f32.mrb[0].mxu0
    %v1899 = vadd.f32 %v1844, %v1898
    %v1900 = vpop.f32.mrb[0].mxu0
    %1901 = vdwg.mxu0
    %v1902 = vadd.f32 %v1304, %v1896
    %v1903 = vadd.f32 %v1305, %v1899
    %s1904 = scalar_lea.vmem [#allocation16], 1
    %v1905 = vld [vmem:[%s1904] sm:$0x1]
    %s1906 = scalar_lea.vmem [#allocation17], 1
    %v1907 = vld [vmem:[%s1906] sm:$0x1]
    %v1908 = vsel %vm363, %v1902, 0.0
    %1909 = vadd.xlane.f32.xlu0 %v1908
    %v1910 = vpop.xlane.xlu0 %1909
    %v1911 = vsel %vm363, %v1903, 0.0
    %1912 = vadd.xlane.f32.xlu0 %v1911
    %v1913 = vpop.xlane.xlu0 %1912
    %v1914 = vmul.f32 %v1910, %v370
    %v1915 = vmul.f32 %v1913, %v370
    %v1916 = vsub.f32 %v1902, %v1914
    %v1917 = vsub.f32 %v1903, %v1915
    %v1918 = vmul.f32 %v1916, %v1916
    %v1919 = vmul.f32 %v1917, %v1917
    %v1920 = vsel %vm363, %v1918, 0.0
    %1921 = vadd.xlane.f32.xlu0 %v1920
    %v1922 = vpop.xlane.xlu0 %1921
    %v1923 = vsel %vm363, %v1919, 0.0
    %1924 = vadd.xlane.f32.xlu0 %v1923
    %v1925 = vpop.xlane.xlu0 %1924
    %v1926 = vmul.f32 %v1922, %v370
    %v1927 = vmul.f32 %v1925, %v370
    %v1928 = vadd.f32 %v1926, 1e-12
    %v1929 = vadd.f32 %v1927, 1e-12
    %v1930 = vrsqrt.pop %v1928
    %v1931 = vrsqrt.pop %v1929
    %v1932 = vmul.f32 %v1916, %v1930
    %v1933 = vmul.f32 %v1917, %v1931
    %v1935 = vlaneseq
    %v1936 = vshrl.u32 %v1935, 7
    %v1937 = vsub.s32 0, %v1936
    %v1938 = vrot.slane %v1905, %v1937
    %v1940 = vmul.f32 %v1932, %v1938
    %v1941 = vmul.f32 %v1933, %v1938
    %v1943 = vlaneseq
    %v1944 = vshrl.u32 %v1943, 7
    %v1945 = vsub.s32 0, %v1944
    %v1946 = vrot.slane %v1907, %v1945
    %v1948 = vadd.f32 %v1940, %v1946
    %v1949 = vadd.f32 %v1941, %v1946
    %v1950 = vpack.c.bf16 %v1949, %v1948
    %s1951 = scalar_lea.vmem [#allocation19], 16
    %v1952 = vld [vmem:[%s1951] sm:$0xf]
    %v1953 = vld [vmem:[%s1951 + $0x4] sm:$0xf]
    %v1954 = vld [vmem:[%s1951 + $0x8] sm:$0xf]
    %v1955 = vld [vmem:[%s1951 + $0xc] sm:$0xf]
    %s1956 = scalar_lea.vmem [#allocation20], 1
    %v1957 = vld [vmem:[%s1956] sm:$0x1]
    %v1959 = vlaneseq
    %v1960 = vshrl.u32 %v1959, 7
    %v1961 = vsub.s32 0, %v1960
    %v1962 = vrot.slane %v1957, %v1961
    %v1968 = vunpack.c.l.b16 %v1952
    %v1969 = vunpack.c.l.b16 %v1953
    %v1970 = vunpack.c.l.b16 %v1954
    %v1971 = vunpack.c.l.b16 %v1955
    %v1972 = vpack.c.b16 %v1969, %v1968
    %v1973 = vpack.c.b16 %v1971, %v1970
    %v1977 = vsel %vm363, %v1950, 0
    %1979 = vmatprep.subr.bf16.mxu0 0
    %1980 = vmatpush1.bf16.msra.mxu0 %v1972
    %1981 = vmatprep.subr.bf16.mxu0 0
    %1982 = vmatpush1.bf16.msra.mxu0 %v1973
    %1983 = vmatprep.subr.bf16.mxu0 0
    %1984 = vmatpush1.bf16.msra.mxu0 0
    %1985 = vmatprep.subr.bf16.mxu0 0
    %1986 = vmatpush1.bf16.msra.mxu0 0
    %1987 = vmatprep.subr.bf16.mxu0 0
    %1988 = vmatpush1.bf16.msra.mxu0 0
    %1989 = vmatprep.subr.bf16.mxu0 0
    %1990 = vmatpush1.bf16.msra.mxu0 0
    %1991 = vmatprep.subr.bf16.mxu0 0
    %1992 = vmatpush1.bf16.msra.mxu0 0
    %1993 = vmatprep.subr.bf16.mxu0 0
    %1994 = vmatpush1.bf16.msra.mxu0 0
    %1995 = vmatprep.subr.bf16.mxu0 0
    %1996 = vmatpush1.bf16.msra.mxu0 0
    %1997 = vmatprep.subr.bf16.mxu0 0
    %1998 = vmatpush1.bf16.msra.mxu0 0
    %1999 = vmatprep.subr.bf16.mxu0 0
    %2000 = vmatpush1.bf16.msra.mxu0 0
    %2001 = vmatprep.subr.bf16.mxu0 0
    %2002 = vmatpush1.bf16.msra.mxu0 0
    %2003 = vmatprep.subr.bf16.mxu0 0
    %2004 = vmatpush1.bf16.msra.mxu0 0
    %2005 = vmatprep.subr.bf16.mxu0 0
    %2006 = vmatpush1.bf16.msra.mxu0 0
    %2007 = vmatprep.subr.bf16.mxu0 0
    %2008 = vmatpush1.bf16.msra.mxu0 0
    %2009 = vmatprep.subr.bf16.mxu0 0
    %2010 = vmatpush1.bf16.msra.mxu0 0
    %2011 = vmatprep.mubr.bf16.mxu0 0
    %2012 = vmatmul.mubr.bf16.gmra.mrb[0].mxu0 %v1977
    %v2013 = vpop.f32.mrb[0].mxu0
    %v2014 = vadd.f32 %v1962, %v2013
    %v2015 = vpop.f32.mrb[0].mxu0
    %v2016 = vpop.f32.mrb[0].mxu0
    %v2017 = vadd.f32 %v1962, %v2016
    %v2018 = vpop.f32.mrb[0].mxu0
    %2019 = vdwg.mxu0
    %v2020 = vmul.f32 %v2014, 0.5
    %v2021 = vmul.f32 %v2017, 0.5
    %v2022 = vmul.f32 %v2014, 0.044715
    %v2023 = vmul.f32 %v2017, 0.044715
    %v2024 = vmul.f32 %v2022, %v2014
    %v2025 = vmul.f32 %v2023, %v2017
    %v2026 = vmul.f32 %v2024, %v2014
    %v2027 = vmul.f32 %v2025, %v2017
    %v2028 = vadd.f32 %v2014, %v2026
    %v2029 = vadd.f32 %v2017, %v2027
    %v2030 = vmul.f32 %v2028, 0.7978846
    %v2031 = vmul.f32 %v2029, 0.7978846
    %v2032 = vtanh.pop %v2030
    %v2033 = vtanh.pop %v2031
    %v2034 = vadd.f32 %v2032, 1.0
    %v2035 = vadd.f32 %v2033, 1.0
    %v2036 = vmul.f32 %v2020, %v2034
    %v2037 = vmul.f32 %v2021, %v2035
    %v2038 = vpack.c.bf16 %v2037, %v2036
    %s2039 = scalar_lea.vmem [#allocation22], 32
    %v2040 = vld [vmem:[%s2039] sm:$0xf]
    %v2041 = vld [vmem:[%s2039 + $0x4] sm:$0xf]
    %v2042 = vld [vmem:[%s2039 + $0x8] sm:$0xf]
    %v2043 = vld [vmem:[%s2039 + $0xc] sm:$0xf]
    %v2044 = vld [vmem:[%s2039 + $0x10] sm:$0xf]
    %v2045 = vld [vmem:[%s2039 + $0x14] sm:$0xf]
    %v2046 = vld [vmem:[%s2039 + $0x18] sm:$0xf]
    %v2047 = vld [vmem:[%s2039 + $0x1c] sm:$0xf]
    %s2048 = scalar_lea.vmem [#allocation23], 1
    %v2049 = vld [vmem:[%s2048] sm:$0x1]
    %v2051 = vlaneseq
    %v2052 = vshrl.u32 %v2051, 7
    %v2053 = vsub.s32 0, %v2052
    %v2054 = vrot.slane %v2049, %v2053
    %v2064 = vunpack.c.l.b16 %v2040
    %v2065 = vunpack.c.l.b16 %v2041
    %v2066 = vunpack.c.l.b16 %v2042
    %v2067 = vunpack.c.l.b16 %v2043
    %v2068 = vunpack.c.l.b16 %v2044
    %v2069 = vunpack.c.l.b16 %v2045
    %v2070 = vunpack.c.l.b16 %v2046
    %v2071 = vunpack.c.l.b16 %v2047
    %v2072 = vpack.c.b16 %v2065, %v2064
    %v2073 = vpack.c.b16 %v2067, %v2066
    %v2074 = vpack.c.b16 %v2069, %v2068
    %v2075 = vpack.c.b16 %v2071, %v2070
    %v2081 = vsel %vm1215, %v2038, 0
    %2083 = vmatprep.subr.bf16.mxu0 0
    %2084 = vmatpush1.bf16.msra.mxu0 %v2072
    %2085 = vmatprep.subr.bf16.mxu0 0
    %2086 = vmatpush1.bf16.msra.mxu0 %v2073
    %2087 = vmatprep.subr.bf16.mxu0 0
    %2088 = vmatpush1.bf16.msra.mxu0 %v2074
    %2089 = vmatprep.subr.bf16.mxu0 0
    %2090 = vmatpush1.bf16.msra.mxu0 %v2075
    %2091 = vmatprep.subr.bf16.mxu0 0
    %2092 = vmatpush1.bf16.msra.mxu0 0
    %2093 = vmatprep.subr.bf16.mxu0 0
    %2094 = vmatpush1.bf16.msra.mxu0 0
    %2095 = vmatprep.subr.bf16.mxu0 0
    %2096 = vmatpush1.bf16.msra.mxu0 0
    %2097 = vmatprep.subr.bf16.mxu0 0
    %2098 = vmatpush1.bf16.msra.mxu0 0
    %2099 = vmatprep.subr.bf16.mxu0 0
    %2100 = vmatpush1.bf16.msra.mxu0 0
    %2101 = vmatprep.subr.bf16.mxu0 0
    %2102 = vmatpush1.bf16.msra.mxu0 0
    %2103 = vmatprep.subr.bf16.mxu0 0
    %2104 = vmatpush1.bf16.msra.mxu0 0
    %2105 = vmatprep.subr.bf16.mxu0 0
    %2106 = vmatpush1.bf16.msra.mxu0 0
    %2107 = vmatprep.subr.bf16.mxu0 0
    %2108 = vmatpush1.bf16.msra.mxu0 0
    %2109 = vmatprep.subr.bf16.mxu0 0
    %2110 = vmatpush1.bf16.msra.mxu0 0
    %2111 = vmatprep.subr.bf16.mxu0 0
    %2112 = vmatpush1.bf16.msra.mxu0 0
    %2113 = vmatprep.subr.bf16.mxu0 0
    %2114 = vmatpush1.bf16.msra.mxu0 0
    %2115 = vmatprep.mubr.bf16.mxu0 0
    %2116 = vmatmul.mubr.bf16.gmra.mrb[0].mxu0 %v2081
    %v2117 = vpop.f32.mrb[0].mxu0
    %v2118 = vadd.f32 %v2054, %v2117
    %v2119 = vpop.f32.mrb[0].mxu0
    %v2120 = vpop.f32.mrb[0].mxu0
    %v2121 = vadd.f32 %v2054, %v2120
    %v2122 = vpop.f32.mrb[0].mxu0
    %2123 = vdwg.mxu0
    %v2124 = vadd.f32 %v1948, %v2118
    %v2125 = vadd.f32 %v1949, %v2121
    %s2126 = scalar_lea.vmem [#allocation25], 1
    %v2127 = vld [vmem:[%s2126] sm:$0x1]
    %s2128 = scalar_lea.vmem [#allocation26], 1
    %v2129 = vld [vmem:[%s2128] sm:$0x1]
    %v2130 = vsel %vm363, %v2124, 0.0
    %2131 = vadd.xlane.f32.xlu0 %v2130
    %v2132 = vpop.xlane.xlu0 %2131
    %v2133 = vsel %vm363, %v2125, 0.0
    %2134 = vadd.xlane.f32.xlu0 %v2133
    %v2135 = vpop.xlane.xlu0 %2134
    %v2136 = vmul.f32 %v2132, %v370
    %v2137 = vmul.f32 %v2135, %v370
    %v2138 = vsub.f32 %v2124, %v2136
    %v2139 = vsub.f32 %v2125, %v2137
    %v2140 = vmul.f32 %v2138, %v2138
    %v2141 = vmul.f32 %v2139, %v2139
    %v2142 = vsel %vm363, %v2140, 0.0
    %2143 = vadd.xlane.f32.xlu0 %v2142
    %v2144 = vpop.xlane.xlu0 %2143
    %v2145 = vsel %vm363, %v2141, 0.0
    %2146 = vadd.xlane.f32.xlu0 %v2145
    %v2147 = vpop.xlane.xlu0 %2146
    %v2148 = vmul.f32 %v2144, %v370
    %v2149 = vmul.f32 %v2147, %v370
    %v2150 = vadd.f32 %v2148, 1e-12
    %v2151 = vadd.f32 %v2149, 1e-12
    %v2152 = vrsqrt.pop %v2150
    %v2153 = vrsqrt.pop %v2151
    %v2154 = vmul.f32 %v2138, %v2152
    %v2155 = vmul.f32 %v2139, %v2153
    %v2157 = vlaneseq
    %v2158 = vshrl.u32 %v2157, 7
    %v2159 = vsub.s32 0, %v2158
    %v2160 = vrot.slane %v2127, %v2159
    %v2162 = vmul.f32 %v2154, %v2160
    %v2163 = vmul.f32 %v2155, %v2160
    %v2165 = vlaneseq
    %v2166 = vshrl.u32 %v2165, 7
    %v2167 = vsub.s32 0, %v2166
    %v2168 = vrot.slane %v2129, %v2167
    %v2170 = vadd.f32 %v2162, %v2168
    %v2171 = vadd.f32 %v2163, %v2168
    %v2172 = vpack.c.bf16 %v1304, %v1304
    %v2173 = vpack.c.bf16 %v1305, %v1305
    %v2174 = vpack.c.bf16 %v2170, %v2170
    %v2175 = vpack.c.bf16 %v2171, %v2171
    %v2178 = vunpack.c.l.b16 %v2172
    %v2179 = vunpack.c.l.b16 %v2173
    %v2180 = vrot.slane %v2179, 7
    %vm2181 = vcmask 1041409
    %v2182 = vsel %vm2181, %v2180, %v2178
    %v2183 = vpack.c.b16 %v2182, %v2182
    %v2186 = vunpack.c.l.b16 %v2174
    %v2187 = vunpack.c.l.b16 %v2175
    %v2188 = vrot.slane %v2187, 7
    %v2189 = vsel %vm2181, %v2188, %v2186
    %v2190 = vpack.c.b16 %v2189, %v2189
    %2191 = vrot.lane.b32.xlu0 %v2190, 32
    %v2192 = vpop.permute.xlu0 %2191
    %v2195 = vsel %vm363, %v2183, %v2192
    %vm2196 = vcmask 1042434
    %v2197 = vsel %vm2196, %v2180, %v2178
    %v2198 = vpack.c.b16 %v2197, %v2197
    %v2199 = vsel %vm2196, %v2188, %v2186
    %v2200 = vpack.c.b16 %v2199, %v2199
    %2201 = vrot.lane.b32.xlu0 %v2200, 32
    %v2202 = vpop.permute.xlu0 %2201
    %v2205 = vsel %vm363, %v2198, %v2202
    %v2206 = vld [vmem:[#allocation28] sm:$0xf]
    %v2207 = vld [vmem:[#allocation28 + $0x4] sm:$0xf]
    %v2208 = vld [vmem:[#allocation28 + $0x8] sm:$0xf]
    %v2209 = vld [vmem:[#allocation28 + $0xc] sm:$0xf]
    %v2210 = vld [vmem:[#allocation28 + $0x10] sm:$0xf]
    %v2211 = vld [vmem:[#allocation28 + $0x14] sm:$0xf]
    %v2212 = vld [vmem:[#allocation28 + $0x18] sm:$0xf]
    %v2213 = vld [vmem:[#allocation28 + $0x1c] sm:$0xf]
    %v2214 = vld [vmem:[#allocation29] sm:$0x1]
    %v2216 = vlaneseq
    %v2217 = vshrl.u32 %v2216, 7
    %v2218 = vsub.s32 0, %v2217
    %v2219 = vrot.slane %v2214, %v2218
    %v2229 = vunpack.c.l.b16 %v2206
    %v2230 = vunpack.c.l.b16 %v2207
    %v2231 = vunpack.c.l.b16 %v2208
    %v2232 = vunpack.c.l.b16 %v2209
    %v2233 = vunpack.c.l.b16 %v2210
    %v2234 = vunpack.c.l.b16 %v2211
    %v2235 = vunpack.c.l.b16 %v2212
    %v2236 = vunpack.c.l.b16 %v2213
    %v2237 = vpack.c.b16 %v2230, %v2229
    %v2238 = vpack.c.b16 %v2232, %v2231
    %v2239 = vpack.c.b16 %v2234, %v2233
    %v2240 = vpack.c.b16 %v2236, %v2235
    %v2245 = vsel %vm1215, %v2195, 0
    %2247 = vmatprep.subr.bf16.mxu0 0
    %2248 = vmatpush1.bf16.msra.mxu0 %v2237
    %2249 = vmatprep.subr.bf16.mxu0 0
    %2250 = vmatpush1.bf16.msra.mxu0 %v2238
    %2251 = vmatprep.subr.bf16.mxu0 0
    %2252 = vmatpush1.bf16.msra.mxu0 %v2239
    %2253 = vmatprep.subr.bf16.mxu0 0
    %2254 = vmatpush1.bf16.msra.mxu0 %v2240
    %2255 = vmatprep.subr.bf16.mxu0 0
    %2256 = vmatpush1.bf16.msra.mxu0 0
    %2257 = vmatprep.subr.bf16.mxu0 0
    %2258 = vmatpush1.bf16.msra.mxu0 0
    %2259 = vmatprep.subr.bf16.mxu0 0
    %2260 = vmatpush1.bf16.msra.mxu0 0
    %2261 = vmatprep.subr.bf16.mxu0 0
    %2262 = vmatpush1.bf16.msra.mxu0 0
    %2263 = vmatprep.subr.bf16.mxu0 0
    %2264 = vmatpush1.bf16.msra.mxu0 0
    %2265 = vmatprep.subr.bf16.mxu0 0
    %2266 = vmatpush1.bf16.msra.mxu0 0
    %2267 = vmatprep.subr.bf16.mxu0 0
    %2268 = vmatpush1.bf16.msra.mxu0 0
    %2269 = vmatprep.subr.bf16.mxu0 0
    %2270 = vmatpush1.bf16.msra.mxu0 0
    %2271 = vmatprep.subr.bf16.mxu0 0
    %2272 = vmatpush1.bf16.msra.mxu0 0
    %2273 = vmatprep.subr.bf16.mxu0 0
    %2274 = vmatpush1.bf16.msra.mxu0 0
    %2275 = vmatprep.subr.bf16.mxu0 0
    %2276 = vmatpush1.bf16.msra.mxu0 0
    %2277 = vmatprep.subr.bf16.mxu0 0
    %2278 = vmatpush1.bf16.msra.mxu0 0
    %2279 = vmatprep.mubr.bf16.mxu0 0
    %2280 = vmatmul.mubr.bf16.gmra.mrb[0].mxu0 %v2245
    %v2281 = vpop.f32.mrb[0].mxu0
    %v2282 = vadd.f32 %v2219, %v2281
    %v2283 = vpop.f32.mrb[0].mxu0
    %v2284 = vpop.f32.mrb[0].mxu0
    %v2285 = vpop.f32.mrb[0].mxu0
    %2286 = vdwg.mxu0
    %v2287 = vtanh.pop %v2282
    %v2288 = vld [vmem:[#allocation31] sm:$0xf]
    %v2289 = vld [vmem:[#allocation31 + $0x4] sm:$0xf]
    %v2290 = vld [vmem:[#allocation31 + $0x8] sm:$0xf]
    %v2291 = vld [vmem:[#allocation31 + $0xc] sm:$0xf]
    %v2292 = vld [vmem:[#allocation31 + $0x10] sm:$0xf]
    %v2293 = vld [vmem:[#allocation31 + $0x14] sm:$0xf]
    %v2294 = vld [vmem:[#allocation31 + $0x18] sm:$0xf]
    %v2295 = vld [vmem:[#allocation31 + $0x1c] sm:$0xf]
    %v2296 = vld [vmem:[#allocation32] sm:$0x1]
    %v2298 = vlaneseq
    %v2299 = vshrl.u32 %v2298, 7
    %v2300 = vsub.s32 0, %v2299
    %v2301 = vrot.slane %v2296, %v2300
    %v2303 = vshrl.u32 %v2205, 16
    %v2305 = vshll.u32 %v2205, 16
    %v2307 = vrot.slane %v2305, 1
    %v2308 = vor.u32 %v2303, %v2307
    %v2317 = vunpack.c.l.b16 %v2288
    %v2318 = vunpack.c.l.b16 %v2289
    %v2319 = vunpack.c.l.b16 %v2290
    %v2320 = vunpack.c.l.b16 %v2291
    %v2321 = vunpack.c.l.b16 %v2292
    %v2322 = vunpack.c.l.b16 %v2293
    %v2323 = vunpack.c.l.b16 %v2294
    %v2324 = vunpack.c.l.b16 %v2295
    %v2325 = vpack.c.b16 %v2318, %v2317
    %v2326 = vpack.c.b16 %v2320, %v2319
    %v2327 = vpack.c.b16 %v2322, %v2321
    %v2328 = vpack.c.b16 %v2324, %v2323
    %v2334 = vsel %vm1215, %v2308, 0
    %2336 = vmatprep.subr.bf16.mxu0 0
    %2337 = vmatpush1.bf16.msra.mxu0 %v2325
    %2338 = vmatprep.subr.bf16.mxu0 0
    %2339 = vmatpush1.bf16.msra.mxu0 %v2326
    %2340 = vmatprep.subr.bf16.mxu0 0
    %2341 = vmatpush1.bf16.msra.mxu0 %v2327
    %2342 = vmatprep.subr.bf16.mxu0 0
    %2343 = vmatpush1.bf16.msra.mxu0 %v2328
    %2344 = vmatprep.subr.bf16.mxu0 0
    %2345 = vmatpush1.bf16.msra.mxu0 0
    %2346 = vmatprep.subr.bf16.mxu0 0
    %2347 = vmatpush1.bf16.msra.mxu0 0
    %2348 = vmatprep.subr.bf16.mxu0 0
    %2349 = vmatpush1.bf16.msra.mxu0 0
    %2350 = vmatprep.subr.bf16.mxu0 0
    %2351 = vmatpush1.bf16.msra.mxu0 0
    %2352 = vmatprep.subr.bf16.mxu0 0
    %2353 = vmatpush1.bf16.msra.mxu0 0
    %2354 = vmatprep.subr.bf16.mxu0 0
    %2355 = vmatpush1.bf16.msra.mxu0 0
    %2356 = vmatprep.subr.bf16.mxu0 0
    %2357 = vmatpush1.bf16.msra.mxu0 0
    %2358 = vmatprep.subr.bf16.mxu0 0
    %2359 = vmatpush1.bf16.msra.mxu0 0
    %2360 = vmatprep.subr.bf16.mxu0 0
    %2361 = vmatpush1.bf16.msra.mxu0 0
    %2362 = vmatprep.subr.bf16.mxu0 0
    %2363 = vmatpush1.bf16.msra.mxu0 0
    %2364 = vmatprep.subr.bf16.mxu0 0
    %2365 = vmatpush1.bf16.msra.mxu0 0
    %2366 = vmatprep.subr.bf16.mxu0 0
    %2367 = vmatpush1.bf16.msra.mxu0 0
    %2368 = vmatprep.mubr.bf16.mxu0 0
    %2369 = vmatmul.mubr.bf16.gmra.mrb[0].mxu0 %v2334
    %v2370 = vpop.f32.mrb[0].mxu0
    %v2371 = vadd.f32 %v2301, %v2370
    %v2372 = vpop.f32.mrb[0].mxu0
    %v2373 = vpop.f32.mrb[0].mxu0
    %v2374 = vpop.f32.mrb[0].mxu0
    %2375 = vdwg.mxu0
    %v2376 = vtanh.pop %v2371
    %v2377 = vpack.c.bf16 %v2287, %v2287
    %v2378 = vpack.c.bf16 %v2376, %v2376
    %2380 = vrot.lane.b32.xlu0 %v2378, 64
    %v2381 = vpop.permute.xlu0 %2380
    %v2384 = vsel %vm1215, %v2377, %v2381
    %v2386 = vld [vmem:[#allocation34] sm:$0xf]
    %v2387 = vld [vmem:[#allocation34 + $0x4] sm:$0xf]
    %v2388 = vld [vmem:[#allocation34 + $0x8] sm:$0xf]
    %v2389 = vld [vmem:[#allocation34 + $0xc] sm:$0xf]
    %v2390 = vld [vmem:[#allocation34 + $0x10] sm:$0xf]
    %v2391 = vld [vmem:[#allocation34 + $0x14] sm:$0xf]
    %v2392 = vld [vmem:[#allocation34 + $0x18] sm:$0xf]
    %v2393 = vld [vmem:[#allocation34 + $0x1c] sm:$0xf]
    %v2394 = vld [vmem:[#allocation34 + $0x20] sm:$0xf]
    %v2395 = vld [vmem:[#allocation34 + $0x24] sm:$0xf]
    %v2396 = vld [vmem:[#allocation34 + $0x28] sm:$0xf]
    %v2397 = vld [vmem:[#allocation34 + $0x2c] sm:$0xf]
    %v2398 = vld [vmem:[#allocation34 + $0x30] sm:$0xf]
    %v2399 = vld [vmem:[#allocation34 + $0x34] sm:$0xf]
    %v2400 = vld [vmem:[#allocation34 + $0x38] sm:$0xf]
    %v2401 = vld [vmem:[#allocation34 + $0x3c] sm:$0xf]
    %v2402 = vld [vmem:[#allocation35] sm:$0x1]
    %v2404 = vlaneseq
    %v2405 = vshrl.u32 %v2404, 7
    %v2406 = vsub.s32 0, %v2405
    %v2407 = vrot.slane %v2402, %v2406
    %v2425 = vunpack.c.l.b16 %v2386
    %v2426 = vunpack.c.l.b16 %v2387
    %v2427 = vunpack.c.l.b16 %v2388
    %v2428 = vunpack.c.l.b16 %v2389
    %v2429 = vunpack.c.l.b16 %v2390
    %v2430 = vunpack.c.l.b16 %v2391
    %v2431 = vunpack.c.l.b16 %v2392
    %v2432 = vunpack.c.l.b16 %v2393
    %v2433 = vunpack.c.l.b16 %v2394
    %v2434 = vunpack.c.l.b16 %v2395
    %v2435 = vunpack.c.l.b16 %v2396
    %v2436 = vunpack.c.l.b16 %v2397
    %v2437 = vunpack.c.l.b16 %v2398
    %v2438 = vunpack.c.l.b16 %v2399
    %v2439 = vunpack.c.l.b16 %v2400
    %v2440 = vunpack.c.l.b16 %v2401
    %v2441 = vpack.c.b16 %v2426, %v2425
    %v2442 = vpack.c.b16 %v2428, %v2427
    %v2443 = vpack.c.b16 %v2430, %v2429
    %v2444 = vpack.c.b16 %v2432, %v2431
    %v2445 = vpack.c.b16 %v2434, %v2433
    %v2446 = vpack.c.b16 %v2436, %v2435
    %v2447 = vpack.c.b16 %v2438, %v2437
    %v2448 = vpack.c.b16 %v2440, %v2439
    %2457 = vmatprep.subr.bf16.mxu0 0
    %2458 = vmatpush1.bf16.msra.mxu0 %v2441
    %2459 = vmatprep.subr.bf16.mxu0 0
    %2460 = vmatpush1.bf16.msra.mxu0 %v2442
    %2461 = vmatprep.subr.bf16.mxu0 0
    %2462 = vmatpush1.bf16.msra.mxu0 %v2443
    %2463 = vmatprep.subr.bf16.mxu0 0
    %2464 = vmatpush1.bf16.msra.mxu0 %v2444
    %2465 = vmatprep.subr.bf16.mxu0 0
    %2466 = vmatpush1.bf16.msra.mxu0 %v2445
    %2467 = vmatprep.subr.bf16.mxu0 0
    %2468 = vmatpush1.bf16.msra.mxu0 %v2446
    %2469 = vmatprep.subr.bf16.mxu0 0
    %2470 = vmatpush1.bf16.msra.mxu0 %v2447
    %2471 = vmatprep.subr.bf16.mxu0 0
    %2472 = vmatpush1.bf16.msra.mxu0 %v2448
    %2473 = vmatprep.subr.bf16.mxu0 0
    %2474 = vmatpush1.bf16.msra.mxu0 0
    %2475 = vmatprep.subr.bf16.mxu0 0
    %2476 = vmatpush1.bf16.msra.mxu0 0
    %2477 = vmatprep.subr.bf16.mxu0 0
    %2478 = vmatpush1.bf16.msra.mxu0 0
    %2479 = vmatprep.subr.bf16.mxu0 0
    %2480 = vmatpush1.bf16.msra.mxu0 0
    %2481 = vmatprep.subr.bf16.mxu0 0
    %2482 = vmatpush1.bf16.msra.mxu0 0
    %2483 = vmatprep.subr.bf16.mxu0 0
    %2484 = vmatpush1.bf16.msra.mxu0 0
    %2485 = vmatprep.subr.bf16.mxu0 0
    %2486 = vmatpush1.bf16.msra.mxu0 0
    %2487 = vmatprep.subr.bf16.mxu0 0
    %2488 = vmatpush1.bf16.msra.mxu0 0
    %2489 = vmatprep.mubr.bf16.mxu0 0
    %2490 = vmatmul.mubr.bf16.gmra.mrb[0].mxu0 %v2384
    %v2491 = vpop.f32.mrb[0].mxu0
    %v2492 = vadd.f32 %v2407, %v2491
    %v2493 = vpop.f32.mrb[0].mxu0
    %v2494 = vpop.f32.mrb[0].mxu0
    %v2495 = vpop.f32.mrb[0].mxu0
    %2496 = vdwg.mxu0
    %2497 = vst [vmem:[#allocation37] sm:$0x3] %v2492
    // Predicated region
    $region178: #{bert_classifier_cls_tokens.1} parent=1 // pred_check
      _
    $region179: #{bert_classifier_cls_tokens.1} parent=1 // pred_check_branch
      %2499 = sbr.rel (0) target = $region181
    $region180: #{bert_classifier_cls_tokens.1} parent=1 // pred_region
      %s2501 = ssub.s32 32, 32
      %2502 = vsyncadd [#allocation4], %s2501
      %s2504 = sshll.u32 [#allocation37], 4
      %s2505 = int_to_ptr.vmem [resolvable:$true] %s2504
      %2507 = dma.vmem_to_hbm [thread:$0]  %s2505, 32, %s22, [#allocation4]
    $region181: #{bert_classifier_cls_tokens.1} parent=1 // pred_fallthru
      _
    // Predicated region
    $region182: #{bert_classifier_cls_tokens.1} parent=1 // pred_check
      _
    $region183: #{bert_classifier_cls_tokens.1} parent=1 // pred_check_branch
      %2509 = sbr.rel (0) target = $region185
    $region184: #{bert_classifier_cls_tokens.1} parent=1 // pred_region
      %2510 = dma.done [#allocation4], 32
    $region185: #{bert_classifier_cls_tokens.1} parent=1 // pred_fallthru
      _
    %2511 = vsyncpa [#allocation3], 1
    %2512 = vsyncpa [#allocation6], 1
    %2513 = vsyncpa [#allocation9], 1
    %2514 = vsyncpa [#allocation12], 1
    %2515 = vsyncpa [#allocation15], 1
    %2516 = vsyncpa [#allocation18], 1
    %2517 = vsyncpa [#allocation21], 1
    %2518 = vsyncpa [#allocation24], 1
    %2519 = vsyncpa [#allocation27], 1
    %2520 = vsyncpa [#allocation30], 1
    %2521 = vsyncpa [#allocation33], 1
    %2522 = vsyncpa [#allocation36], 1
    %2523 = vsyncpa [#allocation4], 1

</llo_original>
